<compile_context>
chip_gen: v6e
topology: v6e:2x2x1
jax: 0.10.0
libtpu: 0.0.40
codegen_flags: <defaults>
</compile_context>

<pallas_src>
import functools

import jax
import jax.numpy as jnp
import numpy as np
from jax import lax
from jax.experimental import pallas as pl
from jax.experimental.pallas import tpu as pltpu


# ----------------------------------------------------------------------------
# Pallas kernel: one (image b, query group q) per grid step.
# ----------------------------------------------------------------------------
def _qna_kernel(x_ref, wl_ref, wv_ref, e_ref, wnum_ref, wden_ref, wout_ref,
                o_ref, v_scr, acc_scr, vce_pad, ce_pad, *,
                H, W, Hs, Ws, ksize, stride, padding, col0, activation):
    """Shapes (QH = n_heads*stride, Cs = C*stride, N = H*W, K2 = ksize^2):
       x_ref    : (1, N, C)     bf16 tokens of image b (resident across q)
       wl_ref   : (1, C, QH)    bf16 q-folded key projection (logits), group q
       wv_ref   : (C, Cs)       bf16 value projection (shared by all q)
       e_ref    : (QH, Cs)      f32 0/1 head -> head_channel expansion matrix
       wnum_ref : (1, K2, Cs)   f32 numerator depthwise-conv taps, group q
       wden_ref : (1, K2, QH)   f32 denominator depthwise-conv taps, group q
       wout_ref : (Cs, Cs)      bf16 query-sum + 1x1 output projection
       o_ref    : (1, Hs*Ws, Cs)
       v_scr    : (N, Cs)       f32 value projection (computed once per image)
       acc_scr  : (Hs*Ws, Cs)   f32 accumulator over query groups
       vce_pad  : (Hp, Wpa, Cs) f32 zero-padded numerator spatial map
       ce_pad   : (Hp, Wpa, QH) f32 zero-padded denominator spatial map
    """
    q = pl.program_id(1)
    Hp, Wpa, Cs = vce_pad.shape
    QH = ce_pad.shape[-1]
    cl = col0 - padding  # leftmost padded column the conv taps read

    @pl.when(q == 0)
    def _init():
        # Value projection is shared by all query groups -> compute once.
        v_scr[...] = jnp.dot(x_ref[0], wv_ref[...],
                             preferred_element_type=jnp.float32)
        acc_scr[...] = jnp.zeros_like(acc_scr)
        if padding > 0:
            # Zero only the padding border strips (the interior is fully
            # overwritten every step).  All strips are sublane-aligned.
            for buf, width in ((vce_pad, Cs), (ce_pad, QH)):
                buf[:padding, :, :] = jnp.zeros((padding, Wpa, width),
                                                jnp.float32)
                buf[padding + H:, :, :] = jnp.zeros((Hp - padding - H, Wpa,
                                                     width), jnp.float32)
                buf[:, :col0, :] = jnp.zeros((Hp, col0, width), jnp.float32)
                buf[:, col0 + W:, :] = jnp.zeros((Hp, Wpa - col0 - W, width),
                                                 jnp.float32)

    # Attention logits for this query group: one (N, C) x (C, QH) matmul
    # (no head_channel repeat -> no redundant MXU work).
    logits = jnp.dot(x_ref[0], wl_ref[0],
                     preferred_element_type=jnp.float32)          # (N, QH)
    if activation == "exp":
        # Per-(query, head) column stabilizer: it is constant over the conv
        # window for each channel group, so it cancels exactly between
        # numerator and denominator (same math as the reference's global max,
        # numerically safer).
        att = jnp.exp(logits - jnp.max(logits, axis=0, keepdims=True))
    elif activation == "sigmoid":
        att = jax.nn.sigmoid(logits)
    else:  # "linear"
        att = logits

    # Expand per-head attention over head_channels with a tiny 0/1 matmul
    # (keeps the value path lane-dense; avoids an in-kernel repeat/relayout).
    att_rep = jnp.dot(att, e_ref[...],
                      preferred_element_type=jnp.float32)         # (N, Cs)
    vce = att_rep * v_scr[...]                                    # (N, Cs)

    # Interior writes are sublane-aligned (col0 is a multiple of 8).
    vce_pad[padding:padding + H, col0:col0 + W, :] = vce.reshape(H, W, Cs)
    ce_pad[padding:padding + H, col0:col0 + W, :] = att.reshape(H, W, QH)

    wnum = wnum_ref[0]                                            # (K2, Cs)
    wden = wden_ref[0]                                            # (K2, QH)
    wh = stride * (Hs - 1) + 1
    ww = stride * (Ws - 1) + 1
    num = jnp.zeros((Hs, Ws, Cs), jnp.float32)
    den = jnp.zeros((Hs, Ws, QH), jnp.float32)
    # ksize^2 shift-and-accumulate == the two grouped (depthwise) convolutions.
    for dy in range(ksize):
        for dx in range(ksize):
            p = dy * ksize + dx
            vwin = vce_pad[dy:dy + wh, cl + dx:cl + dx + ww, :]
            cwin = ce_pad[dy:dy + wh, cl + dx:cl + dx + ww, :]
            if stride > 1:
                # TODO(synk): deinterleave into stride^2 phase planes so each
                # tap reads a contiguous aligned window instead of a strided
                # sublane slice.
                vwin = vwin[::stride, ::stride, :]
                cwin = cwin[::stride, ::stride, :]
            num = num + wnum[p].reshape(1, 1, Cs) * vwin
            den = den + wden[p].reshape(1, 1, QH) * cwin

    # Exact normalization on the narrow denominator, expanded lane-dense.
    inv_den = 1.0 / den                                           # (Hs,Ws,QH)
    inv_rep = jnp.dot(inv_den.reshape(Hs * Ws, QH), e_ref[...],
                      preferred_element_type=jnp.float32)         # (Hs*Ws, Cs)
    acc_scr[...] += num.reshape(Hs * Ws, Cs) * inv_rep

    @pl.when(q == pl.num_programs(1) - 1)
    def _finalize():
        # Sum over query groups is already in acc_scr; apply proj_out once.
        y = jnp.dot(acc_scr[...].astype(jnp.bfloat16), wout_ref[...],
                    preferred_element_type=jnp.float32)
        o_ref[0] = y.astype(o_ref.dtype)


# ----------------------------------------------------------------------------
# Wrapper: weight folding, pallas_call, NCHW plumbing.
# ----------------------------------------------------------------------------
def fused_kqna_forward(x, params, *, n_q, n_heads, ksize, stride, padding,
                       activation="exp"):
    """x: (B, C, H, W) float32. Returns (out, None, None) with
       out: (B, C*stride, H//stride, W//stride)."""
    B, C, H, W = x.shape
    assert C % n_heads == 0
    hc = C // n_heads
    QH = n_heads * stride
    Cs = C * stride
    K2 = ksize * ksize
    scale = hc ** (-0.5)
    assert H % stride == 0 and W % stride == 0
    Hs, Ws = H // stride, W // stride
    assert (H + 2 * padding - ksize) // stride + 1 == Hs
    assert (W + 2 * padding - ksize) // stride + 1 == Ws
    N = H * W

    # b c h w -> b (h w) c, pre-cast to bf16 (halves the streamed DMA).
    xt = jnp.transpose(x.reshape(B, C, N), (0, 2, 1)).astype(jnp.bfloat16)

    wk, wv, wout = params["wk"], params["wv"], params["wout"]
    q_param = params["q_param"]
    attn_scale = params["attn_scale"].reshape(K2, n_q * QH)
    rpb = params["rpb_table"]

    # Fold learned queries + 1/sqrt(hc) into proj_k: the q-th query group's
    # per-pixel logits become one (N, C) x (C, QH) matmul.
    qr = q_param.reshape(n_q, QH, hc)
    wk_r = wk.reshape(C, QH, hc)
    w_logit = (scale * jnp.einsum("ihc,qhc->qih", wk_r, qr)
               ).astype(jnp.bfloat16)                             # (n_q, C, QH)

    # Depthwise-conv taps built from rpb / attn_scale, per query group.
    if activation == "exp":
        rpb_act = jnp.exp(rpb - jnp.max(rpb))
    elif activation == "sigmoid":
        rpb_act = jax.nn.sigmoid(rpb)
    else:
        rpb_act = rpb
    wden_all = jnp.transpose(rpb_act.reshape(K2, n_q, QH),
                             (1, 0, 2)).astype(jnp.float32)       # (n_q,K2,QH)
    wnum_all = jnp.repeat(
        jnp.transpose((rpb_act * attn_scale).reshape(K2, n_q, QH), (1, 0, 2)),
        hc, axis=-1).astype(jnp.float32)                          # (n_q,K2,Cs)

    # 0/1 expansion matrix: head index -> its head_channels block.
    e_mat = jnp.repeat(jnp.eye(QH, dtype=jnp.float32), hc, axis=1)  # (QH, Cs)

    wv_b = wv.astype(jnp.bfloat16)                                # (C, Cs)
    wout_b = wout.astype(jnp.bfloat16)                            # (Cs, Cs)

    # Padded spatial scratch maps, interior write sublane-aligned.
    Hp = H + 2 * padding
    col0 = ((padding + 7) // 8) * 8 if padding > 0 else 0
    Wpa = ((col0 + W + padding + 7) // 8) * 8

    kernel = functools.partial(
        _qna_kernel, H=H, W=W, Hs=Hs, Ws=Ws, ksize=ksize, stride=stride,
        padding=padding, col0=col0, activation=activation)

    # VMEM budget (scratch + double-buffered streams + live intermediates).
    def _nbytes(shape, itemsize):
        return int(np.prod(shape)) * itemsize
    scratch_bytes = (_nbytes((N, Cs), 4) + _nbytes((Hs * Ws, Cs), 4)
                     + _nbytes((Hp, Wpa, Cs), 4)
                     + _nbytes((Hp, Wpa, max(QH, 8)), 4))
    stream_bytes = 2 * (_nbytes((N, C), 2) + _nbytes((Hs * Ws, Cs), 4))
    weight_bytes = 2 * (_nbytes((C, QH), 2) + _nbytes((C, Cs), 2)
                        + _nbytes((QH, Cs), 4) + _nbytes((K2, Cs), 4)
                        + _nbytes((K2, QH), 4) + _nbytes((Cs, Cs), 2))
    live_bytes = 4 * _nbytes((N, Cs), 4) + 3 * _nbytes((Hs * Ws, Cs), 4)
    vmem_limit = int(min(max(1.4 * (scratch_bytes + stream_bytes
                                    + weight_bytes + live_bytes) + (4 << 20),
                             32 << 20), 60 << 20))

    flops = (B * n_q * (2 * N * C * QH + 2 * N * QH * Cs
                        + 2 * K2 * Hs * Ws * (Cs + QH)
                        + 2 * Hs * Ws * QH * Cs)
             + B * (2 * N * C * Cs + 2 * Hs * Ws * Cs * Cs))
    transcendentals = B * n_q * (N * QH + Hs * Ws * QH)
    bytes_accessed = (xt.size * 2 + B * Hs * Ws * Cs * 4
                      + w_logit.size * 2 + wv_b.size * 2 + wout_b.size * 2
                      + wnum_all.size * 4 + wden_all.size * 4 + e_mat.size * 4)

    # TODO(synk): for B=1 on v7x, add a row-band parallel axis (with a
    # (ksize-1) halo) so both TensorCores stay busy; optionally fp8 weights.
    out = pl.pallas_call(
        kernel,
        out_shape=jax.ShapeDtypeStruct((B, Hs * Ws, Cs), jnp.float32),
        grid_spec=pltpu.PrefetchScalarGridSpec(
            num_scalar_prefetch=0,
            grid=(B, n_q),
            in_specs=[
                pl.BlockSpec((1, N, C), lambda b, q: (b, 0, 0)),    # tokens
                pl.BlockSpec((1, C, QH), lambda b, q: (q, 0, 0)),   # logit w
                pl.BlockSpec((C, Cs), lambda b, q: (0, 0)),         # value w
                pl.BlockSpec((QH, Cs), lambda b, q: (0, 0)),        # expand mat
                pl.BlockSpec((1, K2, Cs), lambda b, q: (q, 0, 0)),  # num taps
                pl.BlockSpec((1, K2, QH), lambda b, q: (q, 0, 0)),  # den taps
                pl.BlockSpec((Cs, Cs), lambda b, q: (0, 0)),        # out proj
            ],
            out_specs=pl.BlockSpec((1, Hs * Ws, Cs), lambda b, q: (b, 0, 0)),
            scratch_shapes=[
                pltpu.VMEM((N, Cs), jnp.float32),          # value projection
                pltpu.VMEM((Hs * Ws, Cs), jnp.float32),    # query-sum accum
                pltpu.VMEM((Hp, Wpa, Cs), jnp.float32),    # padded num map
                pltpu.VMEM((Hp, Wpa, QH), jnp.float32),    # padded den map
            ],
        ),
        compiler_params=pltpu.CompilerParams(
            dimension_semantics=("parallel", "arbitrary"),
            vmem_limit_bytes=vmem_limit),
        cost_estimate=pl.CostEstimate(
            flops=flops, transcendentals=transcendentals,
            bytes_accessed=bytes_accessed),
    )(xt, w_logit, wv_b, e_mat, wnum_all, wden_all, wout_b)

    # b (h w) c -> b c h w
    y = jnp.transpose(out.reshape(B, Hs, Ws, Cs), (0, 3, 1, 2)).astype(x.dtype)
    return y, None, None


# ----------------------------------------------------------------------------
# Deterministic parameter initialisation (mirrors the nn.Module shapes).
# ----------------------------------------------------------------------------
def init_params(key, n_q, C, n_heads, ksize, stride):
    hc = C // n_heads
    Cs = C * stride
    h_total = n_heads * stride
    k = jax.random.split(key, 6)
    return {
        # proj_k / proj_v: Linear(C, C*stride, bias=False), stored as (in, out)
        "wk": jax.random.normal(k[0], (C, Cs), jnp.float32) / np.sqrt(C),
        "wv": jax.random.normal(k[1], (C, Cs), jnp.float32) / np.sqrt(C),
        # proj_out: Conv2d(Cs, Cs, 1, bias=False), stored as (in, out)
        "wout": jax.random.normal(k[2], (Cs, Cs), jnp.float32) / np.sqrt(Cs),
        "q_param": jax.random.normal(k[3], (n_q, Cs), jnp.float32)
                   * np.sqrt(1.0 / hc),
        "attn_scale": jax.random.normal(
            k[4], (1, 1, ksize * ksize, n_q * h_total), jnp.float32) * 0.02,
        "rpb_table": jax.random.normal(
            k[5], (ksize * ksize, n_q * h_total), jnp.float32) * 0.02,
    }


# ----------------------------------------------------------------------------
# Pure-JAX reference mirroring the PyTorch forward (grouped-conv formulation).
# ----------------------------------------------------------------------------
def fused_kqna_reference(x, params, *, n_q, n_heads, ksize, stride, padding,
                         activation="exp"):
    B, C, H, W = x.shape
    hc = C // n_heads
    h_total = n_heads * stride
    Cs = C * stride
    K2 = ksize * ksize
    scale = hc ** (-0.5)
    N = H * W
    Hs, Ws = H // stride, W // stride

    xt = jnp.transpose(x.reshape(B, C, N), (0, 2, 1))            # (B, N, C)

    q = jnp.broadcast_to(params["q_param"][None], (B, n_q, Cs))
    q = jnp.transpose(q.reshape(B, n_q, h_total, hc), (0, 2, 1, 3))
    kk = xt @ params["wk"]
    kk = jnp.transpose(kk.reshape(B, N, h_total, hc), (0, 2, 1, 3))
    q = q * scale
    qkT = jnp.einsum("bhqc,bhkc->bhqk", q, kk)
    qkT = jnp.transpose(qkT, (0, 3, 2, 1))                       # (B, N, q, h)
    v = xt @ params["wv"]                                        # (B, N, Cs)

    attn_scale = params["attn_scale"].reshape(K2, n_q * h_total)
    rpb = params["rpb_table"]
    if activation == "exp":
        cost = jnp.exp(qkT - jnp.max(qkT))
        rpb_a = jnp.exp(rpb - jnp.max(rpb))
    elif activation == "sigmoid":
        cost = jax.nn.sigmoid(qkT)
        rpb_a = jax.nn.sigmoid(rpb)
    else:
        cost = qkT
        rpb_a = rpb

    v_cost = cost[..., None] * v.reshape(B, N, 1, h_total, hc)
    v_cost = v_cost.reshape(B, N, n_q * Cs)
    wnum = jnp.repeat(rpb_a * attn_scale, hc, axis=1)            # (K2, n_q*Cs)

    pad = ((padding, padding), (padding, padding))
    vmap_ = jnp.transpose(v_cost.reshape(B, H, W, n_q * Cs), (0, 3, 1, 2))
    kern_num = jnp.transpose(wnum.reshape(ksize, ksize, 1, n_q * Cs),
                             (3, 2, 0, 1))
    sum_num = lax.conv_general_dilated(
        vmap_, kern_num, window_strides=(stride, stride), padding=pad,
        feature_group_count=n_q * Cs,
        dimension_numbers=("NCHW", "OIHW", "NCHW"))

    cmap_ = jnp.transpose(cost.reshape(B, H, W, n_q * h_total), (0, 3, 1, 2))
    kern_den = jnp.transpose(rpb_a.reshape(ksize, ksize, 1, n_q * h_total),
                             (3, 2, 0, 1))
    sum_den = lax.conv_general_dilated(
        cmap_, kern_den, window_strides=(stride, stride), padding=pad,
        feature_group_count=n_q * h_total,
        dimension_numbers=("NCHW", "OIHW", "NCHW"))

    sum_num = sum_num.reshape(B, n_q, h_total, hc, Hs, Ws)
    sum_den = sum_den.reshape(B, n_q, h_total, 1, Hs, Ws)
    out = (sum_num / sum_den).sum(axis=1).reshape(B, Cs, Hs, Ws)
    out = jnp.einsum("bchw,cd->bdhw", out, params["wout"])       # 1x1 proj_out
    return out


if __name__ == "__main__":
    # Small config consistent with the module: B=2, C=32, H=W=16,
    # n_q=4, n_heads=4, ksize=3, stride=1, padding=1, activation='exp'.
    B, C, H, W = 2, 32, 16, 16
    n_q, n_heads, ksize, stride, padding = 4, 4, 3, 1, 1
    activation = "exp"

    key = jax.random.PRNGKey(0)
    kx, kp = jax.random.split(key)
    x = jax.random.normal(kx, (B, C, H, W), jnp.float32)
    params = init_params(kp, n_q, C, n_heads, ksize, stride)

    y, _, _ = fused_kqna_forward(
        x, params, n_q=n_q, n_heads=n_heads, ksize=ksize, stride=stride,
        padding=padding, activation=activation)
    y = jax.block_until_ready(y)

    y_ref = fused_kqna_reference(
        x, params, n_q=n_q, n_heads=n_heads, ksize=ksize, stride=stride,
        padding=padding, activation=activation)
    y_ref = jax.block_until_ready(y_ref)

    assert y.shape == (B, C * stride, H // stride, W // stride)
    # bf16 MXU operands in the kernel vs. full-f32 reference.
    err = float(jnp.max(jnp.abs(y - y_ref)) / (jnp.max(jnp.abs(y_ref)) + 1e-12))
    assert err < 3e-2, f"kernel/reference mismatch, normalized max err = {err}"

    print("KERNEL_OK")
</pallas_src>

<mosaic_0001>
module attributes {stable_mosaic.version = 11 : i64} {
  func.func @_qna_kernel(%arg0: i32, %arg1: i32, %arg2: memref<1x256x32xbf16, #tpu.memory_space<vmem>>, %arg3: memref<1x32x4xbf16, #tpu.memory_space<vmem>>, %arg4: memref<32x32xbf16, #tpu.memory_space<vmem>>, %arg5: memref<4x32xf32, #tpu.memory_space<vmem>>, %arg6: memref<1x9x32xf32, #tpu.memory_space<vmem>>, %arg7: memref<1x9x4xf32, #tpu.memory_space<vmem>>, %arg8: memref<32x32xbf16, #tpu.memory_space<vmem>>, %arg9: memref<1x256x32xf32, #tpu.memory_space<vmem>>, %arg10: memref<256x32xf32, #tpu.memory_space<vmem>>, %arg11: memref<256x32xf32, #tpu.memory_space<vmem>>, %arg12: memref<18x32x32xf32, #tpu.memory_space<vmem>>, %arg13: memref<18x32x4xf32, #tpu.memory_space<vmem>>) attributes {dimension_semantics = [#tpu.dimension_semantics<parallel>, #tpu.dimension_semantics<arbitrary>], iteration_bounds = array<i64: 2, 4>, scalar_prefetch = 0 : i64, scratch_operands = 4 : i64, tpu.core_type = #tpu.core_type<tc>, window_params = [{transform_indices = @transform_0, window_bounds = array<i64: 1, 256, 32>}, {transform_indices = @transform_1, window_bounds = array<i64: 1, 32, 4>}, {pipeline_mode = #tpu.pipeline_mode<synchronous>, transform_indices = @transform_2, window_bounds = array<i64: 32, 32>}, {pipeline_mode = #tpu.pipeline_mode<synchronous>, transform_indices = @transform_3, window_bounds = array<i64: 4, 32>}, {transform_indices = @transform_4, window_bounds = array<i64: 1, 9, 32>}, {transform_indices = @transform_5, window_bounds = array<i64: 1, 9, 4>}, {pipeline_mode = #tpu.pipeline_mode<synchronous>, transform_indices = @transform_6, window_bounds = array<i64: 32, 32>}, {transform_indices = @transform_7, window_bounds = array<i64: 1, 256, 32>}]} {
    %c0_i32 = arith.constant 0 : i32
    %0 = arith.cmpi eq, %arg1, %c0_i32 : i32
    %1 = arith.extui %0 : i1 to i32
    %c0_i32_0 = arith.constant 0 : i32
    %2 = arith.cmpi ne, %1, %c0_i32_0 : i32
    scf.if %2 {
      %c0_84 = arith.constant 0 : index
      %c0_85 = arith.constant 0 : index
      %c0_86 = arith.constant 0 : index
      %166 = vector.load %arg2[%c0_84, %c0_85, %c0_86] : memref<1x256x32xbf16, #tpu.memory_space<vmem>>, vector<1x256x32xbf16>
      %167 = vector.shape_cast %166 : vector<1x256x32xbf16> to vector<256x32xbf16>
      %c0_87 = arith.constant 0 : index
      %c0_88 = arith.constant 0 : index
      %168 = vector.load %arg4[%c0_87, %c0_88] : memref<32x32xbf16, #tpu.memory_space<vmem>>, vector<32x32xbf16>
      %cst_89 = arith.constant dense<0.000000e+00> : vector<256x32xf32>
      %169 = tpu.matmul %167, %168, %cst_89 {dimension_numbers = #tpu.dot_dimension_numbers<[1], [0], [0], [1], [0, 0, 1, 1], [], []>} : vector<256x32xbf16>, vector<32x32xbf16>, vector<256x32xf32> -> vector<256x32xf32>
      %c0_90 = arith.constant 0 : index
      %c0_91 = arith.constant 0 : index
      %170 = vector.load %arg10[%c0_90, %c0_91] : memref<256x32xf32, #tpu.memory_space<vmem>>, vector<256x32xf32>
      tpu.vector_store %arg10[%c0_90, %c0_91], %169 {strides = array<i32>} : memref<256x32xf32, #tpu.memory_space<vmem>>, vector<256x32xf32>,
      %cst_92 = arith.constant 0.000000e+00 : f32
      %171 = vector.broadcast %cst_92 : f32 to vector<256x32xf32>
      %c0_93 = arith.constant 0 : index
      %c0_94 = arith.constant 0 : index
      %172 = vector.load %arg11[%c0_93, %c0_94] : memref<256x32xf32, #tpu.memory_space<vmem>>, vector<256x32xf32>
      tpu.vector_store %arg11[%c0_93, %c0_94], %171 {strides = array<i32>} : memref<256x32xf32, #tpu.memory_space<vmem>>, vector<256x32xf32>,
      %cst_95 = arith.constant 0.000000e+00 : f32
      %173 = vector.broadcast %cst_95 : f32 to vector<1x32x32xf32>
      %c0_96 = arith.constant 0 : index
      %c0_97 = arith.constant 0 : index
      %c0_98 = arith.constant 0 : index
      %174 = vector.load %arg12[%c0_96, %c0_97, %c0_98] : memref<18x32x32xf32, #tpu.memory_space<vmem>>, vector<1x32x32xf32>
      tpu.vector_store %arg12[%c0_96, %c0_97, %c0_98], %173 {strides = array<i32>} : memref<18x32x32xf32, #tpu.memory_space<vmem>>, vector<1x32x32xf32>,
      %cst_99 = arith.constant 0.000000e+00 : f32
      %175 = vector.broadcast %cst_99 : f32 to vector<1x32x32xf32>
      %c17 = arith.constant 17 : index
      %c0_100 = arith.constant 0 : index
      %c0_101 = arith.constant 0 : index
      %176 = vector.load %arg12[%c17, %c0_100, %c0_101] : memref<18x32x32xf32, #tpu.memory_space<vmem>>, vector<1x32x32xf32>
      tpu.vector_store %arg12[%c17, %c0_100, %c0_101], %175 {strides = array<i32>} : memref<18x32x32xf32, #tpu.memory_space<vmem>>, vector<1x32x32xf32>,
      %cst_102 = arith.constant 0.000000e+00 : f32
      %177 = vector.broadcast %cst_102 : f32 to vector<18x8x32xf32>
      %c0_103 = arith.constant 0 : index
      %c0_104 = arith.constant 0 : index
      %c0_105 = arith.constant 0 : index
      %178 = vector.load %arg12[%c0_103, %c0_104, %c0_105] : memref<18x32x32xf32, #tpu.memory_space<vmem>>, vector<18x8x32xf32>
      tpu.vector_store %arg12[%c0_103, %c0_104, %c0_105], %177 {strides = array<i32>} : memref<18x32x32xf32, #tpu.memory_space<vmem>>, vector<18x8x32xf32>,
      %cst_106 = arith.constant 0.000000e+00 : f32
      %179 = vector.broadcast %cst_106 : f32 to vector<18x8x32xf32>
      %c0_107 = arith.constant 0 : index
      %c24 = arith.constant 24 : index
      %c0_108 = arith.constant 0 : index
      %180 = vector.load %arg12[%c0_107, %c24, %c0_108] : memref<18x32x32xf32, #tpu.memory_space<vmem>>, vector<18x8x32xf32>
      tpu.vector_store %arg12[%c0_107, %c24, %c0_108], %179 {strides = array<i32>} : memref<18x32x32xf32, #tpu.memory_space<vmem>>, vector<18x8x32xf32>,
      %cst_109 = arith.constant 0.000000e+00 : f32
      %181 = vector.broadcast %cst_109 : f32 to vector<1x32x4xf32>
      %c0_110 = arith.constant 0 : index
      %c0_111 = arith.constant 0 : index
      %c0_112 = arith.constant 0 : index
      %182 = vector.load %arg13[%c0_110, %c0_111, %c0_112] : memref<18x32x4xf32, #tpu.memory_space<vmem>>, vector<1x32x4xf32>
      tpu.vector_store %arg13[%c0_110, %c0_111, %c0_112], %181 {strides = array<i32>} : memref<18x32x4xf32, #tpu.memory_space<vmem>>, vector<1x32x4xf32>,
      %cst_113 = arith.constant 0.000000e+00 : f32
      %183 = vector.broadcast %cst_113 : f32 to vector<1x32x4xf32>
      %c17_114 = arith.constant 17 : index
      %c0_115 = arith.constant 0 : index
      %c0_116 = arith.constant 0 : index
      %184 = vector.load %arg13[%c17_114, %c0_115, %c0_116] : memref<18x32x4xf32, #tpu.memory_space<vmem>>, vector<1x32x4xf32>
      tpu.vector_store %arg13[%c17_114, %c0_115, %c0_116], %183 {strides = array<i32>} : memref<18x32x4xf32, #tpu.memory_space<vmem>>, vector<1x32x4xf32>,
      %cst_117 = arith.constant 0.000000e+00 : f32
      %185 = vector.broadcast %cst_117 : f32 to vector<18x8x4xf32>
      %c0_118 = arith.constant 0 : index
      %c0_119 = arith.constant 0 : index
      %c0_120 = arith.constant 0 : index
      %186 = vector.load %arg13[%c0_118, %c0_119, %c0_120] : memref<18x32x4xf32, #tpu.memory_space<vmem>>, vector<18x8x4xf32>
      tpu.vector_store %arg13[%c0_118, %c0_119, %c0_120], %185 {strides = array<i32>} : memref<18x32x4xf32, #tpu.memory_space<vmem>>, vector<18x8x4xf32>,
      %cst_121 = arith.constant 0.000000e+00 : f32
      %187 = vector.broadcast %cst_121 : f32 to vector<18x8x4xf32>
      %c0_122 = arith.constant 0 : index
      %c24_123 = arith.constant 24 : index
      %c0_124 = arith.constant 0 : index
      %188 = vector.load %arg13[%c0_122, %c24_123, %c0_124] : memref<18x32x4xf32, #tpu.memory_space<vmem>>, vector<18x8x4xf32>
      tpu.vector_store %arg13[%c0_122, %c24_123, %c0_124], %187 {strides = array<i32>} : memref<18x32x4xf32, #tpu.memory_space<vmem>>, vector<18x8x4xf32>,
    } else {
    }
    %c0 = arith.constant 0 : index
    %c0_1 = arith.constant 0 : index
    %c0_2 = arith.constant 0 : index
    %3 = vector.load %arg2[%c0, %c0_1, %c0_2] : memref<1x256x32xbf16, #tpu.memory_space<vmem>>, vector<1x256x32xbf16>
    %4 = vector.shape_cast %3 : vector<1x256x32xbf16> to vector<256x32xbf16>
    %c0_3 = arith.constant 0 : index
    %c0_4 = arith.constant 0 : index
    %c0_5 = arith.constant 0 : index
    %5 = vector.load %arg3[%c0_3, %c0_4, %c0_5] : memref<1x32x4xbf16, #tpu.memory_space<vmem>>, vector<1x32x4xbf16>
    %6 = vector.shape_cast %5 : vector<1x32x4xbf16> to vector<32x4xbf16>
    %cst = arith.constant dense<0.000000e+00> : vector<256x4xf32>
    %7 = tpu.matmul %4, %6, %cst {dimension_numbers = #tpu.dot_dimension_numbers<[1], [0], [0], [1], [0, 0, 1, 1], [], []>} : vector<256x32xbf16>, vector<32x4xbf16>, vector<256x4xf32> -> vector<256x4xf32>
    %cst_6 = arith.constant dense<0xFF800000> : vector<4xf32>
    %8 = vector.multi_reduction <maximumf>, %7, %cst_6 [0] : vector<256x4xf32> to vector<4xf32>
    %9 = vector.shape_cast %8 : vector<4xf32> to vector<1x4xf32>
    %10 = vector.broadcast %9 : vector<1x4xf32> to vector<256x4xf32>
    %11 = arith.subf %7, %10 : vector<256x4xf32>
    %12 = math.exp %11 : vector<256x4xf32>
    %c0_7 = arith.constant 0 : index
    %c0_8 = arith.constant 0 : index
    %13 = vector.load %arg5[%c0_7, %c0_8] : memref<4x32xf32, #tpu.memory_space<vmem>>, vector<4x32xf32>
    %cst_9 = arith.constant dense<0.000000e+00> : vector<256x32xf32>
    %14 = tpu.matmul %12, %13, %cst_9 {dimension_numbers = #tpu.dot_dimension_numbers<[1], [0], [0], [1], [0, 0, 1, 1], [], []>} : vector<256x4xf32>, vector<4x32xf32>, vector<256x32xf32> -> vector<256x32xf32>
    %c0_10 = arith.constant 0 : index
    %c0_11 = arith.constant 0 : index
    %15 = vector.load %arg10[%c0_10, %c0_11] : memref<256x32xf32, #tpu.memory_space<vmem>>, vector<256x32xf32>
    %16 = arith.mulf %14, %15 : vector<256x32xf32>
    %17 = vector.shape_cast %16 : vector<256x32xf32> to vector<16x16x32xf32>
    %c1 = arith.constant 1 : index
    %c8 = arith.constant 8 : index
    %c0_12 = arith.constant 0 : index
    %18 = vector.load %arg12[%c1, %c8, %c0_12] : memref<18x32x32xf32, #tpu.memory_space<vmem>>, vector<16x16x32xf32>
    tpu.vector_store %arg12[%c1, %c8, %c0_12], %17 {strides = array<i32>} : memref<18x32x32xf32, #tpu.memory_space<vmem>>, vector<16x16x32xf32>,
    %19 = vector.shape_cast %12 : vector<256x4xf32> to vector<16x16x4xf32>
    %c1_13 = arith.constant 1 : index
    %c8_14 = arith.constant 8 : index
    %c0_15 = arith.constant 0 : index
    %20 = vector.load %arg13[%c1_13, %c8_14, %c0_15] : memref<18x32x4xf32, #tpu.memory_space<vmem>>, vector<16x16x4xf32>
    tpu.vector_store %arg13[%c1_13, %c8_14, %c0_15], %19 {strides = array<i32>} : memref<18x32x4xf32, #tpu.memory_space<vmem>>, vector<16x16x4xf32>,
    %c0_16 = arith.constant 0 : index
    %c0_17 = arith.constant 0 : index
    %c0_18 = arith.constant 0 : index
    %21 = vector.load %arg6[%c0_16, %c0_17, %c0_18] : memref<1x9x32xf32, #tpu.memory_space<vmem>>, vector<1x9x32xf32>
    %22 = vector.shape_cast %21 : vector<1x9x32xf32> to vector<9x32xf32>
    %c0_19 = arith.constant 0 : index
    %c0_20 = arith.constant 0 : index
    %c0_21 = arith.constant 0 : index
    %23 = vector.load %arg7[%c0_19, %c0_20, %c0_21] : memref<1x9x4xf32, #tpu.memory_space<vmem>>, vector<1x9x4xf32>
    %24 = vector.shape_cast %23 : vector<1x9x4xf32> to vector<9x4xf32>
    %cst_22 = arith.constant 0.000000e+00 : f32
    %25 = vector.broadcast %cst_22 : f32 to vector<16x16x32xf32>
    %cst_23 = arith.constant 0.000000e+00 : f32
    %26 = vector.broadcast %cst_23 : f32 to vector<16x16x4xf32>
    %c0_24 = arith.constant 0 : index
    %c7 = arith.constant 7 : index
    %c0_25 = arith.constant 0 : index
    %27 = vector.load %arg12[%c0_24, %c7, %c0_25] : memref<18x32x32xf32, #tpu.memory_space<vmem>>, vector<16x16x32xf32>
    %c0_26 = arith.constant 0 : index
    %c7_27 = arith.constant 7 : index
    %c0_28 = arith.constant 0 : index
    %28 = vector.load %arg13[%c0_26, %c7_27, %c0_28] : memref<18x32x4xf32, #tpu.memory_space<vmem>>, vector<16x16x4xf32>
    %29 = vector.extract_strided_slice %22 {offsets = [0, 0], sizes = [1, 32], strides = [1, 1]} : vector<9x32xf32> to vector<1x32xf32>
    %30 = vector.shape_cast %29 : vector<1x32xf32> to vector<32xf32>
    %31 = vector.shape_cast %30 : vector<32xf32> to vector<1x1x32xf32>
    %32 = vector.broadcast %31 : vector<1x1x32xf32> to vector<16x16x32xf32>
    %33 = arith.mulf %32, %27 : vector<16x16x32xf32>
    %34 = arith.addf %25, %33 : vector<16x16x32xf32>
    %35 = vector.extract_strided_slice %24 {offsets = [0, 0], sizes = [1, 4], strides = [1, 1]} : vector<9x4xf32> to vector<1x4xf32>
    %36 = vector.shape_cast %35 : vector<1x4xf32> to vector<4xf32>
    %37 = vector.shape_cast %36 : vector<4xf32> to vector<1x1x4xf32>
    %38 = vector.broadcast %37 : vector<1x1x4xf32> to vector<16x16x4xf32>
    %39 = arith.mulf %38, %28 : vector<16x16x4xf32>
    %40 = arith.addf %26, %39 : vector<16x16x4xf32>
    %c0_29 = arith.constant 0 : index
    %c8_30 = arith.constant 8 : index
    %c0_31 = arith.constant 0 : index
    %41 = vector.load %arg12[%c0_29, %c8_30, %c0_31] : memref<18x32x32xf32, #tpu.memory_space<vmem>>, vector<16x16x32xf32>
    %c0_32 = arith.constant 0 : index
    %c8_33 = arith.constant 8 : index
    %c0_34 = arith.constant 0 : index
    %42 = vector.load %arg13[%c0_32, %c8_33, %c0_34] : memref<18x32x4xf32, #tpu.memory_space<vmem>>, vector<16x16x4xf32>
    %43 = vector.extract_strided_slice %22 {offsets = [1, 0], sizes = [1, 32], strides = [1, 1]} : vector<9x32xf32> to vector<1x32xf32>
    %44 = vector.shape_cast %43 : vector<1x32xf32> to vector<32xf32>
    %45 = vector.shape_cast %44 : vector<32xf32> to vector<1x1x32xf32>
    %46 = vector.broadcast %45 : vector<1x1x32xf32> to vector<16x16x32xf32>
    %47 = arith.mulf %46, %41 : vector<16x16x32xf32>
    %48 = arith.addf %34, %47 : vector<16x16x32xf32>
    %49 = vector.extract_strided_slice %24 {offsets = [1, 0], sizes = [1, 4], strides = [1, 1]} : vector<9x4xf32> to vector<1x4xf32>
    %50 = vector.shape_cast %49 : vector<1x4xf32> to vector<4xf32>
    %51 = vector.shape_cast %50 : vector<4xf32> to vector<1x1x4xf32>
    %52 = vector.broadcast %51 : vector<1x1x4xf32> to vector<16x16x4xf32>
    %53 = arith.mulf %52, %42 : vector<16x16x4xf32>
    %54 = arith.addf %40, %53 : vector<16x16x4xf32>
    %c0_35 = arith.constant 0 : index
    %c9 = arith.constant 9 : index
    %c0_36 = arith.constant 0 : index
    %55 = vector.load %arg12[%c0_35, %c9, %c0_36] : memref<18x32x32xf32, #tpu.memory_space<vmem>>, vector<16x16x32xf32>
    %c0_37 = arith.constant 0 : index
    %c9_38 = arith.constant 9 : index
    %c0_39 = arith.constant 0 : index
    %56 = vector.load %arg13[%c0_37, %c9_38, %c0_39] : memref<18x32x4xf32, #tpu.memory_space<vmem>>, vector<16x16x4xf32>
    %57 = vector.extract_strided_slice %22 {offsets = [2, 0], sizes = [1, 32], strides = [1, 1]} : vector<9x32xf32> to vector<1x32xf32>
    %58 = vector.shape_cast %57 : vector<1x32xf32> to vector<32xf32>
    %59 = vector.shape_cast %58 : vector<32xf32> to vector<1x1x32xf32>
    %60 = vector.broadcast %59 : vector<1x1x32xf32> to vector<16x16x32xf32>
    %61 = arith.mulf %60, %55 : vector<16x16x32xf32>
    %62 = arith.addf %48, %61 : vector<16x16x32xf32>
    %63 = vector.extract_strided_slice %24 {offsets = [2, 0], sizes = [1, 4], strides = [1, 1]} : vector<9x4xf32> to vector<1x4xf32>
    %64 = vector.shape_cast %63 : vector<1x4xf32> to vector<4xf32>
    %65 = vector.shape_cast %64 : vector<4xf32> to vector<1x1x4xf32>
    %66 = vector.broadcast %65 : vector<1x1x4xf32> to vector<16x16x4xf32>
    %67 = arith.mulf %66, %56 : vector<16x16x4xf32>
    %68 = arith.addf %54, %67 : vector<16x16x4xf32>
    %c1_40 = arith.constant 1 : index
    %c7_41 = arith.constant 7 : index
    %c0_42 = arith.constant 0 : index
    %69 = vector.load %arg12[%c1_40, %c7_41, %c0_42] : memref<18x32x32xf32, #tpu.memory_space<vmem>>, vector<16x16x32xf32>
    %c1_43 = arith.constant 1 : index
    %c7_44 = arith.constant 7 : index
    %c0_45 = arith.constant 0 : index
    %70 = vector.load %arg13[%c1_43, %c7_44, %c0_45] : memref<18x32x4xf32, #tpu.memory_space<vmem>>, vector<16x16x4xf32>
    %71 = vector.extract_strided_slice %22 {offsets = [3, 0], sizes = [1, 32], strides = [1, 1]} : vector<9x32xf32> to vector<1x32xf32>
    %72 = vector.shape_cast %71 : vector<1x32xf32> to vector<32xf32>
    %73 = vector.shape_cast %72 : vector<32xf32> to vector<1x1x32xf32>
    %74 = vector.broadcast %73 : vector<1x1x32xf32> to vector<16x16x32xf32>
    %75 = arith.mulf %74, %69 : vector<16x16x32xf32>
    %76 = arith.addf %62, %75 : vector<16x16x32xf32>
    %77 = vector.extract_strided_slice %24 {offsets = [3, 0], sizes = [1, 4], strides = [1, 1]} : vector<9x4xf32> to vector<1x4xf32>
    %78 = vector.shape_cast %77 : vector<1x4xf32> to vector<4xf32>
    %79 = vector.shape_cast %78 : vector<4xf32> to vector<1x1x4xf32>
    %80 = vector.broadcast %79 : vector<1x1x4xf32> to vector<16x16x4xf32>
    %81 = arith.mulf %80, %70 : vector<16x16x4xf32>
    %82 = arith.addf %68, %81 : vector<16x16x4xf32>
    %c1_46 = arith.constant 1 : index
    %c8_47 = arith.constant 8 : index
    %c0_48 = arith.constant 0 : index
    %83 = vector.load %arg12[%c1_46, %c8_47, %c0_48] : memref<18x32x32xf32, #tpu.memory_space<vmem>>, vector<16x16x32xf32>
    %c1_49 = arith.constant 1 : index
    %c8_50 = arith.constant 8 : index
    %c0_51 = arith.constant 0 : index
    %84 = vector.load %arg13[%c1_49, %c8_50, %c0_51] : memref<18x32x4xf32, #tpu.memory_space<vmem>>, vector<16x16x4xf32>
    %85 = vector.extract_strided_slice %22 {offsets = [4, 0], sizes = [1, 32], strides = [1, 1]} : vector<9x32xf32> to vector<1x32xf32>
    %86 = vector.shape_cast %85 : vector<1x32xf32> to vector<32xf32>
    %87 = vector.shape_cast %86 : vector<32xf32> to vector<1x1x32xf32>
    %88 = vector.broadcast %87 : vector<1x1x32xf32> to vector<16x16x32xf32>
    %89 = arith.mulf %88, %83 : vector<16x16x32xf32>
    %90 = arith.addf %76, %89 : vector<16x16x32xf32>
    %91 = vector.extract_strided_slice %24 {offsets = [4, 0], sizes = [1, 4], strides = [1, 1]} : vector<9x4xf32> to vector<1x4xf32>
    %92 = vector.shape_cast %91 : vector<1x4xf32> to vector<4xf32>
    %93 = vector.shape_cast %92 : vector<4xf32> to vector<1x1x4xf32>
    %94 = vector.broadcast %93 : vector<1x1x4xf32> to vector<16x16x4xf32>
    %95 = arith.mulf %94, %84 : vector<16x16x4xf32>
    %96 = arith.addf %82, %95 : vector<16x16x4xf32>
    %c1_52 = arith.constant 1 : index
    %c9_53 = arith.constant 9 : index
    %c0_54 = arith.constant 0 : index
    %97 = vector.load %arg12[%c1_52, %c9_53, %c0_54] : memref<18x32x32xf32, #tpu.memory_space<vmem>>, vector<16x16x32xf32>
    %c1_55 = arith.constant 1 : index
    %c9_56 = arith.constant 9 : index
    %c0_57 = arith.constant 0 : index
    %98 = vector.load %arg13[%c1_55, %c9_56, %c0_57] : memref<18x32x4xf32, #tpu.memory_space<vmem>>, vector<16x16x4xf32>
    %99 = vector.extract_strided_slice %22 {offsets = [5, 0], sizes = [1, 32], strides = [1, 1]} : vector<9x32xf32> to vector<1x32xf32>
    %100 = vector.shape_cast %99 : vector<1x32xf32> to vector<32xf32>
    %101 = vector.shape_cast %100 : vector<32xf32> to vector<1x1x32xf32>
    %102 = vector.broadcast %101 : vector<1x1x32xf32> to vector<16x16x32xf32>
    %103 = arith.mulf %102, %97 : vector<16x16x32xf32>
    %104 = arith.addf %90, %103 : vector<16x16x32xf32>
    %105 = vector.extract_strided_slice %24 {offsets = [5, 0], sizes = [1, 4], strides = [1, 1]} : vector<9x4xf32> to vector<1x4xf32>
    %106 = vector.shape_cast %105 : vector<1x4xf32> to vector<4xf32>
    %107 = vector.shape_cast %106 : vector<4xf32> to vector<1x1x4xf32>
    %108 = vector.broadcast %107 : vector<1x1x4xf32> to vector<16x16x4xf32>
    %109 = arith.mulf %108, %98 : vector<16x16x4xf32>
    %110 = arith.addf %96, %109 : vector<16x16x4xf32>
    %c2 = arith.constant 2 : index
    %c7_58 = arith.constant 7 : index
    %c0_59 = arith.constant 0 : index
    %111 = vector.load %arg12[%c2, %c7_58, %c0_59] : memref<18x32x32xf32, #tpu.memory_space<vmem>>, vector<16x16x32xf32>
    %c2_60 = arith.constant 2 : index
    %c7_61 = arith.constant 7 : index
    %c0_62 = arith.constant 0 : index
    %112 = vector.load %arg13[%c2_60, %c7_61, %c0_62] : memref<18x32x4xf32, #tpu.memory_space<vmem>>, vector<16x16x4xf32>
    %113 = vector.extract_strided_slice %22 {offsets = [6, 0], sizes = [1, 32], strides = [1, 1]} : vector<9x32xf32> to vector<1x32xf32>
    %114 = vector.shape_cast %113 : vector<1x32xf32> to vector<32xf32>
    %115 = vector.shape_cast %114 : vector<32xf32> to vector<1x1x32xf32>
    %116 = vector.broadcast %115 : vector<1x1x32xf32> to vector<16x16x32xf32>
    %117 = arith.mulf %116, %111 : vector<16x16x32xf32>
    %118 = arith.addf %104, %117 : vector<16x16x32xf32>
    %119 = vector.extract_strided_slice %24 {offsets = [6, 0], sizes = [1, 4], strides = [1, 1]} : vector<9x4xf32> to vector<1x4xf32>
    %120 = vector.shape_cast %119 : vector<1x4xf32> to vector<4xf32>
    %121 = vector.shape_cast %120 : vector<4xf32> to vector<1x1x4xf32>
    %122 = vector.broadcast %121 : vector<1x1x4xf32> to vector<16x16x4xf32>
    %123 = arith.mulf %122, %112 : vector<16x16x4xf32>
    %124 = arith.addf %110, %123 : vector<16x16x4xf32>
    %c2_63 = arith.constant 2 : index
    %c8_64 = arith.constant 8 : index
    %c0_65 = arith.constant 0 : index
    %125 = vector.load %arg12[%c2_63, %c8_64, %c0_65] : memref<18x32x32xf32, #tpu.memory_space<vmem>>, vector<16x16x32xf32>
    %c2_66 = arith.constant 2 : index
    %c8_67 = arith.constant 8 : index
    %c0_68 = arith.constant 0 : index
    %126 = vector.load %arg13[%c2_66, %c8_67, %c0_68] : memref<18x32x4xf32, #tpu.memory_space<vmem>>, vector<16x16x4xf32>
    %127 = vector.extract_strided_slice %22 {offsets = [7, 0], sizes = [1, 32], strides = [1, 1]} : vector<9x32xf32> to vector<1x32xf32>
    %128 = vector.shape_cast %127 : vector<1x32xf32> to vector<32xf32>
    %129 = vector.shape_cast %128 : vector<32xf32> to vector<1x1x32xf32>
    %130 = vector.broadcast %129 : vector<1x1x32xf32> to vector<16x16x32xf32>
    %131 = arith.mulf %130, %125 : vector<16x16x32xf32>
    %132 = arith.addf %118, %131 : vector<16x16x32xf32>
    %133 = vector.extract_strided_slice %24 {offsets = [7, 0], sizes = [1, 4], strides = [1, 1]} : vector<9x4xf32> to vector<1x4xf32>
    %134 = vector.shape_cast %133 : vector<1x4xf32> to vector<4xf32>
    %135 = vector.shape_cast %134 : vector<4xf32> to vector<1x1x4xf32>
    %136 = vector.broadcast %135 : vector<1x1x4xf32> to vector<16x16x4xf32>
    %137 = arith.mulf %136, %126 : vector<16x16x4xf32>
    %138 = arith.addf %124, %137 : vector<16x16x4xf32>
    %c2_69 = arith.constant 2 : index
    %c9_70 = arith.constant 9 : index
    %c0_71 = arith.constant 0 : index
    %139 = vector.load %arg12[%c2_69, %c9_70, %c0_71] : memref<18x32x32xf32, #tpu.memory_space<vmem>>, vector<16x16x32xf32>
    %c2_72 = arith.constant 2 : index
    %c9_73 = arith.constant 9 : index
    %c0_74 = arith.constant 0 : index
    %140 = vector.load %arg13[%c2_72, %c9_73, %c0_74] : memref<18x32x4xf32, #tpu.memory_space<vmem>>, vector<16x16x4xf32>
    %141 = vector.extract_strided_slice %22 {offsets = [8, 0], sizes = [1, 32], strides = [1, 1]} : vector<9x32xf32> to vector<1x32xf32>
    %142 = vector.shape_cast %141 : vector<1x32xf32> to vector<32xf32>
    %143 = vector.shape_cast %142 : vector<32xf32> to vector<1x1x32xf32>
    %144 = vector.broadcast %143 : vector<1x1x32xf32> to vector<16x16x32xf32>
    %145 = arith.mulf %144, %139 : vector<16x16x32xf32>
    %146 = arith.addf %132, %145 : vector<16x16x32xf32>
    %147 = vector.extract_strided_slice %24 {offsets = [8, 0], sizes = [1, 4], strides = [1, 1]} : vector<9x4xf32> to vector<1x4xf32>
    %148 = vector.shape_cast %147 : vector<1x4xf32> to vector<4xf32>
    %149 = vector.shape_cast %148 : vector<4xf32> to vector<1x1x4xf32>
    %150 = vector.broadcast %149 : vector<1x1x4xf32> to vector<16x16x4xf32>
    %151 = arith.mulf %150, %140 : vector<16x16x4xf32>
    %152 = arith.addf %138, %151 : vector<16x16x4xf32>
    %cst_75 = arith.constant 1.000000e+00 : f32
    %153 = vector.broadcast %cst_75 : f32 to vector<16x16x4xf32>
    %154 = arith.divf %153, %152 : vector<16x16x4xf32>
    %155 = vector.shape_cast %154 : vector<16x16x4xf32> to vector<256x4xf32>
    %c0_76 = arith.constant 0 : index
    %c0_77 = arith.constant 0 : index
    %156 = vector.load %arg5[%c0_76, %c0_77] : memref<4x32xf32, #tpu.memory_space<vmem>>, vector<4x32xf32>
    %cst_78 = arith.constant dense<0.000000e+00> : vector<256x32xf32>
    %157 = tpu.matmul %155, %156, %cst_78 {dimension_numbers = #tpu.dot_dimension_numbers<[1], [0], [0], [1], [0, 0, 1, 1], [], []>} : vector<256x4xf32>, vector<4x32xf32>, vector<256x32xf32> -> vector<256x32xf32>
    %c0_79 = arith.constant 0 : index
    %c0_80 = arith.constant 0 : index
    %158 = vector.load %arg11[%c0_79, %c0_80] : memref<256x32xf32, #tpu.memory_space<vmem>>, vector<256x32xf32>
    %159 = vector.shape_cast %146 : vector<16x16x32xf32> to vector<256x32xf32>
    %160 = arith.mulf %159, %157 : vector<256x32xf32>
    %161 = arith.addf %158, %160 : vector<256x32xf32>
    %c0_81 = arith.constant 0 : index
    %c0_82 = arith.constant 0 : index
    %162 = vector.load %arg11[%c0_81, %c0_82] : memref<256x32xf32, #tpu.memory_space<vmem>>, vector<256x32xf32>
    tpu.vector_store %arg11[%c0_81, %c0_82], %161 {strides = array<i32>} : memref<256x32xf32, #tpu.memory_space<vmem>>, vector<256x32xf32>,
    %c3_i32 = arith.constant 3 : i32
    %163 = arith.cmpi eq, %arg1, %c3_i32 : i32
    %164 = arith.extui %163 : i1 to i32
    %c0_i32_83 = arith.constant 0 : i32
    %165 = arith.cmpi ne, %164, %c0_i32_83 : i32
    scf.if %165 {
      %c0_84 = arith.constant 0 : index
      %c0_85 = arith.constant 0 : index
      %166 = vector.load %arg11[%c0_84, %c0_85] : memref<256x32xf32, #tpu.memory_space<vmem>>, vector<256x32xf32>
      %167 = arith.truncf %166 : vector<256x32xf32> to vector<256x32xbf16>
      %c0_86 = arith.constant 0 : index
      %c0_87 = arith.constant 0 : index
      %168 = vector.load %arg8[%c0_86, %c0_87] : memref<32x32xbf16, #tpu.memory_space<vmem>>, vector<32x32xbf16>
      %cst_88 = arith.constant dense<0.000000e+00> : vector<256x32xf32>
      %169 = tpu.matmul %167, %168, %cst_88 {dimension_numbers = #tpu.dot_dimension_numbers<[1], [0], [0], [1], [0, 0, 1, 1], [], []>} : vector<256x32xbf16>, vector<32x32xbf16>, vector<256x32xf32> -> vector<256x32xf32>
      %c0_89 = arith.constant 0 : index
      %c0_90 = arith.constant 0 : index
      %c0_91 = arith.constant 0 : index
      %170 = vector.load %arg9[%c0_89, %c0_90, %c0_91] : memref<1x256x32xf32, #tpu.memory_space<vmem>>, vector<1x256x32xf32>
      %171 = vector.shape_cast %170 : vector<1x256x32xf32> to vector<256x32xf32>
      %172 = vector.shape_cast %169 : vector<256x32xf32> to vector<1x256x32xf32>
      tpu.vector_store %arg9[%c0_89, %c0_90, %c0_91], %172 {strides = array<i32>} : memref<1x256x32xf32, #tpu.memory_space<vmem>>, vector<1x256x32xf32>,
    } else {
    }
    return
  }
  func.func @transform_0(%arg0: i32, %arg1: i32) -> (i32, i32, i32) {
    %c0_i32 = arith.constant 0 : i32
    %c0_i32_0 = arith.constant 0 : i32
    %c0_i32_1 = arith.constant 0 : i32
    return %arg0, %c0_i32, %c0_i32_0 : i32, i32, i32
  }
  func.func @transform_1(%arg0: i32, %arg1: i32) -> (i32, i32, i32) {
    %c0_i32 = arith.constant 0 : i32
    %c0_i32_0 = arith.constant 0 : i32
    %c0_i32_1 = arith.constant 0 : i32
    return %arg1, %c0_i32, %c0_i32_0 : i32, i32, i32
  }
  func.func @transform_2(%arg0: i32, %arg1: i32) -> (i32, i32) {
    %c0_i32 = arith.constant 0 : i32
    %c0_i32_0 = arith.constant 0 : i32
    %c0_i32_1 = arith.constant 0 : i32
    return %c0_i32, %c0_i32_0 : i32, i32
  }
  func.func @transform_3(%arg0: i32, %arg1: i32) -> (i32, i32) {
    %c0_i32 = arith.constant 0 : i32
    %c0_i32_0 = arith.constant 0 : i32
    %c0_i32_1 = arith.constant 0 : i32
    return %c0_i32, %c0_i32_0 : i32, i32
  }
  func.func @transform_4(%arg0: i32, %arg1: i32) -> (i32, i32, i32) {
    %c0_i32 = arith.constant 0 : i32
    %c0_i32_0 = arith.constant 0 : i32
    %c0_i32_1 = arith.constant 0 : i32
    return %arg1, %c0_i32, %c0_i32_0 : i32, i32, i32
  }
  func.func @transform_5(%arg0: i32, %arg1: i32) -> (i32, i32, i32) {
    %c0_i32 = arith.constant 0 : i32
    %c0_i32_0 = arith.constant 0 : i32
    %c0_i32_1 = arith.constant 0 : i32
    return %arg1, %c0_i32, %c0_i32_0 : i32, i32, i32
  }
  func.func @transform_6(%arg0: i32, %arg1: i32) -> (i32, i32) {
    %c0_i32 = arith.constant 0 : i32
    %c0_i32_0 = arith.constant 0 : i32
    %c0_i32_1 = arith.constant 0 : i32
    return %c0_i32, %c0_i32_0 : i32, i32
  }
  func.func @transform_7(%arg0: i32, %arg1: i32) -> (i32, i32, i32) {
    %c0_i32 = arith.constant 0 : i32
    %c0_i32_0 = arith.constant 0 : i32
    %c0_i32_1 = arith.constant 0 : i32
    return %arg0, %c0_i32, %c0_i32_0 : i32, i32, i32
  }
}

</mosaic_0001>

<llo_original>
// kernel: tpu_custom_call.1
$region0: #{tpu_custom_call.1}
  #allocation0 [shape = 'u32[]', space=smem, size = 0x4, offset = 0x4, fixed_abs, tag = 'smem constant byte address 0x4 - core index']
  #allocation1 [shape = 'u32[144,128]{1,0:T(1,128)}', space=vmem, size = 0x12000, scoped, tag = 'internal scratch']
  #allocation2 [shape = 'f32[256,32]{1,0:T(8,128)}', space=vmem, size = 0x20000, scoped, tag = 'scratch operand']
  #allocation3 [shape = 'f32[256,32]{1,0:T(8,128)}', space=vmem, size = 0x20000, scoped, tag = 'scratch operand']
  #allocation4 [shape = 'f32[18,32,32]{2,1,0:T(8,128)}', space=vmem, size = 0x48000, scoped, tag = 'scratch operand']
  #allocation5 [shape = 'f32[18,32,4]{2,1,0:T(8,128)}', space=vmem, size = 0x48000, scoped, tag = 'scratch operand']
  %s0 = inlined_call_operand.vmem [shape: bf16[2,256,32], index: 0, kind: input, shape index: {}]
  %s1 = inlined_call_operand.vmem [shape: bf16[4,32,4], index: 1, kind: input, shape index: {}]
  %s2 = inlined_call_operand.vmem [shape: bf16[32,32], index: 2, kind: input, shape index: {}]
  %s3 = inlined_call_operand.vmem [shape: f32[4,32], index: 3, kind: input, shape index: {}]
  %s4 = inlined_call_operand.vmem [shape: f32[4,9,32], index: 4, kind: input, shape index: {}]
  %s5 = inlined_call_operand.vmem [shape: f32[4,9,4], index: 5, kind: input, shape index: {}]
  %s6 = inlined_call_operand.vmem [shape: bf16[32,32], index: 6, kind: input, shape index: {}]
  %s7 = inlined_call_operand.vmem [shape: f32[2,256,32], index: 7, kind: output, shape index: {}]
  %s8 = sld [smem:[#allocation0]]
  $region69: #{tpu_custom_call.1} parent=0
    _
  %s10 = ssub.s32 1, %s8
  %s11 = scalar_select 0, %s10, %s8
  loop: start=0, step=1, limit=10
  $region2: #{tpu_custom_call.1} parent=0 // loop_pre_header
    _
  $region3: #{tpu_custom_call.1} parent=0 // loop_header
    %s13 = sphi 0, %s17
    %p14 = scmp.ge.s32.totalorder %s13, 10
    %s20 = sphi 0, %s32
    %s21 = sphi 0, %s28
    %s22 = sphi 0, %s20
    %s23 = sphi 0, %s21
    %s24 = sphi 0, %s22
    %s25 = sphi 0, %s23
    %s35 = sphi 0, %s37
    %s38 = sphi 0, %s35
    %s39 = sphi 0, %s38
    %s55 = sphi 0, %s39
    %s61 = sphi 0, %s63
    %s64 = sphi 0, %s61
    %s65 = sphi 0, %s64
    %s81 = sphi 0, %s65
    %s85 = sphi 0, %s85
    %s87 = sphi 0, %s85
    %s88 = sphi 0, %s87
    %s102 = sphi 0, %s88
    %s106 = sphi 0, %s106
    %s108 = sphi 0, %s106
    %s109 = sphi 0, %s108
    %s123 = sphi 0, %s109
    %s129 = sphi 0, %s131
    %s132 = sphi 0, %s129
    %s133 = sphi 0, %s132
    %s149 = sphi 0, %s133
    %s155 = sphi 0, %s157
    %s158 = sphi 0, %s155
    %s159 = sphi 0, %s158
    %s175 = sphi 0, %s159
    %s179 = sphi 0, %s179
    %s181 = sphi 0, %s179
    %s182 = sphi 0, %s181
    %s196 = sphi 0, %s182
    %s202 = sphi 0, %s204
    %s205 = sphi 0, %s202
    %s206 = sphi 0, %s205
    %s222 = sphi 0, %s206
  $region4: #{tpu_custom_call.1} parent=0 // loop_header_branch
    %16 = sbr.rel (%p14) target = $region8
  $region5: #{tpu_custom_call.1} parent=0 // loop_body
    %s18 = ssub.s32 %s13, 1
    %s19 = ssub.s32 %s13, 2
    %s26 = sadd.s32 1, %s21
    %p27 = scmp.ge.s32.totalorder %s26, 4
    %s28 = scalar_select %p27, 0, %s26
    %s29 = sadd.s32 1, %s20
    %s30 = scalar_select %p27, %s29, %s20
    %p31 = scmp.ge.s32.totalorder %s30, 2
    %s32 = scalar_select %p31, 0, %s30
    %s33 = ssub.s32 %s20, %s32
    %p34 = scmp.eq.s32.totalorder %s33, 0
    %s36 = sadd.s32 %s35, 1
    %s37 = scalar_select %p34, %s35, %s36
    %p40 = pneg %p34
    %p41 = scmp.eq.s32.totalorder %s13, 7
    %p42 = por %p40, %p41
    %p43 = scmp.ne.s32.totalorder %s35, %s38
    %p44 = scmp.eq.s32.totalorder %s13, 0
    %p45 = por %p43, %p44
    %p46 = scmp.ne.s32.totalorder %s35, %s38
    %p47 = scmp.eq.s32.totalorder %s18, 7
    %p48 = por %p46, %p47
    %p49 = scmp.ne.s32.totalorder %s38, %s39
    %p50 = scmp.eq.s32.totalorder %s18, 0
    %p51 = por %p49, %p50
    %p52 = scmp.ne.s32.totalorder %s38, %s39
    %p53 = scmp.eq.s32.totalorder %s19, 7
    %p54 = por %p52, %p53
    %p56 = scmp.ne.s32.totalorder %s39, %s55
    %p57 = scmp.eq.s32.totalorder %s19, 0
    %p58 = por %p56, %p57
    %s59 = ssub.s32 %s21, %s28
    %p60 = scmp.eq.s32.totalorder %s59, 0
    %s62 = sadd.s32 %s61, 1
    %s63 = scalar_select %p60, %s61, %s62
    %p66 = pneg %p60
    %p67 = scmp.eq.s32.totalorder %s13, 7
    %p68 = por %p66, %p67
    %p69 = scmp.ne.s32.totalorder %s61, %s64
    %p70 = scmp.eq.s32.totalorder %s13, 0
    %p71 = por %p69, %p70
    %p72 = scmp.ne.s32.totalorder %s61, %s64
    %p73 = scmp.eq.s32.totalorder %s18, 7
    %p74 = por %p72, %p73
    %p75 = scmp.ne.s32.totalorder %s64, %s65
    %p76 = scmp.eq.s32.totalorder %s18, 0
    %p77 = por %p75, %p76
    %p78 = scmp.ne.s32.totalorder %s64, %s65
    %p79 = scmp.eq.s32.totalorder %s19, 7
    %p80 = por %p78, %p79
    %p82 = scmp.ne.s32.totalorder %s65, %s81
    %p83 = scmp.eq.s32.totalorder %s19, 0
    %p84 = por %p82, %p83
    %s86 = sadd.s32 %s85, 1
    %p89 = scmp.eq.s32.totalorder %s13, 7
    %p90 = scmp.ne.s32.totalorder %s85, %s87
    %p91 = scmp.eq.s32.totalorder %s13, 0
    %p92 = por %p90, %p91
    %p93 = scmp.ne.s32.totalorder %s85, %s87
    %p94 = scmp.eq.s32.totalorder %s18, 7
    %p95 = por %p93, %p94
    %p96 = scmp.ne.s32.totalorder %s87, %s88
    %p97 = scmp.eq.s32.totalorder %s18, 0
    %p98 = por %p96, %p97
    %p99 = scmp.ne.s32.totalorder %s87, %s88
    %p100 = scmp.eq.s32.totalorder %s19, 7
    %p101 = por %p99, %p100
    %p103 = scmp.ne.s32.totalorder %s88, %s102
    %p104 = scmp.eq.s32.totalorder %s19, 0
    %p105 = por %p103, %p104
    %s107 = sadd.s32 %s106, 1
    %p110 = scmp.eq.s32.totalorder %s13, 7
    %p111 = scmp.ne.s32.totalorder %s106, %s108
    %p112 = scmp.eq.s32.totalorder %s13, 0
    %p113 = por %p111, %p112
    %p114 = scmp.ne.s32.totalorder %s106, %s108
    %p115 = scmp.eq.s32.totalorder %s18, 7
    %p116 = por %p114, %p115
    %p117 = scmp.ne.s32.totalorder %s108, %s109
    %p118 = scmp.eq.s32.totalorder %s18, 0
    %p119 = por %p117, %p118
    %p120 = scmp.ne.s32.totalorder %s108, %s109
    %p121 = scmp.eq.s32.totalorder %s19, 7
    %p122 = por %p120, %p121
    %p124 = scmp.ne.s32.totalorder %s109, %s123
    %p125 = scmp.eq.s32.totalorder %s19, 0
    %p126 = por %p124, %p125
    %s127 = ssub.s32 %s21, %s28
    %p128 = scmp.eq.s32.totalorder %s127, 0
    %s130 = sadd.s32 %s129, 1
    %s131 = scalar_select %p128, %s129, %s130
    %p134 = pneg %p128
    %p135 = scmp.eq.s32.totalorder %s13, 7
    %p136 = por %p134, %p135
    %p137 = scmp.ne.s32.totalorder %s129, %s132
    %p138 = scmp.eq.s32.totalorder %s13, 0
    %p139 = por %p137, %p138
    %p140 = scmp.ne.s32.totalorder %s129, %s132
    %p141 = scmp.eq.s32.totalorder %s18, 7
    %p142 = por %p140, %p141
    %p143 = scmp.ne.s32.totalorder %s132, %s133
    %p144 = scmp.eq.s32.totalorder %s18, 0
    %p145 = por %p143, %p144
    %p146 = scmp.ne.s32.totalorder %s132, %s133
    %p147 = scmp.eq.s32.totalorder %s19, 7
    %p148 = por %p146, %p147
    %p150 = scmp.ne.s32.totalorder %s133, %s149
    %p151 = scmp.eq.s32.totalorder %s19, 0
    %p152 = por %p150, %p151
    %s153 = ssub.s32 %s21, %s28
    %p154 = scmp.eq.s32.totalorder %s153, 0
    %s156 = sadd.s32 %s155, 1
    %s157 = scalar_select %p154, %s155, %s156
    %p160 = pneg %p154
    %p161 = scmp.eq.s32.totalorder %s13, 7
    %p162 = por %p160, %p161
    %p163 = scmp.ne.s32.totalorder %s155, %s158
    %p164 = scmp.eq.s32.totalorder %s13, 0
    %p165 = por %p163, %p164
    %p166 = scmp.ne.s32.totalorder %s155, %s158
    %p167 = scmp.eq.s32.totalorder %s18, 7
    %p168 = por %p166, %p167
    %p169 = scmp.ne.s32.totalorder %s158, %s159
    %p170 = scmp.eq.s32.totalorder %s18, 0
    %p171 = por %p169, %p170
    %p172 = scmp.ne.s32.totalorder %s158, %s159
    %p173 = scmp.eq.s32.totalorder %s19, 7
    %p174 = por %p172, %p173
    %p176 = scmp.ne.s32.totalorder %s159, %s175
    %p177 = scmp.eq.s32.totalorder %s19, 0
    %p178 = por %p176, %p177
    %s180 = sadd.s32 %s179, 1
    %p183 = scmp.eq.s32.totalorder %s13, 7
    %p184 = scmp.ne.s32.totalorder %s179, %s181
    %p185 = scmp.eq.s32.totalorder %s13, 0
    %p186 = por %p184, %p185
    %p187 = scmp.ne.s32.totalorder %s179, %s181
    %p188 = scmp.eq.s32.totalorder %s18, 7
    %p189 = por %p187, %p188
    %p190 = scmp.ne.s32.totalorder %s181, %s182
    %p191 = scmp.eq.s32.totalorder %s18, 0
    %p192 = por %p190, %p191
    %p193 = scmp.ne.s32.totalorder %s181, %s182
    %p194 = scmp.eq.s32.totalorder %s19, 7
    %p195 = por %p193, %p194
    %p197 = scmp.ne.s32.totalorder %s182, %s196
    %p198 = scmp.eq.s32.totalorder %s19, 0
    %p199 = por %p197, %p198
    %s200 = ssub.s32 %s20, %s32
    %p201 = scmp.eq.s32.totalorder %s200, 0
    %s203 = sadd.s32 %s202, 1
    %s204 = scalar_select %p201, %s202, %s203
    %p207 = pneg %p201
    %p208 = scmp.eq.s32.totalorder %s13, 7
    %p209 = por %p207, %p208
    %p210 = scmp.ne.s32.totalorder %s202, %s205
    %p211 = scmp.eq.s32.totalorder %s13, 0
    %p212 = por %p210, %p211
    %p213 = scmp.ne.s32.totalorder %s202, %s205
    %p214 = scmp.eq.s32.totalorder %s18, 7
    %p215 = por %p213, %p214
    %p216 = scmp.ne.s32.totalorder %s205, %s206
    %p217 = scmp.eq.s32.totalorder %s18, 0
    %p218 = por %p216, %p217
    %p219 = scmp.ne.s32.totalorder %s205, %s206
    %p220 = scmp.eq.s32.totalorder %s19, 7
    %p221 = por %p219, %p220
    %p223 = scmp.ne.s32.totalorder %s206, %s222
    %p224 = scmp.eq.s32.totalorder %s19, 0
    %p225 = por %p223, %p224
    %p226 = scmp.le.s32.totalorder 1, %s13
    %p227 = scmp.lt.s32.totalorder %s13, 9
    %p228 = pnand %p226, %p227
    %p229 = pneg %p228
    // Predicated region
    $region9: #{tpu_custom_call.1} parent=5 // pred_check
      _
    $region10: #{tpu_custom_call.1} parent=5 // pred_check_branch
      %231 = sbr.rel (%p228) target = $region12
    $region11: #{tpu_custom_call.1} parent=5 // pred_region
      %s232 = ssub.s32 %s13, 1
      // Predicated region
      $region13: #{tpu_custom_call.1} parent=11 // pred_check
        %p233 = pneg %p98
      $region14: #{tpu_custom_call.1} parent=11 // pred_check_branch
        %235 = sbr.rel (%p233) target = $region16
      $region15: #{tpu_custom_call.1} parent=11 // pred_region
        _
      $region16: #{tpu_custom_call.1} parent=11 // pred_fallthru
        _
      // Predicated region
      $region17: #{tpu_custom_call.1} parent=11 // pred_check
        %p236 = pneg %p119
      $region18: #{tpu_custom_call.1} parent=11 // pred_check_branch
        %238 = sbr.rel (%p236) target = $region20
      $region19: #{tpu_custom_call.1} parent=11 // pred_region
        _
      $region20: #{tpu_custom_call.1} parent=11 // pred_fallthru
        _
      // Predicated region
      $region21: #{tpu_custom_call.1} parent=11 // pred_check
        %p239 = pneg %p192
      $region22: #{tpu_custom_call.1} parent=11 // pred_check_branch
        %241 = sbr.rel (%p239) target = $region24
      $region23: #{tpu_custom_call.1} parent=11 // pred_region
        _
      $region24: #{tpu_custom_call.1} parent=11 // pred_fallthru
        _
    $region12: #{tpu_custom_call.1} parent=5 // pred_fallthru
      _
    %p242 = scmp.lt.s32.totalorder %s13, 8
    // Predicated region
    $region25: #{tpu_custom_call.1} parent=5 // pred_check
      %p243 = pneg %p242
    $region26: #{tpu_custom_call.1} parent=5 // pred_check_branch
      %245 = sbr.rel (%p243) target = $region28
    $region27: #{tpu_custom_call.1} parent=5 // pred_region
      // Predicated region
      $region29: #{tpu_custom_call.1} parent=27 // pred_check
        %p246 = pneg %p45
      $region30: #{tpu_custom_call.1} parent=27 // pred_check_branch
        %248 = sbr.rel (%p246) target = $region32
      $region31: #{tpu_custom_call.1} parent=27 // pred_region
        %p249 = scmp.lt.s32.totalorder %s20, 1
        %s250 = scalar_select %p249, %s20, 1
        %s251 = smul.addr %s250, 32
        %s252 = smul.addr %s251, 4
        %s253 = scalar_lea.vmem %s0, %s252
      $region32: #{tpu_custom_call.1} parent=27 // pred_fallthru
        _
      // Predicated region
      $region33: #{tpu_custom_call.1} parent=27 // pred_check
        %p254 = pneg %p71
      $region34: #{tpu_custom_call.1} parent=27 // pred_check_branch
        %256 = sbr.rel (%p254) target = $region36
      $region35: #{tpu_custom_call.1} parent=27 // pred_region
        %p257 = scmp.lt.s32.totalorder %s21, 3
        %s258 = scalar_select %p257, %s21, 3
        %s259 = smul.addr %s258, 4
        %s260 = smul.addr %s259, 4
        %s261 = scalar_lea.vmem %s1, %s260
      $region36: #{tpu_custom_call.1} parent=27 // pred_fallthru
        _
      // Predicated region
      $region37: #{tpu_custom_call.1} parent=27 // pred_check
        %p262 = pneg %p139
      $region38: #{tpu_custom_call.1} parent=27 // pred_check_branch
        %264 = sbr.rel (%p262) target = $region40
      $region39: #{tpu_custom_call.1} parent=27 // pred_region
        %p265 = scmp.lt.s32.totalorder %s21, 3
        %s266 = scalar_select %p265, %s21, 3
        %s267 = smul.addr %s266, 2
        %s268 = smul.addr %s267, 8
        %s269 = scalar_lea.vmem %s4, %s268
      $region40: #{tpu_custom_call.1} parent=27 // pred_fallthru
        _
      // Predicated region
      $region41: #{tpu_custom_call.1} parent=27 // pred_check
        %p270 = pneg %p165
      $region42: #{tpu_custom_call.1} parent=27 // pred_check_branch
        %272 = sbr.rel (%p270) target = $region44
      $region43: #{tpu_custom_call.1} parent=27 // pred_region
        %p273 = scmp.lt.s32.totalorder %s21, 3
        %s274 = scalar_select %p273, %s21, 3
        %s275 = smul.addr %s274, 2
        %s276 = smul.addr %s275, 8
        %s277 = scalar_lea.vmem %s5, %s276
      $region44: #{tpu_custom_call.1} parent=27 // pred_fallthru
        _
    $region28: #{tpu_custom_call.1} parent=5 // pred_fallthru
      _
    %p278 = scmp.le.s32.totalorder 1, %s13
    %p279 = scmp.lt.s32.totalorder %s13, 9
    %p280 = pnand %p278, %p279
    %p281 = pneg %p280
    // Predicated region
    $region45: #{tpu_custom_call.1} parent=5 // pred_check
      _
    $region46: #{tpu_custom_call.1} parent=5 // pred_check_branch
      %283 = sbr.rel (%p280) target = $region48
    $region47: #{tpu_custom_call.1} parent=5 // pred_region
      %s284 = ssub.s32 %s13, 1
      %p285 = scmp.lt.s32.totalorder %s22, 1
      %s286 = scalar_select %p285, %s22, 1
      %s287 = smul.addr %s286, 32
      %s288 = smul.addr %s287, 4
      %s289 = scalar_lea.vmem %s0, %s288
      %p290 = pneg %p51
      %p291 = pneg %p48
      %p292 = scmp.lt.s32.totalorder %s23, 3
      %s293 = scalar_select %p292, %s23, 3
      %s294 = smul.addr %s293, 4
      %s295 = smul.addr %s294, 4
      %s296 = scalar_lea.vmem %s1, %s295
      %p297 = pneg %p77
      %p298 = pneg %p74
      %p299 = pneg %p98
      %p300 = pneg %p95
      %p301 = pneg %p119
      %p302 = pneg %p116
      %p303 = scmp.lt.s32.totalorder %s23, 3
      %s304 = scalar_select %p303, %s23, 3
      %s305 = smul.addr %s304, 2
      %s306 = smul.addr %s305, 8
      %s307 = scalar_lea.vmem %s4, %s306
      %p308 = pneg %p145
      %p309 = pneg %p142
      %p310 = scmp.lt.s32.totalorder %s23, 3
      %s311 = scalar_select %p310, %s23, 3
      %s312 = smul.addr %s311, 2
      %s313 = smul.addr %s312, 8
      %s314 = scalar_lea.vmem %s5, %s313
      %p315 = pneg %p171
      %p316 = pneg %p168
      %p317 = pneg %p192
      %p318 = pneg %p189
      %p319 = pneg %p218
      %p320 = pneg %p215
      %p321 = scmp.lt.s32.totalorder %s22, 1
      %s322 = scalar_select %p321, %s22, 1
      %s323 = smul.addr %s322, 32
      %s324 = smul.addr %s323, 8
      %s325 = scalar_lea.vmem %s7, %s324
      %p326 = scmp.lt.s32.totalorder %s22, 1
      %s327 = scalar_select %p326, %s22, 1
      %s328 = smul.addr %s327, 32
      %s329 = smul.addr %s328, 4
      %s330 = scalar_lea.vmem %s0, %s329
      %p331 = scmp.lt.s32.totalorder %s23, 3
      %s332 = scalar_select %p331, %s23, 3
      %s333 = smul.addr %s332, 4
      %s334 = smul.addr %s333, 4
      %s335 = scalar_lea.vmem %s1, %s334
      %p336 = scmp.lt.s32.totalorder %s23, 3
      %s337 = scalar_select %p336, %s23, 3
      %s338 = smul.addr %s337, 2
      %s339 = smul.addr %s338, 8
      %s340 = scalar_lea.vmem %s4, %s339
      %p341 = scmp.lt.s32.totalorder %s23, 3
      %s342 = scalar_select %p341, %s23, 3
      %s343 = smul.addr %s342, 2
      %s344 = smul.addr %s343, 8
      %s345 = scalar_lea.vmem %s5, %s344
      %p346 = scmp.lt.s32.totalorder %s22, 1
      %s347 = scalar_select %p346, %s22, 1
      %s348 = smul.addr %s347, 32
      %s349 = smul.addr %s348, 8
      %s350 = scalar_lea.vmem %s7, %s349
      %p352 = scmp.eq.s32.totalorder %s23, 0
      // Predicated region
      $region49: #{tpu_custom_call.1} parent=47 // pred_check
        %p353 = pneg %p352
      $region50: #{tpu_custom_call.1} parent=47 // pred_check_branch
        %355 = sbr.rel (%p353) target = $region52
      $region51: #{tpu_custom_call.1} parent=47 // pred_region
        %v356 = vld [vmem:[%s330] sm:$0xf]
        %v357 = vld [vmem:[%s330 + $0x4] sm:$0xf]
        %v358 = vld [vmem:[%s330 + $0x8] sm:$0xf]
        %v359 = vld [vmem:[%s330 + $0xc] sm:$0xf]
        %v360 = vld [vmem:[%s330 + $0x10] sm:$0xf]
        %v361 = vld [vmem:[%s330 + $0x14] sm:$0xf]
        %v362 = vld [vmem:[%s330 + $0x18] sm:$0xf]
        %v363 = vld [vmem:[%s330 + $0x1c] sm:$0xf]
        %v364 = vld [vmem:[%s330 + $0x20] sm:$0xf]
        %v365 = vld [vmem:[%s330 + $0x24] sm:$0xf]
        %v366 = vld [vmem:[%s330 + $0x28] sm:$0xf]
        %v367 = vld [vmem:[%s330 + $0x2c] sm:$0xf]
        %v368 = vld [vmem:[%s330 + $0x30] sm:$0xf]
        %v369 = vld [vmem:[%s330 + $0x34] sm:$0xf]
        %v370 = vld [vmem:[%s330 + $0x38] sm:$0xf]
        %v371 = vld [vmem:[%s330 + $0x3c] sm:$0xf]
        %v372 = vld [vmem:[%s330 + $0x40] sm:$0xf]
        %v373 = vld [vmem:[%s330 + $0x44] sm:$0xf]
        %v374 = vld [vmem:[%s330 + $0x48] sm:$0xf]
        %v375 = vld [vmem:[%s330 + $0x4c] sm:$0xf]
        %v376 = vld [vmem:[%s330 + $0x50] sm:$0xf]
        %v377 = vld [vmem:[%s330 + $0x54] sm:$0xf]
        %v378 = vld [vmem:[%s330 + $0x58] sm:$0xf]
        %v379 = vld [vmem:[%s330 + $0x5c] sm:$0xf]
        %v380 = vld [vmem:[%s330 + $0x60] sm:$0xf]
        %v381 = vld [vmem:[%s330 + $0x64] sm:$0xf]
        %v382 = vld [vmem:[%s330 + $0x68] sm:$0xf]
        %v383 = vld [vmem:[%s330 + $0x6c] sm:$0xf]
        %v384 = vld [vmem:[%s330 + $0x70] sm:$0xf]
        %v385 = vld [vmem:[%s330 + $0x74] sm:$0xf]
        %v386 = vld [vmem:[%s330 + $0x78] sm:$0xf]
        %v387 = vld [vmem:[%s330 + $0x7c] sm:$0xf]
        %v388 = vld [vmem:[%s2] sm:$0xf]
        %v389 = vld [vmem:[%s2 + $0x4] sm:$0xf]
        %v390 = vld [vmem:[%s2 + $0x8] sm:$0xf]
        %v391 = vld [vmem:[%s2 + $0xc] sm:$0xf]
        %v424 = vunpack.c.l.b16 %v356
        %v425 = vunpack.c.l.b16 %v357
        %v426 = vunpack.c.l.b16 %v358
        %v427 = vunpack.c.l.b16 %v359
        %v428 = vunpack.c.l.b16 %v360
        %v429 = vunpack.c.l.b16 %v361
        %v430 = vunpack.c.l.b16 %v362
        %v431 = vunpack.c.l.b16 %v363
        %v432 = vunpack.c.l.b16 %v364
        %v433 = vunpack.c.l.b16 %v365
        %v434 = vunpack.c.l.b16 %v366
        %v435 = vunpack.c.l.b16 %v367
        %v436 = vunpack.c.l.b16 %v368
        %v437 = vunpack.c.l.b16 %v369
        %v438 = vunpack.c.l.b16 %v370
        %v439 = vunpack.c.l.b16 %v371
        %v440 = vunpack.c.l.b16 %v372
        %v441 = vunpack.c.l.b16 %v373
        %v442 = vunpack.c.l.b16 %v374
        %v443 = vunpack.c.l.b16 %v375
        %v444 = vunpack.c.l.b16 %v376
        %v445 = vunpack.c.l.b16 %v377
        %v446 = vunpack.c.l.b16 %v378
        %v447 = vunpack.c.l.b16 %v379
        %v448 = vunpack.c.l.b16 %v380
        %v449 = vunpack.c.l.b16 %v381
        %v450 = vunpack.c.l.b16 %v382
        %v451 = vunpack.c.l.b16 %v383
        %v452 = vunpack.c.l.b16 %v384
        %v453 = vunpack.c.l.b16 %v385
        %v454 = vunpack.c.l.b16 %v386
        %v455 = vunpack.c.l.b16 %v387
        %v456 = vpack.c.b16 %v425, %v424
        %v457 = vpack.c.b16 %v427, %v426
        %v458 = vpack.c.b16 %v429, %v428
        %v459 = vpack.c.b16 %v431, %v430
        %v460 = vpack.c.b16 %v433, %v432
        %v461 = vpack.c.b16 %v435, %v434
        %v462 = vpack.c.b16 %v437, %v436
        %v463 = vpack.c.b16 %v439, %v438
        %v464 = vpack.c.b16 %v441, %v440
        %v465 = vpack.c.b16 %v443, %v442
        %v466 = vpack.c.b16 %v445, %v444
        %v467 = vpack.c.b16 %v447, %v446
        %v468 = vpack.c.b16 %v449, %v448
        %v469 = vpack.c.b16 %v451, %v450
        %v470 = vpack.c.b16 %v453, %v452
        %v471 = vpack.c.b16 %v455, %v454
        %v476 = vunpack.c.l.b16 %v388
        %v477 = vunpack.c.l.b16 %v389
        %v478 = vunpack.c.l.b16 %v390
        %v479 = vunpack.c.l.b16 %v391
        %v480 = vpack.c.b16 %v477, %v476
        %v481 = vpack.c.b16 %v479, %v478
        %vm484 = vcmask 261120
        %v486 = vsel %vm484, %v456, 0
        %v489 = vsel %vm484, %v457, 0
        %v492 = vsel %vm484, %v458, 0
        %v495 = vsel %vm484, %v459, 0
        %v498 = vsel %vm484, %v460, 0
        %v501 = vsel %vm484, %v461, 0
        %v504 = vsel %vm484, %v462, 0
        %v507 = vsel %vm484, %v463, 0
        %v510 = vsel %vm484, %v464, 0
        %v513 = vsel %vm484, %v465, 0
        %v516 = vsel %vm484, %v466, 0
        %v519 = vsel %vm484, %v467, 0
        %v522 = vsel %vm484, %v468, 0
        %v525 = vsel %vm484, %v469, 0
        %v528 = vsel %vm484, %v470, 0
        %v531 = vsel %vm484, %v471, 0
        %533 = vmatprep.subr.bf16.mxu0 0
        %534 = vmatpush1.bf16.msra.mxu0 0
        %535 = vmatprep.subr.bf16.mxu0 0
        %536 = vmatpush1.bf16.msra.mxu0 0
        %537 = vmatprep.subr.bf16.mxu0 0
        %538 = vmatpush1.bf16.msra.mxu0 0
        %539 = vmatprep.subr.bf16.mxu0 0
        %540 = vmatpush1.bf16.msra.mxu0 0
        %541 = vmatprep.subr.bf16.mxu0 0
        %542 = vmatpush1.bf16.msra.mxu0 0
        %543 = vmatprep.subr.bf16.mxu0 0
        %544 = vmatpush1.bf16.msra.mxu0 0
        %545 = vmatprep.subr.bf16.mxu0 0
        %546 = vmatpush1.bf16.msra.mxu0 %v481
        %547 = vmatprep.subr.bf16.mxu0 0
        %548 = vmatpush1.bf16.msra.mxu0 %v480
        %549 = vmatprep.subr.bf16.mxu0 0
        %550 = vmatpush2.bf16.msra.mxu0 0
        %551 = vmatprep.subr.bf16.mxu0 0
        %552 = vmatpush2.bf16.msra.mxu0 0
        %553 = vmatprep.subr.bf16.mxu0 0
        %554 = vmatpush2.bf16.msra.mxu0 0
        %555 = vmatprep.subr.bf16.mxu0 0
        %556 = vmatpush2.bf16.msra.mxu0 0
        %557 = vmatprep.subr.bf16.mxu0 0
        %558 = vmatpush2.bf16.msra.mxu0 0
        %559 = vmatprep.subr.bf16.mxu0 0
        %560 = vmatpush2.bf16.msra.mxu0 0
        %561 = vmatprep.subr.bf16.mxu0 0
        %562 = vmatpush2.bf16.msra.mxu0 0
        %563 = vmatprep.subr.bf16.mxu0 0
        %564 = vmatpush2.bf16.msra.mxu0 0
        %565 = vmatprep.mubr.bf16.mxu0 0
        %566 = vmatmul.mubr.bf16.gmra.mxu0 %v486
        %v567 = vpop.f32.mrf.mxu0
        %v568 = vadd.f32 0.0, %v567
        %v569 = vpop.f32.mrf.mxu0
        %v570 = vpop.f32.mrf.mxu0
        %v571 = vadd.f32 0.0, %v570
        %v572 = vpop.f32.mrf.mxu0
        %573 = vmatprep.mubr.bf16.mxu0 0
        %574 = vmatmul.mubr.bf16.gmra.mxu0 %v489
        %v575 = vpop.f32.mrf.mxu0
        %v576 = vadd.f32 0.0, %v575
        %v577 = vpop.f32.mrf.mxu0
        %v578 = vpop.f32.mrf.mxu0
        %v579 = vadd.f32 0.0, %v578
        %v580 = vpop.f32.mrf.mxu0
        %581 = vmatprep.mubr.bf16.mxu0 0
        %582 = vmatmul.mubr.bf16.gmra.mxu0 %v492
        %v583 = vpop.f32.mrf.mxu0
        %v584 = vadd.f32 0.0, %v583
        %v585 = vpop.f32.mrf.mxu0
        %v586 = vpop.f32.mrf.mxu0
        %v587 = vadd.f32 0.0, %v586
        %v588 = vpop.f32.mrf.mxu0
        %589 = vmatprep.mubr.bf16.mxu0 0
        %590 = vmatmul.mubr.bf16.gmra.mxu0 %v495
        %v591 = vpop.f32.mrf.mxu0
        %v592 = vadd.f32 0.0, %v591
        %v593 = vpop.f32.mrf.mxu0
        %v594 = vpop.f32.mrf.mxu0
        %v595 = vadd.f32 0.0, %v594
        %v596 = vpop.f32.mrf.mxu0
        %597 = vmatprep.mubr.bf16.mxu0 0
        %598 = vmatmul.mubr.bf16.gmra.mxu0 %v498
        %v599 = vpop.f32.mrf.mxu0
        %v600 = vadd.f32 0.0, %v599
        %v601 = vpop.f32.mrf.mxu0
        %v602 = vpop.f32.mrf.mxu0
        %v603 = vadd.f32 0.0, %v602
        %v604 = vpop.f32.mrf.mxu0
        %605 = vmatprep.mubr.bf16.mxu0 0
        %606 = vmatmul.mubr.bf16.gmra.mxu0 %v501
        %v607 = vpop.f32.mrf.mxu0
        %v608 = vadd.f32 0.0, %v607
        %v609 = vpop.f32.mrf.mxu0
        %v610 = vpop.f32.mrf.mxu0
        %v611 = vadd.f32 0.0, %v610
        %v612 = vpop.f32.mrf.mxu0
        %613 = vmatprep.mubr.bf16.mxu0 0
        %614 = vmatmul.mubr.bf16.gmra.mxu0 %v504
        %v615 = vpop.f32.mrf.mxu0
        %v616 = vadd.f32 0.0, %v615
        %v617 = vpop.f32.mrf.mxu0
        %v618 = vpop.f32.mrf.mxu0
        %v619 = vadd.f32 0.0, %v618
        %v620 = vpop.f32.mrf.mxu0
        %621 = vmatprep.mubr.bf16.mxu0 0
        %622 = vmatmul.mubr.bf16.gmra.mxu0 %v507
        %v623 = vpop.f32.mrf.mxu0
        %v624 = vadd.f32 0.0, %v623
        %v625 = vpop.f32.mrf.mxu0
        %v626 = vpop.f32.mrf.mxu0
        %v627 = vadd.f32 0.0, %v626
        %v628 = vpop.f32.mrf.mxu0
        %629 = vmatprep.mubr.bf16.mxu0 0
        %630 = vmatmul.mubr.bf16.gmra.mxu0 %v510
        %v631 = vpop.f32.mrf.mxu0
        %v632 = vadd.f32 0.0, %v631
        %v633 = vpop.f32.mrf.mxu0
        %v634 = vpop.f32.mrf.mxu0
        %v635 = vadd.f32 0.0, %v634
        %v636 = vpop.f32.mrf.mxu0
        %637 = vmatprep.mubr.bf16.mxu0 0
        %638 = vmatmul.mubr.bf16.gmra.mxu0 %v513
        %v639 = vpop.f32.mrf.mxu0
        %v640 = vadd.f32 0.0, %v639
        %v641 = vpop.f32.mrf.mxu0
        %v642 = vpop.f32.mrf.mxu0
        %v643 = vadd.f32 0.0, %v642
        %v644 = vpop.f32.mrf.mxu0
        %645 = vmatprep.mubr.bf16.mxu0 0
        %646 = vmatmul.mubr.bf16.gmra.mxu0 %v516
        %v647 = vpop.f32.mrf.mxu0
        %v648 = vadd.f32 0.0, %v647
        %v649 = vpop.f32.mrf.mxu0
        %v650 = vpop.f32.mrf.mxu0
        %v651 = vadd.f32 0.0, %v650
        %v652 = vpop.f32.mrf.mxu0
        %653 = vmatprep.mubr.bf16.mxu0 0
        %654 = vmatmul.mubr.bf16.gmra.mxu0 %v519
        %v655 = vpop.f32.mrf.mxu0
        %v656 = vadd.f32 0.0, %v655
        %v657 = vpop.f32.mrf.mxu0
        %v658 = vpop.f32.mrf.mxu0
        %v659 = vadd.f32 0.0, %v658
        %v660 = vpop.f32.mrf.mxu0
        %661 = vmatprep.mubr.bf16.mxu0 0
        %662 = vmatmul.mubr.bf16.gmra.mxu0 %v522
        %v663 = vpop.f32.mrf.mxu0
        %v664 = vadd.f32 0.0, %v663
        %v665 = vpop.f32.mrf.mxu0
        %v666 = vpop.f32.mrf.mxu0
        %v667 = vadd.f32 0.0, %v666
        %v668 = vpop.f32.mrf.mxu0
        %669 = vmatprep.mubr.bf16.mxu0 0
        %670 = vmatmul.mubr.bf16.gmra.mxu0 %v525
        %v671 = vpop.f32.mrf.mxu0
        %v672 = vadd.f32 0.0, %v671
        %v673 = vpop.f32.mrf.mxu0
        %v674 = vpop.f32.mrf.mxu0
        %v675 = vadd.f32 0.0, %v674
        %v676 = vpop.f32.mrf.mxu0
        %677 = vmatprep.mubr.bf16.mxu0 0
        %678 = vmatmul.mubr.bf16.gmra.mxu0 %v528
        %v679 = vpop.f32.mrf.mxu0
        %v680 = vadd.f32 0.0, %v679
        %v681 = vpop.f32.mrf.mxu0
        %v682 = vpop.f32.mrf.mxu0
        %v683 = vadd.f32 0.0, %v682
        %v684 = vpop.f32.mrf.mxu0
        %685 = vmatprep.mubr.bf16.mxu0 0
        %686 = vmatmul.mubr.bf16.gmra.mxu0 %v531
        %v687 = vpop.f32.mrf.mxu0
        %v688 = vadd.f32 0.0, %v687
        %v689 = vpop.f32.mrf.mxu0
        %v690 = vpop.f32.mrf.mxu0
        %v691 = vadd.f32 0.0, %v690
        %v692 = vpop.f32.mrf.mxu0
        %693 = vdwg.mxu0
        %694 = vst.msk [vmem:[#allocation2] sm:$0xff] %vm484, %v568
        %695 = vst.msk [vmem:[#allocation2 + $0x8] sm:$0xff] %vm484, %v571
        %696 = vst.msk [vmem:[#allocation2 + $0x10] sm:$0xff] %vm484, %v576
        %697 = vst.msk [vmem:[#allocation2 + $0x18] sm:$0xff] %vm484, %v579
        %698 = vst.msk [vmem:[#allocation2 + $0x20] sm:$0xff] %vm484, %v584
        %699 = vst.msk [vmem:[#allocation2 + $0x28] sm:$0xff] %vm484, %v587
        %700 = vst.msk [vmem:[#allocation2 + $0x30] sm:$0xff] %vm484, %v592
        %701 = vst.msk [vmem:[#allocation2 + $0x38] sm:$0xff] %vm484, %v595
        %702 = vst.msk [vmem:[#allocation2 + $0x40] sm:$0xff] %vm484, %v600
        %703 = vst.msk [vmem:[#allocation2 + $0x48] sm:$0xff] %vm484, %v603
        %704 = vst.msk [vmem:[#allocation2 + $0x50] sm:$0xff] %vm484, %v608
        %705 = vst.msk [vmem:[#allocation2 + $0x58] sm:$0xff] %vm484, %v611
        %706 = vst.msk [vmem:[#allocation2 + $0x60] sm:$0xff] %vm484, %v616
        %707 = vst.msk [vmem:[#allocation2 + $0x68] sm:$0xff] %vm484, %v619
        %708 = vst.msk [vmem:[#allocation2 + $0x70] sm:$0xff] %vm484, %v624
        %709 = vst.msk [vmem:[#allocation2 + $0x78] sm:$0xff] %vm484, %v627
        %710 = vst.msk [vmem:[#allocation2 + $0x80] sm:$0xff] %vm484, %v632
        %711 = vst.msk [vmem:[#allocation2 + $0x88] sm:$0xff] %vm484, %v635
        %712 = vst.msk [vmem:[#allocation2 + $0x90] sm:$0xff] %vm484, %v640
        %713 = vst.msk [vmem:[#allocation2 + $0x98] sm:$0xff] %vm484, %v643
        %714 = vst.msk [vmem:[#allocation2 + $0xa0] sm:$0xff] %vm484, %v648
        %715 = vst.msk [vmem:[#allocation2 + $0xa8] sm:$0xff] %vm484, %v651
        %716 = vst.msk [vmem:[#allocation2 + $0xb0] sm:$0xff] %vm484, %v656
        %717 = vst.msk [vmem:[#allocation2 + $0xb8] sm:$0xff] %vm484, %v659
        %718 = vst.msk [vmem:[#allocation2 + $0xc0] sm:$0xff] %vm484, %v664
        %719 = vst.msk [vmem:[#allocation2 + $0xc8] sm:$0xff] %vm484, %v667
        %720 = vst.msk [vmem:[#allocation2 + $0xd0] sm:$0xff] %vm484, %v672
        %721 = vst.msk [vmem:[#allocation2 + $0xd8] sm:$0xff] %vm484, %v675
        %722 = vst.msk [vmem:[#allocation2 + $0xe0] sm:$0xff] %vm484, %v680
        %723 = vst.msk [vmem:[#allocation2 + $0xe8] sm:$0xff] %vm484, %v683
        %724 = vst.msk [vmem:[#allocation2 + $0xf0] sm:$0xff] %vm484, %v688
        %725 = vst.msk [vmem:[#allocation2 + $0xf8] sm:$0xff] %vm484, %v691
        %726 = vst.msk [vmem:[#allocation3] sm:$0xff] %vm484, 0.0
        %727 = vst.msk [vmem:[#allocation3 + $0x8] sm:$0xff] %vm484, 0.0
        %728 = vst.msk [vmem:[#allocation3 + $0x10] sm:$0xff] %vm484, 0.0
        %729 = vst.msk [vmem:[#allocation3 + $0x18] sm:$0xff] %vm484, 0.0
        %730 = vst.msk [vmem:[#allocation3 + $0x20] sm:$0xff] %vm484, 0.0
        %731 = vst.msk [vmem:[#allocation3 + $0x28] sm:$0xff] %vm484, 0.0
        %732 = vst.msk [vmem:[#allocation3 + $0x30] sm:$0xff] %vm484, 0.0
        %733 = vst.msk [vmem:[#allocation3 + $0x38] sm:$0xff] %vm484, 0.0
        %734 = vst.msk [vmem:[#allocation3 + $0x40] sm:$0xff] %vm484, 0.0
        %735 = vst.msk [vmem:[#allocation3 + $0x48] sm:$0xff] %vm484, 0.0
        %736 = vst.msk [vmem:[#allocation3 + $0x50] sm:$0xff] %vm484, 0.0
        %737 = vst.msk [vmem:[#allocation3 + $0x58] sm:$0xff] %vm484, 0.0
        %738 = vst.msk [vmem:[#allocation3 + $0x60] sm:$0xff] %vm484, 0.0
        %739 = vst.msk [vmem:[#allocation3 + $0x68] sm:$0xff] %vm484, 0.0
        %740 = vst.msk [vmem:[#allocation3 + $0x70] sm:$0xff] %vm484, 0.0
        %741 = vst.msk [vmem:[#allocation3 + $0x78] sm:$0xff] %vm484, 0.0
        %742 = vst.msk [vmem:[#allocation3 + $0x80] sm:$0xff] %vm484, 0.0
        %743 = vst.msk [vmem:[#allocation3 + $0x88] sm:$0xff] %vm484, 0.0
        %744 = vst.msk [vmem:[#allocation3 + $0x90] sm:$0xff] %vm484, 0.0
        %745 = vst.msk [vmem:[#allocation3 + $0x98] sm:$0xff] %vm484, 0.0
        %746 = vst.msk [vmem:[#allocation3 + $0xa0] sm:$0xff] %vm484, 0.0
        %747 = vst.msk [vmem:[#allocation3 + $0xa8] sm:$0xff] %vm484, 0.0
        %748 = vst.msk [vmem:[#allocation3 + $0xb0] sm:$0xff] %vm484, 0.0
        %749 = vst.msk [vmem:[#allocation3 + $0xb8] sm:$0xff] %vm484, 0.0
        %750 = vst.msk [vmem:[#allocation3 + $0xc0] sm:$0xff] %vm484, 0.0
        %751 = vst.msk [vmem:[#allocation3 + $0xc8] sm:$0xff] %vm484, 0.0
        %752 = vst.msk [vmem:[#allocation3 + $0xd0] sm:$0xff] %vm484, 0.0
        %753 = vst.msk [vmem:[#allocation3 + $0xd8] sm:$0xff] %vm484, 0.0
        %754 = vst.msk [vmem:[#allocation3 + $0xe0] sm:$0xff] %vm484, 0.0
        %755 = vst.msk [vmem:[#allocation3 + $0xe8] sm:$0xff] %vm484, 0.0
        %756 = vst.msk [vmem:[#allocation3 + $0xf0] sm:$0xff] %vm484, 0.0
        %757 = vst.msk [vmem:[#allocation3 + $0xf8] sm:$0xff] %vm484, 0.0
        %758 = vst.msk [vmem:[#allocation4] sm:$0xff] %vm484, 0.0
        %759 = vst.msk [vmem:[#allocation4 + $0x8] sm:$0xff] %vm484, 0.0
        %760 = vst.msk [vmem:[#allocation4 + $0x10] sm:$0xff] %vm484, 0.0
        %761 = vst.msk [vmem:[#allocation4 + $0x18] sm:$0xff] %vm484, 0.0
        %s762 = scalar_lea.vmem [#allocation4], 544
        %763 = vst.msk [vmem:[%s762] sm:$0xff] %vm484, 0.0
        %764 = vst.msk [vmem:[%s762 + $0x8] sm:$0xff] %vm484, 0.0
        %765 = vst.msk [vmem:[%s762 + $0x10] sm:$0xff] %vm484, 0.0
        %766 = vst.msk [vmem:[%s762 + $0x18] sm:$0xff] %vm484, 0.0
        %767 = vst.msk [vmem:[#allocation4] sm:$0xff] %vm484, 0.0
        %768 = vst.msk [vmem:[#allocation4 + $0x20] sm:$0xff] %vm484, 0.0
        %769 = vst.msk [vmem:[#allocation4 + $0x40] sm:$0xff] %vm484, 0.0
        %770 = vst.msk [vmem:[#allocation4 + $0x60] sm:$0xff] %vm484, 0.0
        %771 = vst.msk [vmem:[#allocation4 + $0x80] sm:$0xff] %vm484, 0.0
        %772 = vst.msk [vmem:[#allocation4 + $0xa0] sm:$0xff] %vm484, 0.0
        %773 = vst.msk [vmem:[#allocation4 + $0xc0] sm:$0xff] %vm484, 0.0
        %774 = vst.msk [vmem:[#allocation4 + $0xe0] sm:$0xff] %vm484, 0.0
        %775 = vst.msk [vmem:[#allocation4 + $0x100] sm:$0xff] %vm484, 0.0
        %776 = vst.msk [vmem:[#allocation4 + $0x120] sm:$0xff] %vm484, 0.0
        %777 = vst.msk [vmem:[#allocation4 + $0x140] sm:$0xff] %vm484, 0.0
        %778 = vst.msk [vmem:[#allocation4 + $0x160] sm:$0xff] %vm484, 0.0
        %779 = vst.msk [vmem:[#allocation4 + $0x180] sm:$0xff] %vm484, 0.0
        %780 = vst.msk [vmem:[#allocation4 + $0x1a0] sm:$0xff] %vm484, 0.0
        %781 = vst.msk [vmem:[#allocation4 + $0x1c0] sm:$0xff] %vm484, 0.0
        %782 = vst.msk [vmem:[#allocation4 + $0x1e0] sm:$0xff] %vm484, 0.0
        %783 = vst.msk [vmem:[#allocation4 + $0x200] sm:$0xff] %vm484, 0.0
        %784 = vst.msk [vmem:[#allocation4 + $0x220] sm:$0xff] %vm484, 0.0
        %785 = vst.msk [vmem:[#allocation4 + $0x18] sm:$0xff] %vm484, 0.0
        %786 = vst.msk [vmem:[#allocation4 + $0x38] sm:$0xff] %vm484, 0.0
        %787 = vst.msk [vmem:[#allocation4 + $0x58] sm:$0xff] %vm484, 0.0
        %788 = vst.msk [vmem:[#allocation4 + $0x78] sm:$0xff] %vm484, 0.0
        %789 = vst.msk [vmem:[#allocation4 + $0x98] sm:$0xff] %vm484, 0.0
        %790 = vst.msk [vmem:[#allocation4 + $0xb8] sm:$0xff] %vm484, 0.0
        %791 = vst.msk [vmem:[#allocation4 + $0xd8] sm:$0xff] %vm484, 0.0
        %792 = vst.msk [vmem:[#allocation4 + $0xf8] sm:$0xff] %vm484, 0.0
        %793 = vst.msk [vmem:[#allocation4 + $0x118] sm:$0xff] %vm484, 0.0
        %794 = vst.msk [vmem:[#allocation4 + $0x138] sm:$0xff] %vm484, 0.0
        %795 = vst.msk [vmem:[#allocation4 + $0x158] sm:$0xff] %vm484, 0.0
        %796 = vst.msk [vmem:[#allocation4 + $0x178] sm:$0xff] %vm484, 0.0
        %797 = vst.msk [vmem:[#allocation4 + $0x198] sm:$0xff] %vm484, 0.0
        %798 = vst.msk [vmem:[#allocation4 + $0x1b8] sm:$0xff] %vm484, 0.0
        %799 = vst.msk [vmem:[#allocation4 + $0x1d8] sm:$0xff] %vm484, 0.0
        %800 = vst.msk [vmem:[#allocation4 + $0x1f8] sm:$0xff] %vm484, 0.0
        %801 = vst.msk [vmem:[#allocation4 + $0x218] sm:$0xff] %vm484, 0.0
        %802 = vst.msk [vmem:[#allocation4 + $0x238] sm:$0xff] %vm484, 0.0
        %vm803 = vcmask 31744
        %804 = vst.msk [vmem:[#allocation5] sm:$0xff] %vm803, 0.0
        %805 = vst.msk [vmem:[#allocation5 + $0x8] sm:$0xff] %vm803, 0.0
        %806 = vst.msk [vmem:[#allocation5 + $0x10] sm:$0xff] %vm803, 0.0
        %807 = vst.msk [vmem:[#allocation5 + $0x18] sm:$0xff] %vm803, 0.0
        %s808 = scalar_lea.vmem [#allocation5], 544
        %809 = vst.msk [vmem:[%s808] sm:$0xff] %vm803, 0.0
        %810 = vst.msk [vmem:[%s808 + $0x8] sm:$0xff] %vm803, 0.0
        %811 = vst.msk [vmem:[%s808 + $0x10] sm:$0xff] %vm803, 0.0
        %812 = vst.msk [vmem:[%s808 + $0x18] sm:$0xff] %vm803, 0.0
        %813 = vst.msk [vmem:[#allocation5] sm:$0xff] %vm803, 0.0
        %814 = vst.msk [vmem:[#allocation5 + $0x20] sm:$0xff] %vm803, 0.0
        %815 = vst.msk [vmem:[#allocation5 + $0x40] sm:$0xff] %vm803, 0.0
        %816 = vst.msk [vmem:[#allocation5 + $0x60] sm:$0xff] %vm803, 0.0
        %817 = vst.msk [vmem:[#allocation5 + $0x80] sm:$0xff] %vm803, 0.0
        %818 = vst.msk [vmem:[#allocation5 + $0xa0] sm:$0xff] %vm803, 0.0
        %819 = vst.msk [vmem:[#allocation5 + $0xc0] sm:$0xff] %vm803, 0.0
        %820 = vst.msk [vmem:[#allocation5 + $0xe0] sm:$0xff] %vm803, 0.0
        %821 = vst.msk [vmem:[#allocation5 + $0x100] sm:$0xff] %vm803, 0.0
        %822 = vst.msk [vmem:[#allocation5 + $0x120] sm:$0xff] %vm803, 0.0
        %823 = vst.msk [vmem:[#allocation5 + $0x140] sm:$0xff] %vm803, 0.0
        %824 = vst.msk [vmem:[#allocation5 + $0x160] sm:$0xff] %vm803, 0.0
        %825 = vst.msk [vmem:[#allocation5 + $0x180] sm:$0xff] %vm803, 0.0
        %826 = vst.msk [vmem:[#allocation5 + $0x1a0] sm:$0xff] %vm803, 0.0
        %827 = vst.msk [vmem:[#allocation5 + $0x1c0] sm:$0xff] %vm803, 0.0
        %828 = vst.msk [vmem:[#allocation5 + $0x1e0] sm:$0xff] %vm803, 0.0
        %829 = vst.msk [vmem:[#allocation5 + $0x200] sm:$0xff] %vm803, 0.0
        %830 = vst.msk [vmem:[#allocation5 + $0x220] sm:$0xff] %vm803, 0.0
        %831 = vst.msk [vmem:[#allocation5 + $0x18] sm:$0xff] %vm803, 0.0
        %832 = vst.msk [vmem:[#allocation5 + $0x38] sm:$0xff] %vm803, 0.0
        %833 = vst.msk [vmem:[#allocation5 + $0x58] sm:$0xff] %vm803, 0.0
        %834 = vst.msk [vmem:[#allocation5 + $0x78] sm:$0xff] %vm803, 0.0
        %835 = vst.msk [vmem:[#allocation5 + $0x98] sm:$0xff] %vm803, 0.0
        %836 = vst.msk [vmem:[#allocation5 + $0xb8] sm:$0xff] %vm803, 0.0
        %837 = vst.msk [vmem:[#allocation5 + $0xd8] sm:$0xff] %vm803, 0.0
        %838 = vst.msk [vmem:[#allocation5 + $0xf8] sm:$0xff] %vm803, 0.0
        %839 = vst.msk [vmem:[#allocation5 + $0x118] sm:$0xff] %vm803, 0.0
        %840 = vst.msk [vmem:[#allocation5 + $0x138] sm:$0xff] %vm803, 0.0
        %841 = vst.msk [vmem:[#allocation5 + $0x158] sm:$0xff] %vm803, 0.0
        %842 = vst.msk [vmem:[#allocation5 + $0x178] sm:$0xff] %vm803, 0.0
        %843 = vst.msk [vmem:[#allocation5 + $0x198] sm:$0xff] %vm803, 0.0
        %844 = vst.msk [vmem:[#allocation5 + $0x1b8] sm:$0xff] %vm803, 0.0
        %845 = vst.msk [vmem:[#allocation5 + $0x1d8] sm:$0xff] %vm803, 0.0
        %846 = vst.msk [vmem:[#allocation5 + $0x1f8] sm:$0xff] %vm803, 0.0
        %847 = vst.msk [vmem:[#allocation5 + $0x218] sm:$0xff] %vm803, 0.0
        %848 = vst.msk [vmem:[#allocation5 + $0x238] sm:$0xff] %vm803, 0.0
      $region52: #{tpu_custom_call.1} parent=47 // pred_fallthru
        _
      %v849 = vld [vmem:[%s330] sm:$0xf]
      %v850 = vld [vmem:[%s330 + $0x4] sm:$0xf]
      %v851 = vld [vmem:[%s330 + $0x8] sm:$0xf]
      %v852 = vld [vmem:[%s330 + $0xc] sm:$0xf]
      %v853 = vld [vmem:[%s330 + $0x10] sm:$0xf]
      %v854 = vld [vmem:[%s330 + $0x14] sm:$0xf]
      %v855 = vld [vmem:[%s330 + $0x18] sm:$0xf]
      %v856 = vld [vmem:[%s330 + $0x1c] sm:$0xf]
      %v857 = vld [vmem:[%s330 + $0x20] sm:$0xf]
      %v858 = vld [vmem:[%s330 + $0x24] sm:$0xf]
      %v859 = vld [vmem:[%s330 + $0x28] sm:$0xf]
      %v860 = vld [vmem:[%s330 + $0x2c] sm:$0xf]
      %v861 = vld [vmem:[%s330 + $0x30] sm:$0xf]
      %v862 = vld [vmem:[%s330 + $0x34] sm:$0xf]
      %v863 = vld [vmem:[%s330 + $0x38] sm:$0xf]
      %v864 = vld [vmem:[%s330 + $0x3c] sm:$0xf]
      %v865 = vld [vmem:[%s330 + $0x40] sm:$0xf]
      %v866 = vld [vmem:[%s330 + $0x44] sm:$0xf]
      %v867 = vld [vmem:[%s330 + $0x48] sm:$0xf]
      %v868 = vld [vmem:[%s330 + $0x4c] sm:$0xf]
      %v869 = vld [vmem:[%s330 + $0x50] sm:$0xf]
      %v870 = vld [vmem:[%s330 + $0x54] sm:$0xf]
      %v871 = vld [vmem:[%s330 + $0x58] sm:$0xf]
      %v872 = vld [vmem:[%s330 + $0x5c] sm:$0xf]
      %v873 = vld [vmem:[%s330 + $0x60] sm:$0xf]
      %v874 = vld [vmem:[%s330 + $0x64] sm:$0xf]
      %v875 = vld [vmem:[%s330 + $0x68] sm:$0xf]
      %v876 = vld [vmem:[%s330 + $0x6c] sm:$0xf]
      %v877 = vld [vmem:[%s330 + $0x70] sm:$0xf]
      %v878 = vld [vmem:[%s330 + $0x74] sm:$0xf]
      %v879 = vld [vmem:[%s330 + $0x78] sm:$0xf]
      %v880 = vld [vmem:[%s330 + $0x7c] sm:$0xf]
      %v881 = vld [vmem:[%s335] sm:$0xf]
      %v882 = vld [vmem:[%s335 + $0x4] sm:$0xf]
      %v883 = vld [vmem:[%s335 + $0x8] sm:$0xf]
      %v884 = vld [vmem:[%s335 + $0xc] sm:$0xf]
      %v917 = vunpack.c.l.b16 %v849
      %v918 = vunpack.c.l.b16 %v850
      %v919 = vunpack.c.l.b16 %v851
      %v920 = vunpack.c.l.b16 %v852
      %v921 = vunpack.c.l.b16 %v853
      %v922 = vunpack.c.l.b16 %v854
      %v923 = vunpack.c.l.b16 %v855
      %v924 = vunpack.c.l.b16 %v856
      %v925 = vunpack.c.l.b16 %v857
      %v926 = vunpack.c.l.b16 %v858
      %v927 = vunpack.c.l.b16 %v859
      %v928 = vunpack.c.l.b16 %v860
      %v929 = vunpack.c.l.b16 %v861
      %v930 = vunpack.c.l.b16 %v862
      %v931 = vunpack.c.l.b16 %v863
      %v932 = vunpack.c.l.b16 %v864
      %v933 = vunpack.c.l.b16 %v865
      %v934 = vunpack.c.l.b16 %v866
      %v935 = vunpack.c.l.b16 %v867
      %v936 = vunpack.c.l.b16 %v868
      %v937 = vunpack.c.l.b16 %v869
      %v938 = vunpack.c.l.b16 %v870
      %v939 = vunpack.c.l.b16 %v871
      %v940 = vunpack.c.l.b16 %v872
      %v941 = vunpack.c.l.b16 %v873
      %v942 = vunpack.c.l.b16 %v874
      %v943 = vunpack.c.l.b16 %v875
      %v944 = vunpack.c.l.b16 %v876
      %v945 = vunpack.c.l.b16 %v877
      %v946 = vunpack.c.l.b16 %v878
      %v947 = vunpack.c.l.b16 %v879
      %v948 = vunpack.c.l.b16 %v880
      %v949 = vpack.c.b16 %v918, %v917
      %v950 = vpack.c.b16 %v920, %v919
      %v951 = vpack.c.b16 %v922, %v921
      %v952 = vpack.c.b16 %v924, %v923
      %v953 = vpack.c.b16 %v926, %v925
      %v954 = vpack.c.b16 %v928, %v927
      %v955 = vpack.c.b16 %v930, %v929
      %v956 = vpack.c.b16 %v932, %v931
      %v957 = vpack.c.b16 %v934, %v933
      %v958 = vpack.c.b16 %v936, %v935
      %v959 = vpack.c.b16 %v938, %v937
      %v960 = vpack.c.b16 %v940, %v939
      %v961 = vpack.c.b16 %v942, %v941
      %v962 = vpack.c.b16 %v944, %v943
      %v963 = vpack.c.b16 %v946, %v945
      %v964 = vpack.c.b16 %v948, %v947
      %v969 = vunpack.c.l.b16 %v881
      %v970 = vunpack.c.l.b16 %v882
      %v971 = vunpack.c.l.b16 %v883
      %v972 = vunpack.c.l.b16 %v884
      %v973 = vpack.c.b16 %v970, %v969
      %v974 = vpack.c.b16 %v972, %v971
      %vm977 = vcmask 261120
      %v979 = vsel %vm977, %v949, 0
      %v982 = vsel %vm977, %v950, 0
      %v985 = vsel %vm977, %v951, 0
      %v988 = vsel %vm977, %v952, 0
      %v991 = vsel %vm977, %v953, 0
      %v994 = vsel %vm977, %v954, 0
      %v997 = vsel %vm977, %v955, 0
      %v1000 = vsel %vm977, %v956, 0
      %v1003 = vsel %vm977, %v957, 0
      %v1006 = vsel %vm977, %v958, 0
      %v1009 = vsel %vm977, %v959, 0
      %v1012 = vsel %vm977, %v960, 0
      %v1015 = vsel %vm977, %v961, 0
      %v1018 = vsel %vm977, %v962, 0
      %v1021 = vsel %vm977, %v963, 0
      %v1024 = vsel %vm977, %v964, 0
      %1026 = vmatprep.subr.bf16.mxu0 0
      %1027 = vmatpush1.bf16.msra.mxu0 0
      %1028 = vmatprep.subr.bf16.mxu0 0
      %1029 = vmatpush1.bf16.msra.mxu0 0
      %1030 = vmatprep.subr.bf16.mxu0 0
      %1031 = vmatpush1.bf16.msra.mxu0 0
      %1032 = vmatprep.subr.bf16.mxu0 0
      %1033 = vmatpush1.bf16.msra.mxu0 0
      %1034 = vmatprep.subr.bf16.mxu0 0
      %1035 = vmatpush1.bf16.msra.mxu0 0
      %1036 = vmatprep.subr.bf16.mxu0 0
      %1037 = vmatpush1.bf16.msra.mxu0 0
      %1038 = vmatprep.subr.bf16.mxu0 0
      %1039 = vmatpush1.bf16.msra.mxu0 %v974
      %1040 = vmatprep.subr.bf16.mxu0 0
      %1041 = vmatpush1.bf16.msra.mxu0 %v973
      %1042 = vmatprep.subr.bf16.mxu0 0
      %1043 = vmatpush2.bf16.msra.mxu0 0
      %1044 = vmatprep.subr.bf16.mxu0 0
      %1045 = vmatpush2.bf16.msra.mxu0 0
      %1046 = vmatprep.subr.bf16.mxu0 0
      %1047 = vmatpush2.bf16.msra.mxu0 0
      %1048 = vmatprep.subr.bf16.mxu0 0
      %1049 = vmatpush2.bf16.msra.mxu0 0
      %1050 = vmatprep.subr.bf16.mxu0 0
      %1051 = vmatpush2.bf16.msra.mxu0 0
      %1052 = vmatprep.subr.bf16.mxu0 0
      %1053 = vmatpush2.bf16.msra.mxu0 0
      %1054 = vmatprep.subr.bf16.mxu0 0
      %1055 = vmatpush2.bf16.msra.mxu0 0
      %1056 = vmatprep.subr.bf16.mxu0 0
      %1057 = vmatpush2.bf16.msra.mxu0 0
      %1058 = vmatprep.mubr.bf16.mxu0 0
      %1059 = vmatmul.mubr.bf16.gmra.mxu0 %v979
      %v1060 = vpop.f32.mrf.mxu0
      %v1061 = vadd.f32 0.0, %v1060
      %v1062 = vpop.f32.mrf.mxu0
      %v1063 = vpop.f32.mrf.mxu0
      %v1064 = vadd.f32 0.0, %v1063
      %v1065 = vpop.f32.mrf.mxu0
      %1066 = vmatprep.mubr.bf16.mxu0 0
      %1067 = vmatmul.mubr.bf16.gmra.mxu0 %v982
      %v1068 = vpop.f32.mrf.mxu0
      %v1069 = vadd.f32 0.0, %v1068
      %v1070 = vpop.f32.mrf.mxu0
      %v1071 = vpop.f32.mrf.mxu0
      %v1072 = vadd.f32 0.0, %v1071
      %v1073 = vpop.f32.mrf.mxu0
      %1074 = vmatprep.mubr.bf16.mxu0 0
      %1075 = vmatmul.mubr.bf16.gmra.mxu0 %v985
      %v1076 = vpop.f32.mrf.mxu0
      %v1077 = vadd.f32 0.0, %v1076
      %v1078 = vpop.f32.mrf.mxu0
      %v1079 = vpop.f32.mrf.mxu0
      %v1080 = vadd.f32 0.0, %v1079
      %v1081 = vpop.f32.mrf.mxu0
      %1082 = vmatprep.mubr.bf16.mxu0 0
      %1083 = vmatmul.mubr.bf16.gmra.mxu0 %v988
      %v1084 = vpop.f32.mrf.mxu0
      %v1085 = vadd.f32 0.0, %v1084
      %v1086 = vpop.f32.mrf.mxu0
      %v1087 = vpop.f32.mrf.mxu0
      %v1088 = vadd.f32 0.0, %v1087
      %v1089 = vpop.f32.mrf.mxu0
      %1090 = vmatprep.mubr.bf16.mxu0 0
      %1091 = vmatmul.mubr.bf16.gmra.mxu0 %v991
      %v1092 = vpop.f32.mrf.mxu0
      %v1093 = vadd.f32 0.0, %v1092
      %v1094 = vpop.f32.mrf.mxu0
      %v1095 = vpop.f32.mrf.mxu0
      %v1096 = vadd.f32 0.0, %v1095
      %v1097 = vpop.f32.mrf.mxu0
      %1098 = vmatprep.mubr.bf16.mxu0 0
      %1099 = vmatmul.mubr.bf16.gmra.mxu0 %v994
      %v1100 = vpop.f32.mrf.mxu0
      %v1101 = vadd.f32 0.0, %v1100
      %v1102 = vpop.f32.mrf.mxu0
      %v1103 = vpop.f32.mrf.mxu0
      %v1104 = vadd.f32 0.0, %v1103
      %v1105 = vpop.f32.mrf.mxu0
      %1106 = vmatprep.mubr.bf16.mxu0 0
      %1107 = vmatmul.mubr.bf16.gmra.mxu0 %v997
      %v1108 = vpop.f32.mrf.mxu0
      %v1109 = vadd.f32 0.0, %v1108
      %v1110 = vpop.f32.mrf.mxu0
      %v1111 = vpop.f32.mrf.mxu0
      %v1112 = vadd.f32 0.0, %v1111
      %v1113 = vpop.f32.mrf.mxu0
      %1114 = vmatprep.mubr.bf16.mxu0 0
      %1115 = vmatmul.mubr.bf16.gmra.mxu0 %v1000
      %v1116 = vpop.f32.mrf.mxu0
      %v1117 = vadd.f32 0.0, %v1116
      %v1118 = vpop.f32.mrf.mxu0
      %v1119 = vpop.f32.mrf.mxu0
      %v1120 = vadd.f32 0.0, %v1119
      %v1121 = vpop.f32.mrf.mxu0
      %1122 = vmatprep.mubr.bf16.mxu0 0
      %1123 = vmatmul.mubr.bf16.gmra.mxu0 %v1003
      %v1124 = vpop.f32.mrf.mxu0
      %v1125 = vadd.f32 0.0, %v1124
      %v1126 = vpop.f32.mrf.mxu0
      %v1127 = vpop.f32.mrf.mxu0
      %v1128 = vadd.f32 0.0, %v1127
      %v1129 = vpop.f32.mrf.mxu0
      %1130 = vmatprep.mubr.bf16.mxu0 0
      %1131 = vmatmul.mubr.bf16.gmra.mxu0 %v1006
      %v1132 = vpop.f32.mrf.mxu0
      %v1133 = vadd.f32 0.0, %v1132
      %v1134 = vpop.f32.mrf.mxu0
      %v1135 = vpop.f32.mrf.mxu0
      %v1136 = vadd.f32 0.0, %v1135
      %v1137 = vpop.f32.mrf.mxu0
      %1138 = vmatprep.mubr.bf16.mxu0 0
      %1139 = vmatmul.mubr.bf16.gmra.mxu0 %v1009
      %v1140 = vpop.f32.mrf.mxu0
      %v1141 = vadd.f32 0.0, %v1140
      %v1142 = vpop.f32.mrf.mxu0
      %v1143 = vpop.f32.mrf.mxu0
      %v1144 = vadd.f32 0.0, %v1143
      %v1145 = vpop.f32.mrf.mxu0
      %1146 = vmatprep.mubr.bf16.mxu0 0
      %1147 = vmatmul.mubr.bf16.gmra.mxu0 %v1012
      %v1148 = vpop.f32.mrf.mxu0
      %v1149 = vadd.f32 0.0, %v1148
      %v1150 = vpop.f32.mrf.mxu0
      %v1151 = vpop.f32.mrf.mxu0
      %v1152 = vadd.f32 0.0, %v1151
      %v1153 = vpop.f32.mrf.mxu0
      %1154 = vmatprep.mubr.bf16.mxu0 0
      %1155 = vmatmul.mubr.bf16.gmra.mxu0 %v1015
      %v1156 = vpop.f32.mrf.mxu0
      %v1157 = vadd.f32 0.0, %v1156
      %v1158 = vpop.f32.mrf.mxu0
      %v1159 = vpop.f32.mrf.mxu0
      %v1160 = vadd.f32 0.0, %v1159
      %v1161 = vpop.f32.mrf.mxu0
      %1162 = vmatprep.mubr.bf16.mxu0 0
      %1163 = vmatmul.mubr.bf16.gmra.mxu0 %v1018
      %v1164 = vpop.f32.mrf.mxu0
      %v1165 = vadd.f32 0.0, %v1164
      %v1166 = vpop.f32.mrf.mxu0
      %v1167 = vpop.f32.mrf.mxu0
      %v1168 = vadd.f32 0.0, %v1167
      %v1169 = vpop.f32.mrf.mxu0
      %1170 = vmatprep.mubr.bf16.mxu0 0
      %1171 = vmatmul.mubr.bf16.gmra.mxu0 %v1021
      %v1172 = vpop.f32.mrf.mxu0
      %v1173 = vadd.f32 0.0, %v1172
      %v1174 = vpop.f32.mrf.mxu0
      %v1175 = vpop.f32.mrf.mxu0
      %v1176 = vadd.f32 0.0, %v1175
      %v1177 = vpop.f32.mrf.mxu0
      %1178 = vmatprep.mubr.bf16.mxu0 0
      %1179 = vmatmul.mubr.bf16.gmra.mxu0 %v1024
      %v1180 = vpop.f32.mrf.mxu0
      %v1181 = vadd.f32 0.0, %v1180
      %v1182 = vpop.f32.mrf.mxu0
      %v1183 = vpop.f32.mrf.mxu0
      %v1184 = vadd.f32 0.0, %v1183
      %v1185 = vpop.f32.mrf.mxu0
      %1186 = vdwg.mxu0
      %vm1187 = vcmask 31744
      %v1188 = vsel %vm1187, %v1061, -inf
      %v1189 = vsel %vm1187, %v1064, -inf
      %v1190 = vsel %vm1187, %v1069, -inf
      %v1191 = vsel %vm1187, %v1072, -inf
      %v1192 = vsel %vm1187, %v1077, -inf
      %v1193 = vmax.f32 %v1188, %v1192
      %v1194 = vsel %vm1187, %v1080, -inf
      %v1195 = vmax.f32 %v1189, %v1194
      %v1196 = vsel %vm1187, %v1085, -inf
      %v1197 = vmax.f32 %v1190, %v1196
      %v1198 = vsel %vm1187, %v1088, -inf
      %v1199 = vmax.f32 %v1191, %v1198
      %v1200 = vsel %vm1187, %v1093, -inf
      %v1201 = vmax.f32 %v1193, %v1200
      %v1202 = vsel %vm1187, %v1096, -inf
      %v1203 = vmax.f32 %v1195, %v1202
      %v1204 = vsel %vm1187, %v1101, -inf
      %v1205 = vmax.f32 %v1197, %v1204
      %v1206 = vsel %vm1187, %v1104, -inf
      %v1207 = vmax.f32 %v1199, %v1206
      %v1208 = vsel %vm1187, %v1109, -inf
      %v1209 = vmax.f32 %v1201, %v1208
      %v1210 = vsel %vm1187, %v1112, -inf
      %v1211 = vmax.f32 %v1203, %v1210
      %v1212 = vsel %vm1187, %v1117, -inf
      %v1213 = vmax.f32 %v1205, %v1212
      %v1214 = vsel %vm1187, %v1120, -inf
      %v1215 = vmax.f32 %v1207, %v1214
      %v1216 = vsel %vm1187, %v1125, -inf
      %v1217 = vmax.f32 %v1209, %v1216
      %v1218 = vsel %vm1187, %v1128, -inf
      %v1219 = vmax.f32 %v1211, %v1218
      %v1220 = vsel %vm1187, %v1133, -inf
      %v1221 = vmax.f32 %v1213, %v1220
      %v1222 = vsel %vm1187, %v1136, -inf
      %v1223 = vmax.f32 %v1215, %v1222
      %v1224 = vsel %vm1187, %v1141, -inf
      %v1225 = vmax.f32 %v1217, %v1224
      %v1226 = vsel %vm1187, %v1144, -inf
      %v1227 = vmax.f32 %v1219, %v1226
      %v1228 = vsel %vm1187, %v1149, -inf
      %v1229 = vmax.f32 %v1221, %v1228
      %v1230 = vsel %vm1187, %v1152, -inf
      %v1231 = vmax.f32 %v1223, %v1230
      %v1232 = vsel %vm1187, %v1157, -inf
      %v1233 = vmax.f32 %v1225, %v1232
      %v1234 = vsel %vm1187, %v1160, -inf
      %v1235 = vmax.f32 %v1227, %v1234
      %v1236 = vsel %vm1187, %v1165, -inf
      %v1237 = vmax.f32 %v1229, %v1236
      %v1238 = vsel %vm1187, %v1168, -inf
      %v1239 = vmax.f32 %v1231, %v1238
      %v1240 = vsel %vm1187, %v1173, -inf
      %v1241 = vmax.f32 %v1233, %v1240
      %v1242 = vsel %vm1187, %v1176, -inf
      %v1243 = vmax.f32 %v1235, %v1242
      %v1244 = vsel %vm1187, %v1181, -inf
      %v1245 = vmax.f32 %v1237, %v1244
      %v1246 = vsel %vm1187, %v1184, -inf
      %v1247 = vmax.f32 %v1239, %v1246
      %v1248 = vmax.f32 %v1241, %v1243
      %v1249 = vmax.f32 %v1245, %v1247
      %v1250 = vmax.f32 %v1248, %v1249
      %v1251 = vrot.slane %v1250, 4
      %v1252 = vmax.f32 %v1250, %v1251
      %v1253 = vrot.slane %v1252, 2
      %v1254 = vmax.f32 %v1252, %v1253
      %v1255 = vrot.slane %v1254, 1
      %v1256 = vmax.f32 %v1254, %v1255
      %v1257 = vsub.f32 %v1061, %v1256
      %v1258 = vsub.f32 %v1064, %v1256
      %v1259 = vsub.f32 %v1069, %v1256
      %v1260 = vsub.f32 %v1072, %v1256
      %v1261 = vsub.f32 %v1077, %v1256
      %v1262 = vsub.f32 %v1080, %v1256
      %v1263 = vsub.f32 %v1085, %v1256
      %v1264 = vsub.f32 %v1088, %v1256
      %v1265 = vsub.f32 %v1093, %v1256
      %v1266 = vsub.f32 %v1096, %v1256
      %v1267 = vsub.f32 %v1101, %v1256
      %v1268 = vsub.f32 %v1104, %v1256
      %v1269 = vsub.f32 %v1109, %v1256
      %v1270 = vsub.f32 %v1112, %v1256
      %v1271 = vsub.f32 %v1117, %v1256
      %v1272 = vsub.f32 %v1120, %v1256
      %v1273 = vsub.f32 %v1125, %v1256
      %v1274 = vsub.f32 %v1128, %v1256
      %v1275 = vsub.f32 %v1133, %v1256
      %v1276 = vsub.f32 %v1136, %v1256
      %v1277 = vsub.f32 %v1141, %v1256
      %v1278 = vsub.f32 %v1144, %v1256
      %v1279 = vsub.f32 %v1149, %v1256
      %v1280 = vsub.f32 %v1152, %v1256
      %v1281 = vsub.f32 %v1157, %v1256
      %v1282 = vsub.f32 %v1160, %v1256
      %v1283 = vsub.f32 %v1165, %v1256
      %v1284 = vsub.f32 %v1168, %v1256
      %v1285 = vsub.f32 %v1173, %v1256
      %v1286 = vsub.f32 %v1176, %v1256
      %v1287 = vsub.f32 %v1181, %v1256
      %v1288 = vsub.f32 %v1184, %v1256
      %v1289 = vmul.f32 %v1257, 1.442695
      %v1290 = vpow.pop %v1289
      %v1291 = vmul.f32 %v1258, 1.442695
      %v1292 = vpow.pop %v1291
      %v1293 = vmul.f32 %v1259, 1.442695
      %v1294 = vpow.pop %v1293
      %v1295 = vmul.f32 %v1260, 1.442695
      %v1296 = vpow.pop %v1295
      %v1297 = vmul.f32 %v1261, 1.442695
      %v1298 = vpow.pop %v1297
      %v1299 = vmul.f32 %v1262, 1.442695
      %v1300 = vpow.pop %v1299
      %v1301 = vmul.f32 %v1263, 1.442695
      %v1302 = vpow.pop %v1301
      %v1303 = vmul.f32 %v1264, 1.442695
      %v1304 = vpow.pop %v1303
      %v1305 = vmul.f32 %v1265, 1.442695
      %v1306 = vpow.pop %v1305
      %v1307 = vmul.f32 %v1266, 1.442695
      %v1308 = vpow.pop %v1307
      %v1309 = vmul.f32 %v1267, 1.442695
      %v1310 = vpow.pop %v1309
      %v1311 = vmul.f32 %v1268, 1.442695
      %v1312 = vpow.pop %v1311
      %v1313 = vmul.f32 %v1269, 1.442695
      %v1314 = vpow.pop %v1313
      %v1315 = vmul.f32 %v1270, 1.442695
      %v1316 = vpow.pop %v1315
      %v1317 = vmul.f32 %v1271, 1.442695
      %v1318 = vpow.pop %v1317
      %v1319 = vmul.f32 %v1272, 1.442695
      %v1320 = vpow.pop %v1319
      %v1321 = vmul.f32 %v1273, 1.442695
      %v1322 = vpow.pop %v1321
      %v1323 = vmul.f32 %v1274, 1.442695
      %v1324 = vpow.pop %v1323
      %v1325 = vmul.f32 %v1275, 1.442695
      %v1326 = vpow.pop %v1325
      %v1327 = vmul.f32 %v1276, 1.442695
      %v1328 = vpow.pop %v1327
      %v1329 = vmul.f32 %v1277, 1.442695
      %v1330 = vpow.pop %v1329
      %v1331 = vmul.f32 %v1278, 1.442695
      %v1332 = vpow.pop %v1331
      %v1333 = vmul.f32 %v1279, 1.442695
      %v1334 = vpow.pop %v1333
      %v1335 = vmul.f32 %v1280, 1.442695
      %v1336 = vpow.pop %v1335
      %v1337 = vmul.f32 %v1281, 1.442695
      %v1338 = vpow.pop %v1337
      %v1339 = vmul.f32 %v1282, 1.442695
      %v1340 = vpow.pop %v1339
      %v1341 = vmul.f32 %v1283, 1.442695
      %v1342 = vpow.pop %v1341
      %v1343 = vmul.f32 %v1284, 1.442695
      %v1344 = vpow.pop %v1343
      %v1345 = vmul.f32 %v1285, 1.442695
      %v1346 = vpow.pop %v1345
      %v1347 = vmul.f32 %v1286, 1.442695
      %v1348 = vpow.pop %v1347
      %v1349 = vmul.f32 %v1287, 1.442695
      %v1350 = vpow.pop %v1349
      %v1351 = vmul.f32 %v1288, 1.442695
      %v1352 = vpow.pop %v1351
      %v1353 = vld [vmem:[%s3] sm:$0xf]
      %v1355 = vsel %vm1187, %v1290, 0
      %v1358 = vsel %vm1187, %v1292, 0
      %v1361 = vsel %vm1187, %v1294, 0
      %v1364 = vsel %vm1187, %v1296, 0
      %v1367 = vsel %vm1187, %v1298, 0
      %v1370 = vsel %vm1187, %v1300, 0
      %v1373 = vsel %vm1187, %v1302, 0
      %v1376 = vsel %vm1187, %v1304, 0
      %v1379 = vsel %vm1187, %v1306, 0
      %v1382 = vsel %vm1187, %v1308, 0
      %v1385 = vsel %vm1187, %v1310, 0
      %v1388 = vsel %vm1187, %v1312, 0
      %v1391 = vsel %vm1187, %v1314, 0
      %v1394 = vsel %vm1187, %v1316, 0
      %v1397 = vsel %vm1187, %v1318, 0
      %v1400 = vsel %vm1187, %v1320, 0
      %v1403 = vsel %vm1187, %v1322, 0
      %v1406 = vsel %vm1187, %v1324, 0
      %v1409 = vsel %vm1187, %v1326, 0
      %v1412 = vsel %vm1187, %v1328, 0
      %v1415 = vsel %vm1187, %v1330, 0
      %v1418 = vsel %vm1187, %v1332, 0
      %v1421 = vsel %vm1187, %v1334, 0
      %v1424 = vsel %vm1187, %v1336, 0
      %v1427 = vsel %vm1187, %v1338, 0
      %v1430 = vsel %vm1187, %v1340, 0
      %v1433 = vsel %vm1187, %v1342, 0
      %v1436 = vsel %vm1187, %v1344, 0
      %v1439 = vsel %vm1187, %v1346, 0
      %v1442 = vsel %vm1187, %v1348, 0
      %v1445 = vsel %vm1187, %v1350, 0
      %v1448 = vsel %vm1187, %v1352, 0
      %vm1450 = vcmask 1043456
      %v1452 = vsel %vm1450, %v1353, 0
      %1454 = vmatprep.subr.mxu0 0.0
      %1455 = vmatpush1.msra.mxu0 0.0
      %1456 = vmatprep.subr.mxu0 0.0
      %1457 = vmatpush1.msra.mxu0 0.0
      %1458 = vmatprep.subr.mxu0 0.0
      %1459 = vmatpush1.msra.mxu0 0.0
      %1460 = vmatprep.subr.mxu0 0.0
      %1461 = vmatpush1.msra.mxu0 0.0
      %1462 = vmatprep.subr.mxu0 0.0
      %1463 = vmatpush1.msra.mxu0 0.0
      %1464 = vmatprep.subr.mxu0 0.0
      %1465 = vmatpush1.msra.mxu0 0.0
      %1466 = vmatprep.subr.mxu0 0.0
      %1467 = vmatpush1.msra.mxu0 0.0
      %1468 = vmatprep.subr.mxu0 0.0
      %1469 = vmatpush1.msra.mxu0 0.0
      %1470 = vmatprep.subr.mxu0 0.0
      %1471 = vmatpush1.msra.mxu0 0.0
      %1472 = vmatprep.subr.mxu0 0.0
      %1473 = vmatpush1.msra.mxu0 0.0
      %1474 = vmatprep.subr.mxu0 0.0
      %1475 = vmatpush1.msra.mxu0 0.0
      %1476 = vmatprep.subr.mxu0 0.0
      %1477 = vmatpush1.msra.mxu0 0.0
      %1478 = vmatprep.subr.mxu0 0.0
      %1479 = vmatpush1.msra.mxu0 0.0
      %1480 = vmatprep.subr.mxu0 0.0
      %1481 = vmatpush1.msra.mxu0 0.0
      %1482 = vmatprep.subr.mxu0 0.0
      %1483 = vmatpush1.msra.mxu0 0.0
      %1484 = vmatprep.subr.mxu0 0.0
      %1485 = vmatpush1.msra.mxu0 %v1452
      %1486 = vmatprep.subr.mxu0 0.0
      %1487 = vmatpush2.msra.mxu0 0.0
      %1488 = vmatprep.subr.mxu0 0.0
      %1489 = vmatpush2.msra.mxu0 0.0
      %1490 = vmatprep.subr.mxu0 0.0
      %1491 = vmatpush2.msra.mxu0 0.0
      %1492 = vmatprep.subr.mxu0 0.0
      %1493 = vmatpush2.msra.mxu0 0.0
      %1494 = vmatprep.subr.mxu0 0.0
      %1495 = vmatpush2.msra.mxu0 0.0
      %1496 = vmatprep.subr.mxu0 0.0
      %1497 = vmatpush2.msra.mxu0 0.0
      %1498 = vmatprep.subr.mxu0 0.0
      %1499 = vmatpush2.msra.mxu0 0.0
      %1500 = vmatprep.subr.mxu0 0.0
      %1501 = vmatpush2.msra.mxu0 0.0
      %1502 = vmatprep.subr.mxu0 0.0
      %1503 = vmatpush2.msra.mxu0 0.0
      %1504 = vmatprep.subr.mxu0 0.0
      %1505 = vmatpush2.msra.mxu0 0.0
      %1506 = vmatprep.subr.mxu0 0.0
      %1507 = vmatpush2.msra.mxu0 0.0
      %1508 = vmatprep.subr.mxu0 0.0
      %1509 = vmatpush2.msra.mxu0 0.0
      %1510 = vmatprep.subr.mxu0 0.0
      %1511 = vmatpush2.msra.mxu0 0.0
      %1512 = vmatprep.subr.mxu0 0.0
      %1513 = vmatpush2.msra.mxu0 0.0
      %1514 = vmatprep.subr.mxu0 0.0
      %1515 = vmatpush2.msra.mxu0 0.0
      %1516 = vmatprep.subr.mxu0 0.0
      %1517 = vmatpush2.msra.mxu0 0.0
      %1518 = vmatprep.mubr.f32.mxu0 0.0
      %1519 = vmatmul.mubr.f32.gmra.mxu0 %v1355
      %v1520 = vpop.f32.mrf.mxu0
      %v1521 = vadd.f32 0.0, %v1520
      %v1522 = vpop.f32.mrf.mxu0
      %1523 = vmatprep.mubr.f32.mxu0 0.0
      %1524 = vmatmul.mubr.f32.gmra.mxu0 %v1358
      %v1525 = vpop.f32.mrf.mxu0
      %v1526 = vadd.f32 0.0, %v1525
      %v1527 = vpop.f32.mrf.mxu0
      %1528 = vmatprep.mubr.f32.mxu0 0.0
      %1529 = vmatmul.mubr.f32.gmra.mxu0 %v1361
      %v1530 = vpop.f32.mrf.mxu0
      %v1531 = vadd.f32 0.0, %v1530
      %v1532 = vpop.f32.mrf.mxu0
      %1533 = vmatprep.mubr.f32.mxu0 0.0
      %1534 = vmatmul.mubr.f32.gmra.mxu0 %v1364
      %v1535 = vpop.f32.mrf.mxu0
      %v1536 = vadd.f32 0.0, %v1535
      %v1537 = vpop.f32.mrf.mxu0
      %1538 = vmatprep.mubr.f32.mxu0 0.0
      %1539 = vmatmul.mubr.f32.gmra.mxu0 %v1367
      %v1540 = vpop.f32.mrf.mxu0
      %v1541 = vadd.f32 0.0, %v1540
      %v1542 = vpop.f32.mrf.mxu0
      %1543 = vmatprep.mubr.f32.mxu0 0.0
      %1544 = vmatmul.mubr.f32.gmra.mxu0 %v1370
      %v1545 = vpop.f32.mrf.mxu0
      %v1546 = vadd.f32 0.0, %v1545
      %v1547 = vpop.f32.mrf.mxu0
      %1548 = vmatprep.mubr.f32.mxu0 0.0
      %1549 = vmatmul.mubr.f32.gmra.mxu0 %v1373
      %v1550 = vpop.f32.mrf.mxu0
      %v1551 = vadd.f32 0.0, %v1550
      %v1552 = vpop.f32.mrf.mxu0
      %1553 = vmatprep.mubr.f32.mxu0 0.0
      %1554 = vmatmul.mubr.f32.gmra.mxu0 %v1376
      %v1555 = vpop.f32.mrf.mxu0
      %v1556 = vadd.f32 0.0, %v1555
      %v1557 = vpop.f32.mrf.mxu0
      %1558 = vmatprep.mubr.f32.mxu0 0.0
      %1559 = vmatmul.mubr.f32.gmra.mxu0 %v1379
      %v1560 = vpop.f32.mrf.mxu0
      %v1561 = vadd.f32 0.0, %v1560
      %v1562 = vpop.f32.mrf.mxu0
      %1563 = vmatprep.mubr.f32.mxu0 0.0
      %1564 = vmatmul.mubr.f32.gmra.mxu0 %v1382
      %v1565 = vpop.f32.mrf.mxu0
      %v1566 = vadd.f32 0.0, %v1565
      %v1567 = vpop.f32.mrf.mxu0
      %1568 = vmatprep.mubr.f32.mxu0 0.0
      %1569 = vmatmul.mubr.f32.gmra.mxu0 %v1385
      %v1570 = vpop.f32.mrf.mxu0
      %v1571 = vadd.f32 0.0, %v1570
      %v1572 = vpop.f32.mrf.mxu0
      %1573 = vmatprep.mubr.f32.mxu0 0.0
      %1574 = vmatmul.mubr.f32.gmra.mxu0 %v1388
      %v1575 = vpop.f32.mrf.mxu0
      %v1576 = vadd.f32 0.0, %v1575
      %v1577 = vpop.f32.mrf.mxu0
      %1578 = vmatprep.mubr.f32.mxu0 0.0
      %1579 = vmatmul.mubr.f32.gmra.mxu0 %v1391
      %v1580 = vpop.f32.mrf.mxu0
      %v1581 = vadd.f32 0.0, %v1580
      %v1582 = vpop.f32.mrf.mxu0
      %1583 = vmatprep.mubr.f32.mxu0 0.0
      %1584 = vmatmul.mubr.f32.gmra.mxu0 %v1394
      %v1585 = vpop.f32.mrf.mxu0
      %v1586 = vadd.f32 0.0, %v1585
      %v1587 = vpop.f32.mrf.mxu0
      %1588 = vmatprep.mubr.f32.mxu0 0.0
      %1589 = vmatmul.mubr.f32.gmra.mxu0 %v1397
      %v1590 = vpop.f32.mrf.mxu0
      %v1591 = vadd.f32 0.0, %v1590
      %v1592 = vpop.f32.mrf.mxu0
      %1593 = vmatprep.mubr.f32.mxu0 0.0
      %1594 = vmatmul.mubr.f32.gmra.mxu0 %v1400
      %v1595 = vpop.f32.mrf.mxu0
      %v1596 = vadd.f32 0.0, %v1595
      %v1597 = vpop.f32.mrf.mxu0
      %1598 = vmatprep.mubr.f32.mxu0 0.0
      %1599 = vmatmul.mubr.f32.gmra.mxu0 %v1403
      %v1600 = vpop.f32.mrf.mxu0
      %v1601 = vadd.f32 0.0, %v1600
      %v1602 = vpop.f32.mrf.mxu0
      %1603 = vmatprep.mubr.f32.mxu0 0.0
      %1604 = vmatmul.mubr.f32.gmra.mxu0 %v1406
      %v1605 = vpop.f32.mrf.mxu0
      %v1606 = vadd.f32 0.0, %v1605
      %v1607 = vpop.f32.mrf.mxu0
      %1608 = vmatprep.mubr.f32.mxu0 0.0
      %1609 = vmatmul.mubr.f32.gmra.mxu0 %v1409
      %v1610 = vpop.f32.mrf.mxu0
      %v1611 = vadd.f32 0.0, %v1610
      %v1612 = vpop.f32.mrf.mxu0
      %1613 = vmatprep.mubr.f32.mxu0 0.0
      %1614 = vmatmul.mubr.f32.gmra.mxu0 %v1412
      %v1615 = vpop.f32.mrf.mxu0
      %v1616 = vadd.f32 0.0, %v1615
      %v1617 = vpop.f32.mrf.mxu0
      %1618 = vmatprep.mubr.f32.mxu0 0.0
      %1619 = vmatmul.mubr.f32.gmra.mxu0 %v1415
      %v1620 = vpop.f32.mrf.mxu0
      %v1621 = vadd.f32 0.0, %v1620
      %v1622 = vpop.f32.mrf.mxu0
      %1623 = vmatprep.mubr.f32.mxu0 0.0
      %1624 = vmatmul.mubr.f32.gmra.mxu0 %v1418
      %v1625 = vpop.f32.mrf.mxu0
      %v1626 = vadd.f32 0.0, %v1625
      %v1627 = vpop.f32.mrf.mxu0
      %1628 = vmatprep.mubr.f32.mxu0 0.0
      %1629 = vmatmul.mubr.f32.gmra.mxu0 %v1421
      %v1630 = vpop.f32.mrf.mxu0
      %v1631 = vadd.f32 0.0, %v1630
      %v1632 = vpop.f32.mrf.mxu0
      %1633 = vmatprep.mubr.f32.mxu0 0.0
      %1634 = vmatmul.mubr.f32.gmra.mxu0 %v1424
      %v1635 = vpop.f32.mrf.mxu0
      %v1636 = vadd.f32 0.0, %v1635
      %v1637 = vpop.f32.mrf.mxu0
      %1638 = vmatprep.mubr.f32.mxu0 0.0
      %1639 = vmatmul.mubr.f32.gmra.mxu0 %v1427
      %v1640 = vpop.f32.mrf.mxu0
      %v1641 = vadd.f32 0.0, %v1640
      %v1642 = vpop.f32.mrf.mxu0
      %1643 = vmatprep.mubr.f32.mxu0 0.0
      %1644 = vmatmul.mubr.f32.gmra.mxu0 %v1430
      %v1645 = vpop.f32.mrf.mxu0
      %v1646 = vadd.f32 0.0, %v1645
      %v1647 = vpop.f32.mrf.mxu0
      %1648 = vmatprep.mubr.f32.mxu0 0.0
      %1649 = vmatmul.mubr.f32.gmra.mxu0 %v1433
      %v1650 = vpop.f32.mrf.mxu0
      %v1651 = vadd.f32 0.0, %v1650
      %v1652 = vpop.f32.mrf.mxu0
      %1653 = vmatprep.mubr.f32.mxu0 0.0
      %1654 = vmatmul.mubr.f32.gmra.mxu0 %v1436
      %v1655 = vpop.f32.mrf.mxu0
      %v1656 = vadd.f32 0.0, %v1655
      %v1657 = vpop.f32.mrf.mxu0
      %1658 = vmatprep.mubr.f32.mxu0 0.0
      %1659 = vmatmul.mubr.f32.gmra.mxu0 %v1439
      %v1660 = vpop.f32.mrf.mxu0
      %v1661 = vadd.f32 0.0, %v1660
      %v1662 = vpop.f32.mrf.mxu0
      %1663 = vmatprep.mubr.f32.mxu0 0.0
      %1664 = vmatmul.mubr.f32.gmra.mxu0 %v1442
      %v1665 = vpop.f32.mrf.mxu0
      %v1666 = vadd.f32 0.0, %v1665
      %v1667 = vpop.f32.mrf.mxu0
      %1668 = vmatprep.mubr.f32.mxu0 0.0
      %1669 = vmatmul.mubr.f32.gmra.mxu0 %v1445
      %v1670 = vpop.f32.mrf.mxu0
      %v1671 = vadd.f32 0.0, %v1670
      %v1672 = vpop.f32.mrf.mxu0
      %1673 = vmatprep.mubr.f32.mxu0 0.0
      %1674 = vmatmul.mubr.f32.gmra.mxu0 %v1448
      %v1675 = vpop.f32.mrf.mxu0
      %v1676 = vadd.f32 0.0, %v1675
      %v1677 = vpop.f32.mrf.mxu0
      %1678 = vdwg.mxu0
      %v1679 = vld [vmem:[#allocation2] sm:$0xff]
      %v1680 = vld [vmem:[#allocation2 + $0x8] sm:$0xff]
      %v1681 = vld [vmem:[#allocation2 + $0x10] sm:$0xff]
      %v1682 = vld [vmem:[#allocation2 + $0x18] sm:$0xff]
      %v1683 = vld [vmem:[#allocation2 + $0x20] sm:$0xff]
      %v1684 = vld [vmem:[#allocation2 + $0x28] sm:$0xff]
      %v1685 = vld [vmem:[#allocation2 + $0x30] sm:$0xff]
      %v1686 = vld [vmem:[#allocation2 + $0x38] sm:$0xff]
      %v1687 = vld [vmem:[#allocation2 + $0x40] sm:$0xff]
      %v1688 = vld [vmem:[#allocation2 + $0x48] sm:$0xff]
      %v1689 = vld [vmem:[#allocation2 + $0x50] sm:$0xff]
      %v1690 = vld [vmem:[#allocation2 + $0x58] sm:$0xff]
      %v1691 = vld [vmem:[#allocation2 + $0x60] sm:$0xff]
      %v1692 = vld [vmem:[#allocation2 + $0x68] sm:$0xff]
      %v1693 = vld [vmem:[#allocation2 + $0x70] sm:$0xff]
      %v1694 = vld [vmem:[#allocation2 + $0x78] sm:$0xff]
      %v1695 = vld [vmem:[#allocation2 + $0x80] sm:$0xff]
      %v1696 = vld [vmem:[#allocation2 + $0x88] sm:$0xff]
      %v1697 = vld [vmem:[#allocation2 + $0x90] sm:$0xff]
      %v1698 = vld [vmem:[#allocation2 + $0x98] sm:$0xff]
      %v1699 = vld [vmem:[#allocation2 + $0xa0] sm:$0xff]
      %v1700 = vld [vmem:[#allocation2 + $0xa8] sm:$0xff]
      %v1701 = vld [vmem:[#allocation2 + $0xb0] sm:$0xff]
      %v1702 = vld [vmem:[#allocation2 + $0xb8] sm:$0xff]
      %v1703 = vld [vmem:[#allocation2 + $0xc0] sm:$0xff]
      %v1704 = vld [vmem:[#allocation2 + $0xc8] sm:$0xff]
      %v1705 = vld [vmem:[#allocation2 + $0xd0] sm:$0xff]
      %v1706 = vld [vmem:[#allocation2 + $0xd8] sm:$0xff]
      %v1707 = vld [vmem:[#allocation2 + $0xe0] sm:$0xff]
      %v1708 = vld [vmem:[#allocation2 + $0xe8] sm:$0xff]
      %v1709 = vld [vmem:[#allocation2 + $0xf0] sm:$0xff]
      %v1710 = vld [vmem:[#allocation2 + $0xf8] sm:$0xff]
      %v1711 = vmul.f32 %v1521, %v1679
      %v1712 = vmul.f32 %v1526, %v1680
      %v1713 = vmul.f32 %v1531, %v1681
      %v1714 = vmul.f32 %v1536, %v1682
      %v1715 = vmul.f32 %v1541, %v1683
      %v1716 = vmul.f32 %v1546, %v1684
      %v1717 = vmul.f32 %v1551, %v1685
      %v1718 = vmul.f32 %v1556, %v1686
      %v1719 = vmul.f32 %v1561, %v1687
      %v1720 = vmul.f32 %v1566, %v1688
      %v1721 = vmul.f32 %v1571, %v1689
      %v1722 = vmul.f32 %v1576, %v1690
      %v1723 = vmul.f32 %v1581, %v1691
      %v1724 = vmul.f32 %v1586, %v1692
      %v1725 = vmul.f32 %v1591, %v1693
      %v1726 = vmul.f32 %v1596, %v1694
      %v1727 = vmul.f32 %v1601, %v1695
      %v1728 = vmul.f32 %v1606, %v1696
      %v1729 = vmul.f32 %v1611, %v1697
      %v1730 = vmul.f32 %v1616, %v1698
      %v1731 = vmul.f32 %v1621, %v1699
      %v1732 = vmul.f32 %v1626, %v1700
      %v1733 = vmul.f32 %v1631, %v1701
      %v1734 = vmul.f32 %v1636, %v1702
      %v1735 = vmul.f32 %v1641, %v1703
      %v1736 = vmul.f32 %v1646, %v1704
      %v1737 = vmul.f32 %v1651, %v1705
      %v1738 = vmul.f32 %v1656, %v1706
      %v1739 = vmul.f32 %v1661, %v1707
      %v1740 = vmul.f32 %v1666, %v1708
      %v1741 = vmul.f32 %v1671, %v1709
      %v1742 = vmul.f32 %v1676, %v1710
      %s1743 = scalar_lea.vmem [#allocation4], 32
      %1744 = vst.msk [vmem:[%s1743 + $0x8] sm:$0xff] %vm977, %v1711
      %1745 = vst.msk [vmem:[%s1743 + $0x10] sm:$0xff] %vm977, %v1712
      %1746 = vst.msk [vmem:[%s1743 + $0x28] sm:$0xff] %vm977, %v1713
      %1747 = vst.msk [vmem:[%s1743 + $0x30] sm:$0xff] %vm977, %v1714
      %1748 = vst.msk [vmem:[%s1743 + $0x48] sm:$0xff] %vm977, %v1715
      %1749 = vst.msk [vmem:[%s1743 + $0x50] sm:$0xff] %vm977, %v1716
      %1750 = vst.msk [vmem:[%s1743 + $0x68] sm:$0xff] %vm977, %v1717
      %1751 = vst.msk [vmem:[%s1743 + $0x70] sm:$0xff] %vm977, %v1718
      %1752 = vst.msk [vmem:[%s1743 + $0x88] sm:$0xff] %vm977, %v1719
      %1753 = vst.msk [vmem:[%s1743 + $0x90] sm:$0xff] %vm977, %v1720
      %1754 = vst.msk [vmem:[%s1743 + $0xa8] sm:$0xff] %vm977, %v1721
      %1755 = vst.msk [vmem:[%s1743 + $0xb0] sm:$0xff] %vm977, %v1722
      %1756 = vst.msk [vmem:[%s1743 + $0xc8] sm:$0xff] %vm977, %v1723
      %1757 = vst.msk [vmem:[%s1743 + $0xd0] sm:$0xff] %vm977, %v1724
      %1758 = vst.msk [vmem:[%s1743 + $0xe8] sm:$0xff] %vm977, %v1725
      %1759 = vst.msk [vmem:[%s1743 + $0xf0] sm:$0xff] %vm977, %v1726
      %1760 = vst.msk [vmem:[%s1743 + $0x108] sm:$0xff] %vm977, %v1727
      %1761 = vst.msk [vmem:[%s1743 + $0x110] sm:$0xff] %vm977, %v1728
      %1762 = vst.msk [vmem:[%s1743 + $0x128] sm:$0xff] %vm977, %v1729
      %1763 = vst.msk [vmem:[%s1743 + $0x130] sm:$0xff] %vm977, %v1730
      %1764 = vst.msk [vmem:[%s1743 + $0x148] sm:$0xff] %vm977, %v1731
      %1765 = vst.msk [vmem:[%s1743 + $0x150] sm:$0xff] %vm977, %v1732
      %1766 = vst.msk [vmem:[%s1743 + $0x168] sm:$0xff] %vm977, %v1733
      %1767 = vst.msk [vmem:[%s1743 + $0x170] sm:$0xff] %vm977, %v1734
      %1768 = vst.msk [vmem:[%s1743 + $0x188] sm:$0xff] %vm977, %v1735
      %1769 = vst.msk [vmem:[%s1743 + $0x190] sm:$0xff] %vm977, %v1736
      %1770 = vst.msk [vmem:[%s1743 + $0x1a8] sm:$0xff] %vm977, %v1737
      %1771 = vst.msk [vmem:[%s1743 + $0x1b0] sm:$0xff] %vm977, %v1738
      %1772 = vst.msk [vmem:[%s1743 + $0x1c8] sm:$0xff] %vm977, %v1739
      %1773 = vst.msk [vmem:[%s1743 + $0x1d0] sm:$0xff] %vm977, %v1740
      %1774 = vst.msk [vmem:[%s1743 + $0x1e8] sm:$0xff] %vm977, %v1741
      %1775 = vst.msk [vmem:[%s1743 + $0x1f0] sm:$0xff] %vm977, %v1742
      %s1776 = scalar_lea.vmem [#allocation5], 32
      %1777 = vst.msk [vmem:[%s1776 + $0x8] sm:$0xff] %vm1187, %v1290
      %1778 = vst.msk [vmem:[%s1776 + $0x10] sm:$0xff] %vm1187, %v1292
      %1779 = vst.msk [vmem:[%s1776 + $0x28] sm:$0xff] %vm1187, %v1294
      %1780 = vst.msk [vmem:[%s1776 + $0x30] sm:$0xff] %vm1187, %v1296
      %1781 = vst.msk [vmem:[%s1776 + $0x48] sm:$0xff] %vm1187, %v1298
      %1782 = vst.msk [vmem:[%s1776 + $0x50] sm:$0xff] %vm1187, %v1300
      %1783 = vst.msk [vmem:[%s1776 + $0x68] sm:$0xff] %vm1187, %v1302
      %1784 = vst.msk [vmem:[%s1776 + $0x70] sm:$0xff] %vm1187, %v1304
      %1785 = vst.msk [vmem:[%s1776 + $0x88] sm:$0xff] %vm1187, %v1306
      %1786 = vst.msk [vmem:[%s1776 + $0x90] sm:$0xff] %vm1187, %v1308
      %1787 = vst.msk [vmem:[%s1776 + $0xa8] sm:$0xff] %vm1187, %v1310
      %1788 = vst.msk [vmem:[%s1776 + $0xb0] sm:$0xff] %vm1187, %v1312
      %1789 = vst.msk [vmem:[%s1776 + $0xc8] sm:$0xff] %vm1187, %v1314
      %1790 = vst.msk [vmem:[%s1776 + $0xd0] sm:$0xff] %vm1187, %v1316
      %1791 = vst.msk [vmem:[%s1776 + $0xe8] sm:$0xff] %vm1187, %v1318
      %1792 = vst.msk [vmem:[%s1776 + $0xf0] sm:$0xff] %vm1187, %v1320
      %1793 = vst.msk [vmem:[%s1776 + $0x108] sm:$0xff] %vm1187, %v1322
      %1794 = vst.msk [vmem:[%s1776 + $0x110] sm:$0xff] %vm1187, %v1324
      %1795 = vst.msk [vmem:[%s1776 + $0x128] sm:$0xff] %vm1187, %v1326
      %1796 = vst.msk [vmem:[%s1776 + $0x130] sm:$0xff] %vm1187, %v1328
      %1797 = vst.msk [vmem:[%s1776 + $0x148] sm:$0xff] %vm1187, %v1330
      %1798 = vst.msk [vmem:[%s1776 + $0x150] sm:$0xff] %vm1187, %v1332
      %1799 = vst.msk [vmem:[%s1776 + $0x168] sm:$0xff] %vm1187, %v1334
      %1800 = vst.msk [vmem:[%s1776 + $0x170] sm:$0xff] %vm1187, %v1336
      %1801 = vst.msk [vmem:[%s1776 + $0x188] sm:$0xff] %vm1187, %v1338
      %1802 = vst.msk [vmem:[%s1776 + $0x190] sm:$0xff] %vm1187, %v1340
      %1803 = vst.msk [vmem:[%s1776 + $0x1a8] sm:$0xff] %vm1187, %v1342
      %1804 = vst.msk [vmem:[%s1776 + $0x1b0] sm:$0xff] %vm1187, %v1344
      %1805 = vst.msk [vmem:[%s1776 + $0x1c8] sm:$0xff] %vm1187, %v1346
      %1806 = vst.msk [vmem:[%s1776 + $0x1d0] sm:$0xff] %vm1187, %v1348
      %1807 = vst.msk [vmem:[%s1776 + $0x1e8] sm:$0xff] %vm1187, %v1350
      %1808 = vst.msk [vmem:[%s1776 + $0x1f0] sm:$0xff] %vm1187, %v1352
      %v1809 = vld [vmem:[%s340] sm:$0xff]
      %v1810 = vld [vmem:[%s340 + $0x8] sm:$0x1]
      %v1811 = vld [vmem:[%s345] sm:$0xff]
      %v1812 = vld [vmem:[%s345 + $0x8] sm:$0x1]
      %v1813 = vld [vmem:[#allocation4 + $0x7] sm:$0xff]
      %v1814 = vld [vmem:[#allocation4 + $0xf] sm:$0xff]
      %v1815 = vld [vmem:[#allocation4 + $0x27] sm:$0xff]
      %v1816 = vld [vmem:[#allocation4 + $0x2f] sm:$0xff]
      %v1817 = vld [vmem:[#allocation4 + $0x47] sm:$0xff]
      %v1818 = vld [vmem:[#allocation4 + $0x4f] sm:$0xff]
      %v1819 = vld [vmem:[#allocation4 + $0x67] sm:$0xff]
      %v1820 = vld [vmem:[#allocation4 + $0x6f] sm:$0xff]
      %v1821 = vld [vmem:[#allocation4 + $0x87] sm:$0xff]
      %v1822 = vld [vmem:[#allocation4 + $0x8f] sm:$0xff]
      %v1823 = vld [vmem:[#allocation4 + $0xa7] sm:$0xff]
      %v1824 = vld [vmem:[#allocation4 + $0xaf] sm:$0xff]
      %v1825 = vld [vmem:[#allocation4 + $0xc7] sm:$0xff]
      %v1826 = vld [vmem:[#allocation4 + $0xcf] sm:$0xff]
      %v1827 = vld [vmem:[#allocation4 + $0xe7] sm:$0xff]
      %v1828 = vld [vmem:[#allocation4 + $0xef] sm:$0xff]
      %v1829 = vld [vmem:[#allocation4 + $0x107] sm:$0xff]
      %v1830 = vld [vmem:[#allocation4 + $0x10f] sm:$0xff]
      %v1831 = vld [vmem:[#allocation4 + $0x127] sm:$0xff]
      %v1832 = vld [vmem:[#allocation4 + $0x12f] sm:$0xff]
      %v1833 = vld [vmem:[#allocation4 + $0x147] sm:$0xff]
      %v1834 = vld [vmem:[#allocation4 + $0x14f] sm:$0xff]
      %v1835 = vld [vmem:[#allocation4 + $0x167] sm:$0xff]
      %v1836 = vld [vmem:[#allocation4 + $0x16f] sm:$0xff]
      %v1837 = vld [vmem:[#allocation4 + $0x187] sm:$0xff]
      %v1838 = vld [vmem:[#allocation4 + $0x18f] sm:$0xff]
      %v1839 = vld [vmem:[#allocation4 + $0x1a7] sm:$0xff]
      %v1840 = vld [vmem:[#allocation4 + $0x1af] sm:$0xff]
      %v1841 = vld [vmem:[#allocation4 + $0x1c7] sm:$0xff]
      %v1842 = vld [vmem:[#allocation4 + $0x1cf] sm:$0xff]
      %v1843 = vld [vmem:[#allocation4 + $0x1e7] sm:$0xff]
      %v1844 = vld [vmem:[#allocation4 + $0x1ef] sm:$0xff]
      %v1845 = vld [vmem:[#allocation5 + $0x7] sm:$0xff]
      %v1846 = vld [vmem:[#allocation5 + $0xf] sm:$0xff]
      %v1847 = vld [vmem:[#allocation5 + $0x27] sm:$0xff]
      %v1848 = vld [vmem:[#allocation5 + $0x2f] sm:$0xff]
      %v1849 = vld [vmem:[#allocation5 + $0x47] sm:$0xff]
      %v1850 = vld [vmem:[#allocation5 + $0x4f] sm:$0xff]
      %v1851 = vld [vmem:[#allocation5 + $0x67] sm:$0xff]
      %v1852 = vld [vmem:[#allocation5 + $0x6f] sm:$0xff]
      %v1853 = vld [vmem:[#allocation5 + $0x87] sm:$0xff]
      %v1854 = vld [vmem:[#allocation5 + $0x8f] sm:$0xff]
      %v1855 = vld [vmem:[#allocation5 + $0xa7] sm:$0xff]
      %v1856 = vld [vmem:[#allocation5 + $0xaf] sm:$0xff]
      %v1857 = vld [vmem:[#allocation5 + $0xc7] sm:$0xff]
      %v1858 = vld [vmem:[#allocation5 + $0xcf] sm:$0xff]
      %v1859 = vld [vmem:[#allocation5 + $0xe7] sm:$0xff]
      %v1860 = vld [vmem:[#allocation5 + $0xef] sm:$0xff]
      %v1861 = vld [vmem:[#allocation5 + $0x107] sm:$0xff]
      %v1862 = vld [vmem:[#allocation5 + $0x10f] sm:$0xff]
      %v1863 = vld [vmem:[#allocation5 + $0x127] sm:$0xff]
      %v1864 = vld [vmem:[#allocation5 + $0x12f] sm:$0xff]
      %v1865 = vld [vmem:[#allocation5 + $0x147] sm:$0xff]
      %v1866 = vld [vmem:[#allocation5 + $0x14f] sm:$0xff]
      %v1867 = vld [vmem:[#allocation5 + $0x167] sm:$0xff]
      %v1868 = vld [vmem:[#allocation5 + $0x16f] sm:$0xff]
      %v1869 = vld [vmem:[#allocation5 + $0x187] sm:$0xff]
      %v1870 = vld [vmem:[#allocation5 + $0x18f] sm:$0xff]
      %v1871 = vld [vmem:[#allocation5 + $0x1a7] sm:$0xff]
      %v1872 = vld [vmem:[#allocation5 + $0x1af] sm:$0xff]
      %v1873 = vld [vmem:[#allocation5 + $0x1c7] sm:$0xff]
      %v1874 = vld [vmem:[#allocation5 + $0x1cf] sm:$0xff]
      %v1875 = vld [vmem:[#allocation5 + $0x1e7] sm:$0xff]
      %v1876 = vld [vmem:[#allocation5 + $0x1ef] sm:$0xff]
      %v1877 = vlaneseq
      %v1878 = vshrl.u32 %v1877, 7
      %v1879 = vsub.s32 0, %v1878
      %v1880 = vrot.slane %v1809, %v1879
      %v1881 = vmul.f32 %v1880, %v1813
      %v1882 = vmul.f32 %v1880, %v1814
      %v1883 = vmul.f32 %v1880, %v1815
      %v1884 = vmul.f32 %v1880, %v1816
      %v1885 = vmul.f32 %v1880, %v1817
      %v1886 = vmul.f32 %v1880, %v1818
      %v1887 = vmul.f32 %v1880, %v1819
      %v1888 = vmul.f32 %v1880, %v1820
      %v1889 = vmul.f32 %v1880, %v1821
      %v1890 = vmul.f32 %v1880, %v1822
      %v1891 = vmul.f32 %v1880, %v1823
      %v1892 = vmul.f32 %v1880, %v1824
      %v1893 = vmul.f32 %v1880, %v1825
      %v1894 = vmul.f32 %v1880, %v1826
      %v1895 = vmul.f32 %v1880, %v1827
      %v1896 = vmul.f32 %v1880, %v1828
      %v1897 = vmul.f32 %v1880, %v1829
      %v1898 = vmul.f32 %v1880, %v1830
      %v1899 = vmul.f32 %v1880, %v1831
      %v1900 = vmul.f32 %v1880, %v1832
      %v1901 = vmul.f32 %v1880, %v1833
      %v1902 = vmul.f32 %v1880, %v1834
      %v1903 = vmul.f32 %v1880, %v1835
      %v1904 = vmul.f32 %v1880, %v1836
      %v1905 = vmul.f32 %v1880, %v1837
      %v1906 = vmul.f32 %v1880, %v1838
      %v1907 = vmul.f32 %v1880, %v1839
      %v1908 = vmul.f32 %v1880, %v1840
      %v1909 = vmul.f32 %v1880, %v1841
      %v1910 = vmul.f32 %v1880, %v1842
      %v1911 = vmul.f32 %v1880, %v1843
      %v1912 = vmul.f32 %v1880, %v1844
      %v1913 = vadd.f32 %v1881, 0.0
      %v1914 = vadd.f32 %v1882, 0.0
      %v1915 = vadd.f32 %v1883, 0.0
      %v1916 = vadd.f32 %v1884, 0.0
      %v1917 = vadd.f32 %v1885, 0.0
      %v1918 = vadd.f32 %v1886, 0.0
      %v1919 = vadd.f32 %v1887, 0.0
      %v1920 = vadd.f32 %v1888, 0.0
      %v1921 = vadd.f32 %v1889, 0.0
      %v1922 = vadd.f32 %v1890, 0.0
      %v1923 = vadd.f32 %v1891, 0.0
      %v1924 = vadd.f32 %v1892, 0.0
      %v1925 = vadd.f32 %v1893, 0.0
      %v1926 = vadd.f32 %v1894, 0.0
      %v1927 = vadd.f32 %v1895, 0.0
      %v1928 = vadd.f32 %v1896, 0.0
      %v1929 = vadd.f32 %v1897, 0.0
      %v1930 = vadd.f32 %v1898, 0.0
      %v1931 = vadd.f32 %v1899, 0.0
      %v1932 = vadd.f32 %v1900, 0.0
      %v1933 = vadd.f32 %v1901, 0.0
      %v1934 = vadd.f32 %v1902, 0.0
      %v1935 = vadd.f32 %v1903, 0.0
      %v1936 = vadd.f32 %v1904, 0.0
      %v1937 = vadd.f32 %v1905, 0.0
      %v1938 = vadd.f32 %v1906, 0.0
      %v1939 = vadd.f32 %v1907, 0.0
      %v1940 = vadd.f32 %v1908, 0.0
      %v1941 = vadd.f32 %v1909, 0.0
      %v1942 = vadd.f32 %v1910, 0.0
      %v1943 = vadd.f32 %v1911, 0.0
      %v1944 = vadd.f32 %v1912, 0.0
      %v1945 = vlaneseq
      %v1946 = vshrl.u32 %v1945, 7
      %v1947 = vsub.s32 0, %v1946
      %v1948 = vrot.slane %v1811, %v1947
      %v1949 = vmul.f32 %v1948, %v1845
      %v1950 = vmul.f32 %v1948, %v1846
      %v1951 = vmul.f32 %v1948, %v1847
      %v1952 = vmul.f32 %v1948, %v1848
      %v1953 = vmul.f32 %v1948, %v1849
      %v1954 = vmul.f32 %v1948, %v1850
      %v1955 = vmul.f32 %v1948, %v1851
      %v1956 = vmul.f32 %v1948, %v1852
      %v1957 = vmul.f32 %v1948, %v1853
      %v1958 = vmul.f32 %v1948, %v1854
      %v1959 = vmul.f32 %v1948, %v1855
      %v1960 = vmul.f32 %v1948, %v1856
      %v1961 = vmul.f32 %v1948, %v1857
      %v1962 = vmul.f32 %v1948, %v1858
      %v1963 = vmul.f32 %v1948, %v1859
      %v1964 = vmul.f32 %v1948, %v1860
      %v1965 = vmul.f32 %v1948, %v1861
      %v1966 = vmul.f32 %v1948, %v1862
      %v1967 = vmul.f32 %v1948, %v1863
      %v1968 = vmul.f32 %v1948, %v1864
      %v1969 = vmul.f32 %v1948, %v1865
      %v1970 = vmul.f32 %v1948, %v1866
      %v1971 = vmul.f32 %v1948, %v1867
      %v1972 = vmul.f32 %v1948, %v1868
      %v1973 = vmul.f32 %v1948, %v1869
      %v1974 = vmul.f32 %v1948, %v1870
      %v1975 = vmul.f32 %v1948, %v1871
      %v1976 = vmul.f32 %v1948, %v1872
      %v1977 = vmul.f32 %v1948, %v1873
      %v1978 = vmul.f32 %v1948, %v1874
      %v1979 = vmul.f32 %v1948, %v1875
      %v1980 = vmul.f32 %v1948, %v1876
      %v1981 = vadd.f32 %v1949, 0.0
      %v1982 = vadd.f32 %v1950, 0.0
      %v1983 = vadd.f32 %v1951, 0.0
      %v1984 = vadd.f32 %v1952, 0.0
      %v1985 = vadd.f32 %v1953, 0.0
      %v1986 = vadd.f32 %v1954, 0.0
      %v1987 = vadd.f32 %v1955, 0.0
      %v1988 = vadd.f32 %v1956, 0.0
      %v1989 = vadd.f32 %v1957, 0.0
      %v1990 = vadd.f32 %v1958, 0.0
      %v1991 = vadd.f32 %v1959, 0.0
      %v1992 = vadd.f32 %v1960, 0.0
      %v1993 = vadd.f32 %v1961, 0.0
      %v1994 = vadd.f32 %v1962, 0.0
      %v1995 = vadd.f32 %v1963, 0.0
      %v1996 = vadd.f32 %v1964, 0.0
      %v1997 = vadd.f32 %v1965, 0.0
      %v1998 = vadd.f32 %v1966, 0.0
      %v1999 = vadd.f32 %v1967, 0.0
      %v2000 = vadd.f32 %v1968, 0.0
      %v2001 = vadd.f32 %v1969, 0.0
      %v2002 = vadd.f32 %v1970, 0.0
      %v2003 = vadd.f32 %v1971, 0.0
      %v2004 = vadd.f32 %v1972, 0.0
      %v2005 = vadd.f32 %v1973, 0.0
      %v2006 = vadd.f32 %v1974, 0.0
      %v2007 = vadd.f32 %v1975, 0.0
      %v2008 = vadd.f32 %v1976, 0.0
      %v2009 = vadd.f32 %v1977, 0.0
      %v2010 = vadd.f32 %v1978, 0.0
      %v2011 = vadd.f32 %v1979, 0.0
      %v2012 = vadd.f32 %v1980, 0.0
      %v2013 = vld [vmem:[#allocation4 + $0x8] sm:$0xff]
      %v2014 = vld [vmem:[#allocation4 + $0x10] sm:$0xff]
      %v2015 = vld [vmem:[#allocation4 + $0x28] sm:$0xff]
      %v2016 = vld [vmem:[#allocation4 + $0x30] sm:$0xff]
      %v2017 = vld [vmem:[#allocation4 + $0x48] sm:$0xff]
      %v2018 = vld [vmem:[#allocation4 + $0x50] sm:$0xff]
      %v2019 = vld [vmem:[#allocation4 + $0x68] sm:$0xff]
      %v2020 = vld [vmem:[#allocation4 + $0x70] sm:$0xff]
      %v2021 = vld [vmem:[#allocation4 + $0x88] sm:$0xff]
      %v2022 = vld [vmem:[#allocation4 + $0x90] sm:$0xff]
      %v2023 = vld [vmem:[#allocation4 + $0xa8] sm:$0xff]
      %v2024 = vld [vmem:[#allocation4 + $0xb0] sm:$0xff]
      %v2025 = vld [vmem:[#allocation4 + $0xc8] sm:$0xff]
      %v2026 = vld [vmem:[#allocation4 + $0xd0] sm:$0xff]
      %v2027 = vld [vmem:[#allocation4 + $0xe8] sm:$0xff]
      %v2028 = vld [vmem:[#allocation4 + $0xf0] sm:$0xff]
      %v2029 = vld [vmem:[#allocation4 + $0x108] sm:$0xff]
      %v2030 = vld [vmem:[#allocation4 + $0x110] sm:$0xff]
      %v2031 = vld [vmem:[#allocation4 + $0x128] sm:$0xff]
      %v2032 = vld [vmem:[#allocation4 + $0x130] sm:$0xff]
      %v2033 = vld [vmem:[#allocation4 + $0x148] sm:$0xff]
      %v2034 = vld [vmem:[#allocation4 + $0x150] sm:$0xff]
      %v2035 = vld [vmem:[#allocation4 + $0x168] sm:$0xff]
      %v2036 = vld [vmem:[#allocation4 + $0x170] sm:$0xff]
      %v2037 = vld [vmem:[#allocation4 + $0x188] sm:$0xff]
      %v2038 = vld [vmem:[#allocation4 + $0x190] sm:$0xff]
      %v2039 = vld [vmem:[#allocation4 + $0x1a8] sm:$0xff]
      %v2040 = vld [vmem:[#allocation4 + $0x1b0] sm:$0xff]
      %v2041 = vld [vmem:[#allocation4 + $0x1c8] sm:$0xff]
      %v2042 = vld [vmem:[#allocation4 + $0x1d0] sm:$0xff]
      %v2043 = vld [vmem:[#allocation4 + $0x1e8] sm:$0xff]
      %v2044 = vld [vmem:[#allocation4 + $0x1f0] sm:$0xff]
      %v2045 = vld [vmem:[#allocation5 + $0x8] sm:$0xff]
      %v2046 = vld [vmem:[#allocation5 + $0x10] sm:$0xff]
      %v2047 = vld [vmem:[#allocation5 + $0x28] sm:$0xff]
      %v2048 = vld [vmem:[#allocation5 + $0x30] sm:$0xff]
      %v2049 = vld [vmem:[#allocation5 + $0x48] sm:$0xff]
      %v2050 = vld [vmem:[#allocation5 + $0x50] sm:$0xff]
      %v2051 = vld [vmem:[#allocation5 + $0x68] sm:$0xff]
      %v2052 = vld [vmem:[#allocation5 + $0x70] sm:$0xff]
      %v2053 = vld [vmem:[#allocation5 + $0x88] sm:$0xff]
      %v2054 = vld [vmem:[#allocation5 + $0x90] sm:$0xff]
      %v2055 = vld [vmem:[#allocation5 + $0xa8] sm:$0xff]
      %v2056 = vld [vmem:[#allocation5 + $0xb0] sm:$0xff]
      %v2057 = vld [vmem:[#allocation5 + $0xc8] sm:$0xff]
      %v2058 = vld [vmem:[#allocation5 + $0xd0] sm:$0xff]
      %v2059 = vld [vmem:[#allocation5 + $0xe8] sm:$0xff]
      %v2060 = vld [vmem:[#allocation5 + $0xf0] sm:$0xff]
      %v2061 = vld [vmem:[#allocation5 + $0x108] sm:$0xff]
      %v2062 = vld [vmem:[#allocation5 + $0x110] sm:$0xff]
      %v2063 = vld [vmem:[#allocation5 + $0x128] sm:$0xff]
      %v2064 = vld [vmem:[#allocation5 + $0x130] sm:$0xff]
      %v2065 = vld [vmem:[#allocation5 + $0x148] sm:$0xff]
      %v2066 = vld [vmem:[#allocation5 + $0x150] sm:$0xff]
      %v2067 = vld [vmem:[#allocation5 + $0x168] sm:$0xff]
      %v2068 = vld [vmem:[#allocation5 + $0x170] sm:$0xff]
      %v2069 = vld [vmem:[#allocation5 + $0x188] sm:$0xff]
      %v2070 = vld [vmem:[#allocation5 + $0x190] sm:$0xff]
      %v2071 = vld [vmem:[#allocation5 + $0x1a8] sm:$0xff]
      %v2072 = vld [vmem:[#allocation5 + $0x1b0] sm:$0xff]
      %v2073 = vld [vmem:[#allocation5 + $0x1c8] sm:$0xff]
      %v2074 = vld [vmem:[#allocation5 + $0x1d0] sm:$0xff]
      %v2075 = vld [vmem:[#allocation5 + $0x1e8] sm:$0xff]
      %v2076 = vld [vmem:[#allocation5 + $0x1f0] sm:$0xff]
      %v2077 = vlaneseq
      %v2078 = vshrl.u32 %v2077, 7
      %v2079 = vsub.s32 1, %v2078
      %v2080 = vrot.slane %v1809, %v2079
      %v2081 = vmul.f32 %v2080, %v2013
      %v2082 = vmul.f32 %v2080, %v2014
      %v2083 = vmul.f32 %v2080, %v2015
      %v2084 = vmul.f32 %v2080, %v2016
      %v2085 = vmul.f32 %v2080, %v2017
      %v2086 = vmul.f32 %v2080, %v2018
      %v2087 = vmul.f32 %v2080, %v2019
      %v2088 = vmul.f32 %v2080, %v2020
      %v2089 = vmul.f32 %v2080, %v2021
      %v2090 = vmul.f32 %v2080, %v2022
      %v2091 = vmul.f32 %v2080, %v2023
      %v2092 = vmul.f32 %v2080, %v2024
      %v2093 = vmul.f32 %v2080, %v2025
      %v2094 = vmul.f32 %v2080, %v2026
      %v2095 = vmul.f32 %v2080, %v2027
      %v2096 = vmul.f32 %v2080, %v2028
      %v2097 = vmul.f32 %v2080, %v2029
      %v2098 = vmul.f32 %v2080, %v2030
      %v2099 = vmul.f32 %v2080, %v2031
      %v2100 = vmul.f32 %v2080, %v2032
      %v2101 = vmul.f32 %v2080, %v2033
      %v2102 = vmul.f32 %v2080, %v2034
      %v2103 = vmul.f32 %v2080, %v2035
      %v2104 = vmul.f32 %v2080, %v2036
      %v2105 = vmul.f32 %v2080, %v2037
      %v2106 = vmul.f32 %v2080, %v2038
      %v2107 = vmul.f32 %v2080, %v2039
      %v2108 = vmul.f32 %v2080, %v2040
      %v2109 = vmul.f32 %v2080, %v2041
      %v2110 = vmul.f32 %v2080, %v2042
      %v2111 = vmul.f32 %v2080, %v2043
      %v2112 = vmul.f32 %v2080, %v2044
      %v2113 = vadd.f32 %v1913, %v2081
      %v2114 = vadd.f32 %v1914, %v2082
      %v2115 = vadd.f32 %v1915, %v2083
      %v2116 = vadd.f32 %v1916, %v2084
      %v2117 = vadd.f32 %v1917, %v2085
      %v2118 = vadd.f32 %v1918, %v2086
      %v2119 = vadd.f32 %v1919, %v2087
      %v2120 = vadd.f32 %v1920, %v2088
      %v2121 = vadd.f32 %v1921, %v2089
      %v2122 = vadd.f32 %v1922, %v2090
      %v2123 = vadd.f32 %v1923, %v2091
      %v2124 = vadd.f32 %v1924, %v2092
      %v2125 = vadd.f32 %v1925, %v2093
      %v2126 = vadd.f32 %v1926, %v2094
      %v2127 = vadd.f32 %v1927, %v2095
      %v2128 = vadd.f32 %v1928, %v2096
      %v2129 = vadd.f32 %v1929, %v2097
      %v2130 = vadd.f32 %v1930, %v2098
      %v2131 = vadd.f32 %v1931, %v2099
      %v2132 = vadd.f32 %v1932, %v2100
      %v2133 = vadd.f32 %v1933, %v2101
      %v2134 = vadd.f32 %v1934, %v2102
      %v2135 = vadd.f32 %v1935, %v2103
      %v2136 = vadd.f32 %v1936, %v2104
      %v2137 = vadd.f32 %v1937, %v2105
      %v2138 = vadd.f32 %v1938, %v2106
      %v2139 = vadd.f32 %v1939, %v2107
      %v2140 = vadd.f32 %v1940, %v2108
      %v2141 = vadd.f32 %v1941, %v2109
      %v2142 = vadd.f32 %v1942, %v2110
      %v2143 = vadd.f32 %v1943, %v2111
      %v2144 = vadd.f32 %v1944, %v2112
      %v2145 = vlaneseq
      %v2146 = vshrl.u32 %v2145, 7
      %v2147 = vsub.s32 1, %v2146
      %v2148 = vrot.slane %v1811, %v2147
      %v2149 = vmul.f32 %v2148, %v2045
      %v2150 = vmul.f32 %v2148, %v2046
      %v2151 = vmul.f32 %v2148, %v2047
      %v2152 = vmul.f32 %v2148, %v2048
      %v2153 = vmul.f32 %v2148, %v2049
      %v2154 = vmul.f32 %v2148, %v2050
      %v2155 = vmul.f32 %v2148, %v2051
      %v2156 = vmul.f32 %v2148, %v2052
      %v2157 = vmul.f32 %v2148, %v2053
      %v2158 = vmul.f32 %v2148, %v2054
      %v2159 = vmul.f32 %v2148, %v2055
      %v2160 = vmul.f32 %v2148, %v2056
      %v2161 = vmul.f32 %v2148, %v2057
      %v2162 = vmul.f32 %v2148, %v2058
      %v2163 = vmul.f32 %v2148, %v2059
      %v2164 = vmul.f32 %v2148, %v2060
      %v2165 = vmul.f32 %v2148, %v2061
      %v2166 = vmul.f32 %v2148, %v2062
      %v2167 = vmul.f32 %v2148, %v2063
      %v2168 = vmul.f32 %v2148, %v2064
      %v2169 = vmul.f32 %v2148, %v2065
      %v2170 = vmul.f32 %v2148, %v2066
      %v2171 = vmul.f32 %v2148, %v2067
      %v2172 = vmul.f32 %v2148, %v2068
      %v2173 = vmul.f32 %v2148, %v2069
      %v2174 = vmul.f32 %v2148, %v2070
      %v2175 = vmul.f32 %v2148, %v2071
      %v2176 = vmul.f32 %v2148, %v2072
      %v2177 = vmul.f32 %v2148, %v2073
      %v2178 = vmul.f32 %v2148, %v2074
      %v2179 = vmul.f32 %v2148, %v2075
      %v2180 = vmul.f32 %v2148, %v2076
      %v2181 = vadd.f32 %v1981, %v2149
      %v2182 = vadd.f32 %v1982, %v2150
      %v2183 = vadd.f32 %v1983, %v2151
      %v2184 = vadd.f32 %v1984, %v2152
      %v2185 = vadd.f32 %v1985, %v2153
      %v2186 = vadd.f32 %v1986, %v2154
      %v2187 = vadd.f32 %v1987, %v2155
      %v2188 = vadd.f32 %v1988, %v2156
      %v2189 = vadd.f32 %v1989, %v2157
      %v2190 = vadd.f32 %v1990, %v2158
      %v2191 = vadd.f32 %v1991, %v2159
      %v2192 = vadd.f32 %v1992, %v2160
      %v2193 = vadd.f32 %v1993, %v2161
      %v2194 = vadd.f32 %v1994, %v2162
      %v2195 = vadd.f32 %v1995, %v2163
      %v2196 = vadd.f32 %v1996, %v2164
      %v2197 = vadd.f32 %v1997, %v2165
      %v2198 = vadd.f32 %v1998, %v2166
      %v2199 = vadd.f32 %v1999, %v2167
      %v2200 = vadd.f32 %v2000, %v2168
      %v2201 = vadd.f32 %v2001, %v2169
      %v2202 = vadd.f32 %v2002, %v2170
      %v2203 = vadd.f32 %v2003, %v2171
      %v2204 = vadd.f32 %v2004, %v2172
      %v2205 = vadd.f32 %v2005, %v2173
      %v2206 = vadd.f32 %v2006, %v2174
      %v2207 = vadd.f32 %v2007, %v2175
      %v2208 = vadd.f32 %v2008, %v2176
      %v2209 = vadd.f32 %v2009, %v2177
      %v2210 = vadd.f32 %v2010, %v2178
      %v2211 = vadd.f32 %v2011, %v2179
      %v2212 = vadd.f32 %v2012, %v2180
      %v2213 = vld [vmem:[#allocation4 + $0x9] sm:$0xff]
      %v2214 = vld [vmem:[#allocation4 + $0x11] sm:$0xff]
      %v2215 = vld [vmem:[#allocation4 + $0x29] sm:$0xff]
      %v2216 = vld [vmem:[#allocation4 + $0x31] sm:$0xff]
      %v2217 = vld [vmem:[#allocation4 + $0x49] sm:$0xff]
      %v2218 = vld [vmem:[#allocation4 + $0x51] sm:$0xff]
      %v2219 = vld [vmem:[#allocation4 + $0x69] sm:$0xff]
      %v2220 = vld [vmem:[#allocation4 + $0x71] sm:$0xff]
      %v2221 = vld [vmem:[#allocation4 + $0x89] sm:$0xff]
      %v2222 = vld [vmem:[#allocation4 + $0x91] sm:$0xff]
      %v2223 = vld [vmem:[#allocation4 + $0xa9] sm:$0xff]
      %v2224 = vld [vmem:[#allocation4 + $0xb1] sm:$0xff]
      %v2225 = vld [vmem:[#allocation4 + $0xc9] sm:$0xff]
      %v2226 = vld [vmem:[#allocation4 + $0xd1] sm:$0xff]
      %v2227 = vld [vmem:[#allocation4 + $0xe9] sm:$0xff]
      %v2228 = vld [vmem:[#allocation4 + $0xf1] sm:$0xff]
      %v2229 = vld [vmem:[#allocation4 + $0x109] sm:$0xff]
      %v2230 = vld [vmem:[#allocation4 + $0x111] sm:$0xff]
      %v2231 = vld [vmem:[#allocation4 + $0x129] sm:$0xff]
      %v2232 = vld [vmem:[#allocation4 + $0x131] sm:$0xff]
      %v2233 = vld [vmem:[#allocation4 + $0x149] sm:$0xff]
      %v2234 = vld [vmem:[#allocation4 + $0x151] sm:$0xff]
      %v2235 = vld [vmem:[#allocation4 + $0x169] sm:$0xff]
      %v2236 = vld [vmem:[#allocation4 + $0x171] sm:$0xff]
      %v2237 = vld [vmem:[#allocation4 + $0x189] sm:$0xff]
      %v2238 = vld [vmem:[#allocation4 + $0x191] sm:$0xff]
      %v2239 = vld [vmem:[#allocation4 + $0x1a9] sm:$0xff]
      %v2240 = vld [vmem:[#allocation4 + $0x1b1] sm:$0xff]
      %v2241 = vld [vmem:[#allocation4 + $0x1c9] sm:$0xff]
      %v2242 = vld [vmem:[#allocation4 + $0x1d1] sm:$0xff]
      %v2243 = vld [vmem:[#allocation4 + $0x1e9] sm:$0xff]
      %v2244 = vld [vmem:[#allocation4 + $0x1f1] sm:$0xff]
      %v2245 = vld [vmem:[#allocation5 + $0x9] sm:$0xff]
      %v2246 = vld [vmem:[#allocation5 + $0x11] sm:$0xff]
      %v2247 = vld [vmem:[#allocation5 + $0x29] sm:$0xff]
      %v2248 = vld [vmem:[#allocation5 + $0x31] sm:$0xff]
      %v2249 = vld [vmem:[#allocation5 + $0x49] sm:$0xff]
      %v2250 = vld [vmem:[#allocation5 + $0x51] sm:$0xff]
      %v2251 = vld [vmem:[#allocation5 + $0x69] sm:$0xff]
      %v2252 = vld [vmem:[#allocation5 + $0x71] sm:$0xff]
      %v2253 = vld [vmem:[#allocation5 + $0x89] sm:$0xff]
      %v2254 = vld [vmem:[#allocation5 + $0x91] sm:$0xff]
      %v2255 = vld [vmem:[#allocation5 + $0xa9] sm:$0xff]
      %v2256 = vld [vmem:[#allocation5 + $0xb1] sm:$0xff]
      %v2257 = vld [vmem:[#allocation5 + $0xc9] sm:$0xff]
      %v2258 = vld [vmem:[#allocation5 + $0xd1] sm:$0xff]
      %v2259 = vld [vmem:[#allocation5 + $0xe9] sm:$0xff]
      %v2260 = vld [vmem:[#allocation5 + $0xf1] sm:$0xff]
      %v2261 = vld [vmem:[#allocation5 + $0x109] sm:$0xff]
      %v2262 = vld [vmem:[#allocation5 + $0x111] sm:$0xff]
      %v2263 = vld [vmem:[#allocation5 + $0x129] sm:$0xff]
      %v2264 = vld [vmem:[#allocation5 + $0x131] sm:$0xff]
      %v2265 = vld [vmem:[#allocation5 + $0x149] sm:$0xff]
      %v2266 = vld [vmem:[#allocation5 + $0x151] sm:$0xff]
      %v2267 = vld [vmem:[#allocation5 + $0x169] sm:$0xff]
      %v2268 = vld [vmem:[#allocation5 + $0x171] sm:$0xff]
      %v2269 = vld [vmem:[#allocation5 + $0x189] sm:$0xff]
      %v2270 = vld [vmem:[#allocation5 + $0x191] sm:$0xff]
      %v2271 = vld [vmem:[#allocation5 + $0x1a9] sm:$0xff]
      %v2272 = vld [vmem:[#allocation5 + $0x1b1] sm:$0xff]
      %v2273 = vld [vmem:[#allocation5 + $0x1c9] sm:$0xff]
      %v2274 = vld [vmem:[#allocation5 + $0x1d1] sm:$0xff]
      %v2275 = vld [vmem:[#allocation5 + $0x1e9] sm:$0xff]
      %v2276 = vld [vmem:[#allocation5 + $0x1f1] sm:$0xff]
      %v2277 = vlaneseq
      %v2278 = vshrl.u32 %v2277, 7
      %v2279 = vsub.s32 2, %v2278
      %v2280 = vrot.slane %v1809, %v2279
      %v2281 = vmul.f32 %v2280, %v2213
      %v2282 = vmul.f32 %v2280, %v2214
      %v2283 = vmul.f32 %v2280, %v2215
      %v2284 = vmul.f32 %v2280, %v2216
      %v2285 = vmul.f32 %v2280, %v2217
      %v2286 = vmul.f32 %v2280, %v2218
      %v2287 = vmul.f32 %v2280, %v2219
      %v2288 = vmul.f32 %v2280, %v2220
      %v2289 = vmul.f32 %v2280, %v2221
      %v2290 = vmul.f32 %v2280, %v2222
      %v2291 = vmul.f32 %v2280, %v2223
      %v2292 = vmul.f32 %v2280, %v2224
      %v2293 = vmul.f32 %v2280, %v2225
      %v2294 = vmul.f32 %v2280, %v2226
      %v2295 = vmul.f32 %v2280, %v2227
      %v2296 = vmul.f32 %v2280, %v2228
      %v2297 = vmul.f32 %v2280, %v2229
      %v2298 = vmul.f32 %v2280, %v2230
      %v2299 = vmul.f32 %v2280, %v2231
      %v2300 = vmul.f32 %v2280, %v2232
      %v2301 = vmul.f32 %v2280, %v2233
      %v2302 = vmul.f32 %v2280, %v2234
      %v2303 = vmul.f32 %v2280, %v2235
      %v2304 = vmul.f32 %v2280, %v2236
      %v2305 = vmul.f32 %v2280, %v2237
      %v2306 = vmul.f32 %v2280, %v2238
      %v2307 = vmul.f32 %v2280, %v2239
      %v2308 = vmul.f32 %v2280, %v2240
      %v2309 = vmul.f32 %v2280, %v2241
      %v2310 = vmul.f32 %v2280, %v2242
      %v2311 = vmul.f32 %v2280, %v2243
      %v2312 = vmul.f32 %v2280, %v2244
      %v2313 = vadd.f32 %v2113, %v2281
      %v2314 = vadd.f32 %v2114, %v2282
      %v2315 = vadd.f32 %v2115, %v2283
      %v2316 = vadd.f32 %v2116, %v2284
      %v2317 = vadd.f32 %v2117, %v2285
      %v2318 = vadd.f32 %v2118, %v2286
      %v2319 = vadd.f32 %v2119, %v2287
      %v2320 = vadd.f32 %v2120, %v2288
      %v2321 = vadd.f32 %v2121, %v2289
      %v2322 = vadd.f32 %v2122, %v2290
      %v2323 = vadd.f32 %v2123, %v2291
      %v2324 = vadd.f32 %v2124, %v2292
      %v2325 = vadd.f32 %v2125, %v2293
      %v2326 = vadd.f32 %v2126, %v2294
      %v2327 = vadd.f32 %v2127, %v2295
      %v2328 = vadd.f32 %v2128, %v2296
      %v2329 = vadd.f32 %v2129, %v2297
      %v2330 = vadd.f32 %v2130, %v2298
      %v2331 = vadd.f32 %v2131, %v2299
      %v2332 = vadd.f32 %v2132, %v2300
      %v2333 = vadd.f32 %v2133, %v2301
      %v2334 = vadd.f32 %v2134, %v2302
      %v2335 = vadd.f32 %v2135, %v2303
      %v2336 = vadd.f32 %v2136, %v2304
      %v2337 = vadd.f32 %v2137, %v2305
      %v2338 = vadd.f32 %v2138, %v2306
      %v2339 = vadd.f32 %v2139, %v2307
      %v2340 = vadd.f32 %v2140, %v2308
      %v2341 = vadd.f32 %v2141, %v2309
      %v2342 = vadd.f32 %v2142, %v2310
      %v2343 = vadd.f32 %v2143, %v2311
      %v2344 = vadd.f32 %v2144, %v2312
      %v2345 = vlaneseq
      %v2346 = vshrl.u32 %v2345, 7
      %v2347 = vsub.s32 2, %v2346
      %v2348 = vrot.slane %v1811, %v2347
      %v2349 = vmul.f32 %v2348, %v2245
      %v2350 = vmul.f32 %v2348, %v2246
      %v2351 = vmul.f32 %v2348, %v2247
      %v2352 = vmul.f32 %v2348, %v2248
      %v2353 = vmul.f32 %v2348, %v2249
      %v2354 = vmul.f32 %v2348, %v2250
      %v2355 = vmul.f32 %v2348, %v2251
      %v2356 = vmul.f32 %v2348, %v2252
      %v2357 = vmul.f32 %v2348, %v2253
      %v2358 = vmul.f32 %v2348, %v2254
      %v2359 = vmul.f32 %v2348, %v2255
      %v2360 = vmul.f32 %v2348, %v2256
      %v2361 = vmul.f32 %v2348, %v2257
      %v2362 = vmul.f32 %v2348, %v2258
      %v2363 = vmul.f32 %v2348, %v2259
      %v2364 = vmul.f32 %v2348, %v2260
      %v2365 = vmul.f32 %v2348, %v2261
      %v2366 = vmul.f32 %v2348, %v2262
      %v2367 = vmul.f32 %v2348, %v2263
      %v2368 = vmul.f32 %v2348, %v2264
      %v2369 = vmul.f32 %v2348, %v2265
      %v2370 = vmul.f32 %v2348, %v2266
      %v2371 = vmul.f32 %v2348, %v2267
      %v2372 = vmul.f32 %v2348, %v2268
      %v2373 = vmul.f32 %v2348, %v2269
      %v2374 = vmul.f32 %v2348, %v2270
      %v2375 = vmul.f32 %v2348, %v2271
      %v2376 = vmul.f32 %v2348, %v2272
      %v2377 = vmul.f32 %v2348, %v2273
      %v2378 = vmul.f32 %v2348, %v2274
      %v2379 = vmul.f32 %v2348, %v2275
      %v2380 = vmul.f32 %v2348, %v2276
      %v2381 = vadd.f32 %v2181, %v2349
      %v2382 = vadd.f32 %v2182, %v2350
      %v2383 = vadd.f32 %v2183, %v2351
      %v2384 = vadd.f32 %v2184, %v2352
      %v2385 = vadd.f32 %v2185, %v2353
      %v2386 = vadd.f32 %v2186, %v2354
      %v2387 = vadd.f32 %v2187, %v2355
      %v2388 = vadd.f32 %v2188, %v2356
      %v2389 = vadd.f32 %v2189, %v2357
      %v2390 = vadd.f32 %v2190, %v2358
      %v2391 = vadd.f32 %v2191, %v2359
      %v2392 = vadd.f32 %v2192, %v2360
      %v2393 = vadd.f32 %v2193, %v2361
      %v2394 = vadd.f32 %v2194, %v2362
      %v2395 = vadd.f32 %v2195, %v2363
      %v2396 = vadd.f32 %v2196, %v2364
      %v2397 = vadd.f32 %v2197, %v2365
      %v2398 = vadd.f32 %v2198, %v2366
      %v2399 = vadd.f32 %v2199, %v2367
      %v2400 = vadd.f32 %v2200, %v2368
      %v2401 = vadd.f32 %v2201, %v2369
      %v2402 = vadd.f32 %v2202, %v2370
      %v2403 = vadd.f32 %v2203, %v2371
      %v2404 = vadd.f32 %v2204, %v2372
      %v2405 = vadd.f32 %v2205, %v2373
      %v2406 = vadd.f32 %v2206, %v2374
      %v2407 = vadd.f32 %v2207, %v2375
      %v2408 = vadd.f32 %v2208, %v2376
      %v2409 = vadd.f32 %v2209, %v2377
      %v2410 = vadd.f32 %v2210, %v2378
      %v2411 = vadd.f32 %v2211, %v2379
      %v2412 = vadd.f32 %v2212, %v2380
      %v2413 = vld [vmem:[%s1743 + $0x7] sm:$0xff]
      %v2414 = vld [vmem:[%s1743 + $0xf] sm:$0xff]
      %v2415 = vld [vmem:[%s1743 + $0x27] sm:$0xff]
      %v2416 = vld [vmem:[%s1743 + $0x2f] sm:$0xff]
      %v2417 = vld [vmem:[%s1743 + $0x47] sm:$0xff]
      %v2418 = vld [vmem:[%s1743 + $0x4f] sm:$0xff]
      %v2419 = vld [vmem:[%s1743 + $0x67] sm:$0xff]
      %v2420 = vld [vmem:[%s1743 + $0x6f] sm:$0xff]
      %v2421 = vld [vmem:[%s1743 + $0x87] sm:$0xff]
      %v2422 = vld [vmem:[%s1743 + $0x8f] sm:$0xff]
      %v2423 = vld [vmem:[%s1743 + $0xa7] sm:$0xff]
      %v2424 = vld [vmem:[%s1743 + $0xaf] sm:$0xff]
      %v2425 = vld [vmem:[%s1743 + $0xc7] sm:$0xff]
      %v2426 = vld [vmem:[%s1743 + $0xcf] sm:$0xff]
      %v2427 = vld [vmem:[%s1743 + $0xe7] sm:$0xff]
      %v2428 = vld [vmem:[%s1743 + $0xef] sm:$0xff]
      %v2429 = vld [vmem:[%s1743 + $0x107] sm:$0xff]
      %v2430 = vld [vmem:[%s1743 + $0x10f] sm:$0xff]
      %v2431 = vld [vmem:[%s1743 + $0x127] sm:$0xff]
      %v2432 = vld [vmem:[%s1743 + $0x12f] sm:$0xff]
      %v2433 = vld [vmem:[%s1743 + $0x147] sm:$0xff]
      %v2434 = vld [vmem:[%s1743 + $0x14f] sm:$0xff]
      %v2435 = vld [vmem:[%s1743 + $0x167] sm:$0xff]
      %v2436 = vld [vmem:[%s1743 + $0x16f] sm:$0xff]
      %v2437 = vld [vmem:[%s1743 + $0x187] sm:$0xff]
      %v2438 = vld [vmem:[%s1743 + $0x18f] sm:$0xff]
      %v2439 = vld [vmem:[%s1743 + $0x1a7] sm:$0xff]
      %v2440 = vld [vmem:[%s1743 + $0x1af] sm:$0xff]
      %v2441 = vld [vmem:[%s1743 + $0x1c7] sm:$0xff]
      %v2442 = vld [vmem:[%s1743 + $0x1cf] sm:$0xff]
      %v2443 = vld [vmem:[%s1743 + $0x1e7] sm:$0xff]
      %v2444 = vld [vmem:[%s1743 + $0x1ef] sm:$0xff]
      %v2445 = vld [vmem:[%s1776 + $0x7] sm:$0xff]
      %v2446 = vld [vmem:[%s1776 + $0xf] sm:$0xff]
      %v2447 = vld [vmem:[%s1776 + $0x27] sm:$0xff]
      %v2448 = vld [vmem:[%s1776 + $0x2f] sm:$0xff]
      %v2449 = vld [vmem:[%s1776 + $0x47] sm:$0xff]
      %v2450 = vld [vmem:[%s1776 + $0x4f] sm:$0xff]
      %v2451 = vld [vmem:[%s1776 + $0x67] sm:$0xff]
      %v2452 = vld [vmem:[%s1776 + $0x6f] sm:$0xff]
      %v2453 = vld [vmem:[%s1776 + $0x87] sm:$0xff]
      %v2454 = vld [vmem:[%s1776 + $0x8f] sm:$0xff]
      %v2455 = vld [vmem:[%s1776 + $0xa7] sm:$0xff]
      %v2456 = vld [vmem:[%s1776 + $0xaf] sm:$0xff]
      %v2457 = vld [vmem:[%s1776 + $0xc7] sm:$0xff]
      %v2458 = vld [vmem:[%s1776 + $0xcf] sm:$0xff]
      %v2459 = vld [vmem:[%s1776 + $0xe7] sm:$0xff]
      %v2460 = vld [vmem:[%s1776 + $0xef] sm:$0xff]
      %v2461 = vld [vmem:[%s1776 + $0x107] sm:$0xff]
      %v2462 = vld [vmem:[%s1776 + $0x10f] sm:$0xff]
      %v2463 = vld [vmem:[%s1776 + $0x127] sm:$0xff]
      %v2464 = vld [vmem:[%s1776 + $0x12f] sm:$0xff]
      %v2465 = vld [vmem:[%s1776 + $0x147] sm:$0xff]
      %v2466 = vld [vmem:[%s1776 + $0x14f] sm:$0xff]
      %v2467 = vld [vmem:[%s1776 + $0x167] sm:$0xff]
      %v2468 = vld [vmem:[%s1776 + $0x16f] sm:$0xff]
      %v2469 = vld [vmem:[%s1776 + $0x187] sm:$0xff]
      %v2470 = vld [vmem:[%s1776 + $0x18f] sm:$0xff]
      %v2471 = vld [vmem:[%s1776 + $0x1a7] sm:$0xff]
      %v2472 = vld [vmem:[%s1776 + $0x1af] sm:$0xff]
      %v2473 = vld [vmem:[%s1776 + $0x1c7] sm:$0xff]
      %v2474 = vld [vmem:[%s1776 + $0x1cf] sm:$0xff]
      %v2475 = vld [vmem:[%s1776 + $0x1e7] sm:$0xff]
      %v2476 = vld [vmem:[%s1776 + $0x1ef] sm:$0xff]
      %v2477 = vlaneseq
      %v2478 = vshrl.u32 %v2477, 7
      %v2479 = vsub.s32 3, %v2478
      %v2480 = vrot.slane %v1809, %v2479
      %v2481 = vmul.f32 %v2480, %v2413
      %v2482 = vmul.f32 %v2480, %v2414
      %v2483 = vmul.f32 %v2480, %v2415
      %v2484 = vmul.f32 %v2480, %v2416
      %v2485 = vmul.f32 %v2480, %v2417
      %v2486 = vmul.f32 %v2480, %v2418
      %v2487 = vmul.f32 %v2480, %v2419
      %v2488 = vmul.f32 %v2480, %v2420
      %v2489 = vmul.f32 %v2480, %v2421
      %v2490 = vmul.f32 %v2480, %v2422
      %v2491 = vmul.f32 %v2480, %v2423
      %v2492 = vmul.f32 %v2480, %v2424
      %v2493 = vmul.f32 %v2480, %v2425
      %v2494 = vmul.f32 %v2480, %v2426
      %v2495 = vmul.f32 %v2480, %v2427
      %v2496 = vmul.f32 %v2480, %v2428
      %v2497 = vmul.f32 %v2480, %v2429
      %v2498 = vmul.f32 %v2480, %v2430
      %v2499 = vmul.f32 %v2480, %v2431
      %v2500 = vmul.f32 %v2480, %v2432
      %v2501 = vmul.f32 %v2480, %v2433
      %v2502 = vmul.f32 %v2480, %v2434
      %v2503 = vmul.f32 %v2480, %v2435
      %v2504 = vmul.f32 %v2480, %v2436
      %v2505 = vmul.f32 %v2480, %v2437
      %v2506 = vmul.f32 %v2480, %v2438
      %v2507 = vmul.f32 %v2480, %v2439
      %v2508 = vmul.f32 %v2480, %v2440
      %v2509 = vmul.f32 %v2480, %v2441
      %v2510 = vmul.f32 %v2480, %v2442
      %v2511 = vmul.f32 %v2480, %v2443
      %v2512 = vmul.f32 %v2480, %v2444
      %v2513 = vadd.f32 %v2313, %v2481
      %v2514 = vadd.f32 %v2314, %v2482
      %v2515 = vadd.f32 %v2315, %v2483
      %v2516 = vadd.f32 %v2316, %v2484
      %v2517 = vadd.f32 %v2317, %v2485
      %v2518 = vadd.f32 %v2318, %v2486
      %v2519 = vadd.f32 %v2319, %v2487
      %v2520 = vadd.f32 %v2320, %v2488
      %v2521 = vadd.f32 %v2321, %v2489
      %v2522 = vadd.f32 %v2322, %v2490
      %v2523 = vadd.f32 %v2323, %v2491
      %v2524 = vadd.f32 %v2324, %v2492
      %v2525 = vadd.f32 %v2325, %v2493
      %v2526 = vadd.f32 %v2326, %v2494
      %v2527 = vadd.f32 %v2327, %v2495
      %v2528 = vadd.f32 %v2328, %v2496
      %v2529 = vadd.f32 %v2329, %v2497
      %v2530 = vadd.f32 %v2330, %v2498
      %v2531 = vadd.f32 %v2331, %v2499
      %v2532 = vadd.f32 %v2332, %v2500
      %v2533 = vadd.f32 %v2333, %v2501
      %v2534 = vadd.f32 %v2334, %v2502
      %v2535 = vadd.f32 %v2335, %v2503
      %v2536 = vadd.f32 %v2336, %v2504
      %v2537 = vadd.f32 %v2337, %v2505
      %v2538 = vadd.f32 %v2338, %v2506
      %v2539 = vadd.f32 %v2339, %v2507
      %v2540 = vadd.f32 %v2340, %v2508
      %v2541 = vadd.f32 %v2341, %v2509
      %v2542 = vadd.f32 %v2342, %v2510
      %v2543 = vadd.f32 %v2343, %v2511
      %v2544 = vadd.f32 %v2344, %v2512
      %v2545 = vlaneseq
      %v2546 = vshrl.u32 %v2545, 7
      %v2547 = vsub.s32 3, %v2546
      %v2548 = vrot.slane %v1811, %v2547
      %v2549 = vmul.f32 %v2548, %v2445
      %v2550 = vmul.f32 %v2548, %v2446
      %v2551 = vmul.f32 %v2548, %v2447
      %v2552 = vmul.f32 %v2548, %v2448
      %v2553 = vmul.f32 %v2548, %v2449
      %v2554 = vmul.f32 %v2548, %v2450
      %v2555 = vmul.f32 %v2548, %v2451
      %v2556 = vmul.f32 %v2548, %v2452
      %v2557 = vmul.f32 %v2548, %v2453
      %v2558 = vmul.f32 %v2548, %v2454
      %v2559 = vmul.f32 %v2548, %v2455
      %v2560 = vmul.f32 %v2548, %v2456
      %v2561 = vmul.f32 %v2548, %v2457
      %v2562 = vmul.f32 %v2548, %v2458
      %v2563 = vmul.f32 %v2548, %v2459
      %v2564 = vmul.f32 %v2548, %v2460
      %v2565 = vmul.f32 %v2548, %v2461
      %v2566 = vmul.f32 %v2548, %v2462
      %v2567 = vmul.f32 %v2548, %v2463
      %v2568 = vmul.f32 %v2548, %v2464
      %v2569 = vmul.f32 %v2548, %v2465
      %v2570 = vmul.f32 %v2548, %v2466
      %v2571 = vmul.f32 %v2548, %v2467
      %v2572 = vmul.f32 %v2548, %v2468
      %v2573 = vmul.f32 %v2548, %v2469
      %v2574 = vmul.f32 %v2548, %v2470
      %v2575 = vmul.f32 %v2548, %v2471
      %v2576 = vmul.f32 %v2548, %v2472
      %v2577 = vmul.f32 %v2548, %v2473
      %v2578 = vmul.f32 %v2548, %v2474
      %v2579 = vmul.f32 %v2548, %v2475
      %v2580 = vmul.f32 %v2548, %v2476
      %v2581 = vadd.f32 %v2381, %v2549
      %v2582 = vadd.f32 %v2382, %v2550
      %v2583 = vadd.f32 %v2383, %v2551
      %v2584 = vadd.f32 %v2384, %v2552
      %v2585 = vadd.f32 %v2385, %v2553
      %v2586 = vadd.f32 %v2386, %v2554
      %v2587 = vadd.f32 %v2387, %v2555
      %v2588 = vadd.f32 %v2388, %v2556
      %v2589 = vadd.f32 %v2389, %v2557
      %v2590 = vadd.f32 %v2390, %v2558
      %v2591 = vadd.f32 %v2391, %v2559
      %v2592 = vadd.f32 %v2392, %v2560
      %v2593 = vadd.f32 %v2393, %v2561
      %v2594 = vadd.f32 %v2394, %v2562
      %v2595 = vadd.f32 %v2395, %v2563
      %v2596 = vadd.f32 %v2396, %v2564
      %v2597 = vadd.f32 %v2397, %v2565
      %v2598 = vadd.f32 %v2398, %v2566
      %v2599 = vadd.f32 %v2399, %v2567
      %v2600 = vadd.f32 %v2400, %v2568
      %v2601 = vadd.f32 %v2401, %v2569
      %v2602 = vadd.f32 %v2402, %v2570
      %v2603 = vadd.f32 %v2403, %v2571
      %v2604 = vadd.f32 %v2404, %v2572
      %v2605 = vadd.f32 %v2405, %v2573
      %v2606 = vadd.f32 %v2406, %v2574
      %v2607 = vadd.f32 %v2407, %v2575
      %v2608 = vadd.f32 %v2408, %v2576
      %v2609 = vadd.f32 %v2409, %v2577
      %v2610 = vadd.f32 %v2410, %v2578
      %v2611 = vadd.f32 %v2411, %v2579
      %v2612 = vadd.f32 %v2412, %v2580
      %v2613 = vld [vmem:[%s1743 + $0x8] sm:$0xff]
      %v2614 = vld [vmem:[%s1743 + $0x10] sm:$0xff]
      %v2615 = vld [vmem:[%s1743 + $0x28] sm:$0xff]
      %v2616 = vld [vmem:[%s1743 + $0x30] sm:$0xff]
      %v2617 = vld [vmem:[%s1743 + $0x48] sm:$0xff]
      %v2618 = vld [vmem:[%s1743 + $0x50] sm:$0xff]
      %v2619 = vld [vmem:[%s1743 + $0x68] sm:$0xff]
      %v2620 = vld [vmem:[%s1743 + $0x70] sm:$0xff]
      %v2621 = vld [vmem:[%s1743 + $0x88] sm:$0xff]
      %v2622 = vld [vmem:[%s1743 + $0x90] sm:$0xff]
      %v2623 = vld [vmem:[%s1743 + $0xa8] sm:$0xff]
      %v2624 = vld [vmem:[%s1743 + $0xb0] sm:$0xff]
      %v2625 = vld [vmem:[%s1743 + $0xc8] sm:$0xff]
      %v2626 = vld [vmem:[%s1743 + $0xd0] sm:$0xff]
      %v2627 = vld [vmem:[%s1743 + $0xe8] sm:$0xff]
      %v2628 = vld [vmem:[%s1743 + $0xf0] sm:$0xff]
      %v2629 = vld [vmem:[%s1743 + $0x108] sm:$0xff]
      %v2630 = vld [vmem:[%s1743 + $0x110] sm:$0xff]
      %v2631 = vld [vmem:[%s1743 + $0x128] sm:$0xff]
      %v2632 = vld [vmem:[%s1743 + $0x130] sm:$0xff]
      %v2633 = vld [vmem:[%s1743 + $0x148] sm:$0xff]
      %v2634 = vld [vmem:[%s1743 + $0x150] sm:$0xff]
      %v2635 = vld [vmem:[%s1743 + $0x168] sm:$0xff]
      %v2636 = vld [vmem:[%s1743 + $0x170] sm:$0xff]
      %v2637 = vld [vmem:[%s1743 + $0x188] sm:$0xff]
      %v2638 = vld [vmem:[%s1743 + $0x190] sm:$0xff]
      %v2639 = vld [vmem:[%s1743 + $0x1a8] sm:$0xff]
      %v2640 = vld [vmem:[%s1743 + $0x1b0] sm:$0xff]
      %v2641 = vld [vmem:[%s1743 + $0x1c8] sm:$0xff]
      %v2642 = vld [vmem:[%s1743 + $0x1d0] sm:$0xff]
      %v2643 = vld [vmem:[%s1743 + $0x1e8] sm:$0xff]
      %v2644 = vld [vmem:[%s1743 + $0x1f0] sm:$0xff]
      %v2645 = vld [vmem:[%s1776 + $0x8] sm:$0xff]
      %v2646 = vld [vmem:[%s1776 + $0x10] sm:$0xff]
      %v2647 = vld [vmem:[%s1776 + $0x28] sm:$0xff]
      %v2648 = vld [vmem:[%s1776 + $0x30] sm:$0xff]
      %v2649 = vld [vmem:[%s1776 + $0x48] sm:$0xff]
      %v2650 = vld [vmem:[%s1776 + $0x50] sm:$0xff]
      %v2651 = vld [vmem:[%s1776 + $0x68] sm:$0xff]
      %v2652 = vld [vmem:[%s1776 + $0x70] sm:$0xff]
      %v2653 = vld [vmem:[%s1776 + $0x88] sm:$0xff]
      %v2654 = vld [vmem:[%s1776 + $0x90] sm:$0xff]
      %v2655 = vld [vmem:[%s1776 + $0xa8] sm:$0xff]
      %v2656 = vld [vmem:[%s1776 + $0xb0] sm:$0xff]
      %v2657 = vld [vmem:[%s1776 + $0xc8] sm:$0xff]
      %v2658 = vld [vmem:[%s1776 + $0xd0] sm:$0xff]
      %v2659 = vld [vmem:[%s1776 + $0xe8] sm:$0xff]
      %v2660 = vld [vmem:[%s1776 + $0xf0] sm:$0xff]
      %v2661 = vld [vmem:[%s1776 + $0x108] sm:$0xff]
      %v2662 = vld [vmem:[%s1776 + $0x110] sm:$0xff]
      %v2663 = vld [vmem:[%s1776 + $0x128] sm:$0xff]
      %v2664 = vld [vmem:[%s1776 + $0x130] sm:$0xff]
      %v2665 = vld [vmem:[%s1776 + $0x148] sm:$0xff]
      %v2666 = vld [vmem:[%s1776 + $0x150] sm:$0xff]
      %v2667 = vld [vmem:[%s1776 + $0x168] sm:$0xff]
      %v2668 = vld [vmem:[%s1776 + $0x170] sm:$0xff]
      %v2669 = vld [vmem:[%s1776 + $0x188] sm:$0xff]
      %v2670 = vld [vmem:[%s1776 + $0x190] sm:$0xff]
      %v2671 = vld [vmem:[%s1776 + $0x1a8] sm:$0xff]
      %v2672 = vld [vmem:[%s1776 + $0x1b0] sm:$0xff]
      %v2673 = vld [vmem:[%s1776 + $0x1c8] sm:$0xff]
      %v2674 = vld [vmem:[%s1776 + $0x1d0] sm:$0xff]
      %v2675 = vld [vmem:[%s1776 + $0x1e8] sm:$0xff]
      %v2676 = vld [vmem:[%s1776 + $0x1f0] sm:$0xff]
      %v2677 = vlaneseq
      %v2678 = vshrl.u32 %v2677, 7
      %v2679 = vsub.s32 4, %v2678
      %v2680 = vrot.slane %v1809, %v2679
      %v2681 = vmul.f32 %v2680, %v2613
      %v2682 = vmul.f32 %v2680, %v2614
      %v2683 = vmul.f32 %v2680, %v2615
      %v2684 = vmul.f32 %v2680, %v2616
      %v2685 = vmul.f32 %v2680, %v2617
      %v2686 = vmul.f32 %v2680, %v2618
      %v2687 = vmul.f32 %v2680, %v2619
      %v2688 = vmul.f32 %v2680, %v2620
      %v2689 = vmul.f32 %v2680, %v2621
      %v2690 = vmul.f32 %v2680, %v2622
      %v2691 = vmul.f32 %v2680, %v2623
      %v2692 = vmul.f32 %v2680, %v2624
      %v2693 = vmul.f32 %v2680, %v2625
      %v2694 = vmul.f32 %v2680, %v2626
      %v2695 = vmul.f32 %v2680, %v2627
      %v2696 = vmul.f32 %v2680, %v2628
      %v2697 = vmul.f32 %v2680, %v2629
      %v2698 = vmul.f32 %v2680, %v2630
      %v2699 = vmul.f32 %v2680, %v2631
      %v2700 = vmul.f32 %v2680, %v2632
      %v2701 = vmul.f32 %v2680, %v2633
      %v2702 = vmul.f32 %v2680, %v2634
      %v2703 = vmul.f32 %v2680, %v2635
      %v2704 = vmul.f32 %v2680, %v2636
      %v2705 = vmul.f32 %v2680, %v2637
      %v2706 = vmul.f32 %v2680, %v2638
      %v2707 = vmul.f32 %v2680, %v2639
      %v2708 = vmul.f32 %v2680, %v2640
      %v2709 = vmul.f32 %v2680, %v2641
      %v2710 = vmul.f32 %v2680, %v2642
      %v2711 = vmul.f32 %v2680, %v2643
      %v2712 = vmul.f32 %v2680, %v2644
      %v2713 = vadd.f32 %v2513, %v2681
      %v2714 = vadd.f32 %v2514, %v2682
      %v2715 = vadd.f32 %v2515, %v2683
      %v2716 = vadd.f32 %v2516, %v2684
      %v2717 = vadd.f32 %v2517, %v2685
      %v2718 = vadd.f32 %v2518, %v2686
      %v2719 = vadd.f32 %v2519, %v2687
      %v2720 = vadd.f32 %v2520, %v2688
      %v2721 = vadd.f32 %v2521, %v2689
      %v2722 = vadd.f32 %v2522, %v2690
      %v2723 = vadd.f32 %v2523, %v2691
      %v2724 = vadd.f32 %v2524, %v2692
      %v2725 = vadd.f32 %v2525, %v2693
      %v2726 = vadd.f32 %v2526, %v2694
      %v2727 = vadd.f32 %v2527, %v2695
      %v2728 = vadd.f32 %v2528, %v2696
      %v2729 = vadd.f32 %v2529, %v2697
      %v2730 = vadd.f32 %v2530, %v2698
      %v2731 = vadd.f32 %v2531, %v2699
      %v2732 = vadd.f32 %v2532, %v2700
      %v2733 = vadd.f32 %v2533, %v2701
      %v2734 = vadd.f32 %v2534, %v2702
      %v2735 = vadd.f32 %v2535, %v2703
      %v2736 = vadd.f32 %v2536, %v2704
      %v2737 = vadd.f32 %v2537, %v2705
      %v2738 = vadd.f32 %v2538, %v2706
      %v2739 = vadd.f32 %v2539, %v2707
      %v2740 = vadd.f32 %v2540, %v2708
      %v2741 = vadd.f32 %v2541, %v2709
      %v2742 = vadd.f32 %v2542, %v2710
      %v2743 = vadd.f32 %v2543, %v2711
      %v2744 = vadd.f32 %v2544, %v2712
      %v2745 = vlaneseq
      %v2746 = vshrl.u32 %v2745, 7
      %v2747 = vsub.s32 4, %v2746
      %v2748 = vrot.slane %v1811, %v2747
      %v2749 = vmul.f32 %v2748, %v2645
      %v2750 = vmul.f32 %v2748, %v2646
      %v2751 = vmul.f32 %v2748, %v2647
      %v2752 = vmul.f32 %v2748, %v2648
      %v2753 = vmul.f32 %v2748, %v2649
      %v2754 = vmul.f32 %v2748, %v2650
      %v2755 = vmul.f32 %v2748, %v2651
      %v2756 = vmul.f32 %v2748, %v2652
      %v2757 = vmul.f32 %v2748, %v2653
      %v2758 = vmul.f32 %v2748, %v2654
      %v2759 = vmul.f32 %v2748, %v2655
      %v2760 = vmul.f32 %v2748, %v2656
      %v2761 = vmul.f32 %v2748, %v2657
      %v2762 = vmul.f32 %v2748, %v2658
      %v2763 = vmul.f32 %v2748, %v2659
      %v2764 = vmul.f32 %v2748, %v2660
      %v2765 = vmul.f32 %v2748, %v2661
      %v2766 = vmul.f32 %v2748, %v2662
      %v2767 = vmul.f32 %v2748, %v2663
      %v2768 = vmul.f32 %v2748, %v2664
      %v2769 = vmul.f32 %v2748, %v2665
      %v2770 = vmul.f32 %v2748, %v2666
      %v2771 = vmul.f32 %v2748, %v2667
      %v2772 = vmul.f32 %v2748, %v2668
      %v2773 = vmul.f32 %v2748, %v2669
      %v2774 = vmul.f32 %v2748, %v2670
      %v2775 = vmul.f32 %v2748, %v2671
      %v2776 = vmul.f32 %v2748, %v2672
      %v2777 = vmul.f32 %v2748, %v2673
      %v2778 = vmul.f32 %v2748, %v2674
      %v2779 = vmul.f32 %v2748, %v2675
      %v2780 = vmul.f32 %v2748, %v2676
      %v2781 = vadd.f32 %v2581, %v2749
      %v2782 = vadd.f32 %v2582, %v2750
      %v2783 = vadd.f32 %v2583, %v2751
      %v2784 = vadd.f32 %v2584, %v2752
      %v2785 = vadd.f32 %v2585, %v2753
      %v2786 = vadd.f32 %v2586, %v2754
      %v2787 = vadd.f32 %v2587, %v2755
      %v2788 = vadd.f32 %v2588, %v2756
      %v2789 = vadd.f32 %v2589, %v2757
      %v2790 = vadd.f32 %v2590, %v2758
      %v2791 = vadd.f32 %v2591, %v2759
      %v2792 = vadd.f32 %v2592, %v2760
      %v2793 = vadd.f32 %v2593, %v2761
      %v2794 = vadd.f32 %v2594, %v2762
      %v2795 = vadd.f32 %v2595, %v2763
      %v2796 = vadd.f32 %v2596, %v2764
      %v2797 = vadd.f32 %v2597, %v2765
      %v2798 = vadd.f32 %v2598, %v2766
      %v2799 = vadd.f32 %v2599, %v2767
      %v2800 = vadd.f32 %v2600, %v2768
      %v2801 = vadd.f32 %v2601, %v2769
      %v2802 = vadd.f32 %v2602, %v2770
      %v2803 = vadd.f32 %v2603, %v2771
      %v2804 = vadd.f32 %v2604, %v2772
      %v2805 = vadd.f32 %v2605, %v2773
      %v2806 = vadd.f32 %v2606, %v2774
      %v2807 = vadd.f32 %v2607, %v2775
      %v2808 = vadd.f32 %v2608, %v2776
      %v2809 = vadd.f32 %v2609, %v2777
      %v2810 = vadd.f32 %v2610, %v2778
      %v2811 = vadd.f32 %v2611, %v2779
      %v2812 = vadd.f32 %v2612, %v2780
      %v2813 = vld [vmem:[%s1743 + $0x9] sm:$0xff]
      %v2814 = vld [vmem:[%s1743 + $0x11] sm:$0xff]
      %v2815 = vld [vmem:[%s1743 + $0x29] sm:$0xff]
      %v2816 = vld [vmem:[%s1743 + $0x31] sm:$0xff]
      %v2817 = vld [vmem:[%s1743 + $0x49] sm:$0xff]
      %v2818 = vld [vmem:[%s1743 + $0x51] sm:$0xff]
      %v2819 = vld [vmem:[%s1743 + $0x69] sm:$0xff]
      %v2820 = vld [vmem:[%s1743 + $0x71] sm:$0xff]
      %v2821 = vld [vmem:[%s1743 + $0x89] sm:$0xff]
      %v2822 = vld [vmem:[%s1743 + $0x91] sm:$0xff]
      %v2823 = vld [vmem:[%s1743 + $0xa9] sm:$0xff]
      %v2824 = vld [vmem:[%s1743 + $0xb1] sm:$0xff]
      %v2825 = vld [vmem:[%s1743 + $0xc9] sm:$0xff]
      %v2826 = vld [vmem:[%s1743 + $0xd1] sm:$0xff]
      %v2827 = vld [vmem:[%s1743 + $0xe9] sm:$0xff]
      %v2828 = vld [vmem:[%s1743 + $0xf1] sm:$0xff]
      %v2829 = vld [vmem:[%s1743 + $0x109] sm:$0xff]
      %v2830 = vld [vmem:[%s1743 + $0x111] sm:$0xff]
      %v2831 = vld [vmem:[%s1743 + $0x129] sm:$0xff]
      %v2832 = vld [vmem:[%s1743 + $0x131] sm:$0xff]
      %v2833 = vld [vmem:[%s1743 + $0x149] sm:$0xff]
      %v2834 = vld [vmem:[%s1743 + $0x151] sm:$0xff]
      %v2835 = vld [vmem:[%s1743 + $0x169] sm:$0xff]
      %v2836 = vld [vmem:[%s1743 + $0x171] sm:$0xff]
      %v2837 = vld [vmem:[%s1743 + $0x189] sm:$0xff]
      %v2838 = vld [vmem:[%s1743 + $0x191] sm:$0xff]
      %v2839 = vld [vmem:[%s1743 + $0x1a9] sm:$0xff]
      %v2840 = vld [vmem:[%s1743 + $0x1b1] sm:$0xff]
      %v2841 = vld [vmem:[%s1743 + $0x1c9] sm:$0xff]
      %v2842 = vld [vmem:[%s1743 + $0x1d1] sm:$0xff]
      %v2843 = vld [vmem:[%s1743 + $0x1e9] sm:$0xff]
      %v2844 = vld [vmem:[%s1743 + $0x1f1] sm:$0xff]
      %v2845 = vld [vmem:[%s1776 + $0x9] sm:$0xff]
      %v2846 = vld [vmem:[%s1776 + $0x11] sm:$0xff]
      %v2847 = vld [vmem:[%s1776 + $0x29] sm:$0xff]
      %v2848 = vld [vmem:[%s1776 + $0x31] sm:$0xff]
      %v2849 = vld [vmem:[%s1776 + $0x49] sm:$0xff]
      %v2850 = vld [vmem:[%s1776 + $0x51] sm:$0xff]
      %v2851 = vld [vmem:[%s1776 + $0x69] sm:$0xff]
      %v2852 = vld [vmem:[%s1776 + $0x71] sm:$0xff]
      %v2853 = vld [vmem:[%s1776 + $0x89] sm:$0xff]
      %v2854 = vld [vmem:[%s1776 + $0x91] sm:$0xff]
      %v2855 = vld [vmem:[%s1776 + $0xa9] sm:$0xff]
      %v2856 = vld [vmem:[%s1776 + $0xb1] sm:$0xff]
      %v2857 = vld [vmem:[%s1776 + $0xc9] sm:$0xff]
      %v2858 = vld [vmem:[%s1776 + $0xd1] sm:$0xff]
      %v2859 = vld [vmem:[%s1776 + $0xe9] sm:$0xff]
      %v2860 = vld [vmem:[%s1776 + $0xf1] sm:$0xff]
      %v2861 = vld [vmem:[%s1776 + $0x109] sm:$0xff]
      %v2862 = vld [vmem:[%s1776 + $0x111] sm:$0xff]
      %v2863 = vld [vmem:[%s1776 + $0x129] sm:$0xff]
      %v2864 = vld [vmem:[%s1776 + $0x131] sm:$0xff]
      %v2865 = vld [vmem:[%s1776 + $0x149] sm:$0xff]
      %v2866 = vld [vmem:[%s1776 + $0x151] sm:$0xff]
      %v2867 = vld [vmem:[%s1776 + $0x169] sm:$0xff]
      %v2868 = vld [vmem:[%s1776 + $0x171] sm:$0xff]
      %v2869 = vld [vmem:[%s1776 + $0x189] sm:$0xff]
      %v2870 = vld [vmem:[%s1776 + $0x191] sm:$0xff]
      %v2871 = vld [vmem:[%s1776 + $0x1a9] sm:$0xff]
      %v2872 = vld [vmem:[%s1776 + $0x1b1] sm:$0xff]
      %v2873 = vld [vmem:[%s1776 + $0x1c9] sm:$0xff]
      %v2874 = vld [vmem:[%s1776 + $0x1d1] sm:$0xff]
      %v2875 = vld [vmem:[%s1776 + $0x1e9] sm:$0xff]
      %v2876 = vld [vmem:[%s1776 + $0x1f1] sm:$0xff]
      %v2877 = vlaneseq
      %v2878 = vshrl.u32 %v2877, 7
      %v2879 = vsub.s32 5, %v2878
      %v2880 = vrot.slane %v1809, %v2879
      %v2881 = vmul.f32 %v2880, %v2813
      %v2882 = vmul.f32 %v2880, %v2814
      %v2883 = vmul.f32 %v2880, %v2815
      %v2884 = vmul.f32 %v2880, %v2816
      %v2885 = vmul.f32 %v2880, %v2817
      %v2886 = vmul.f32 %v2880, %v2818
      %v2887 = vmul.f32 %v2880, %v2819
      %v2888 = vmul.f32 %v2880, %v2820
      %v2889 = vmul.f32 %v2880, %v2821
      %v2890 = vmul.f32 %v2880, %v2822
      %v2891 = vmul.f32 %v2880, %v2823
      %v2892 = vmul.f32 %v2880, %v2824
      %v2893 = vmul.f32 %v2880, %v2825
      %v2894 = vmul.f32 %v2880, %v2826
      %v2895 = vmul.f32 %v2880, %v2827
      %v2896 = vmul.f32 %v2880, %v2828
      %v2897 = vmul.f32 %v2880, %v2829
      %v2898 = vmul.f32 %v2880, %v2830
      %v2899 = vmul.f32 %v2880, %v2831
      %v2900 = vmul.f32 %v2880, %v2832
      %v2901 = vmul.f32 %v2880, %v2833
      %v2902 = vmul.f32 %v2880, %v2834
      %v2903 = vmul.f32 %v2880, %v2835
      %v2904 = vmul.f32 %v2880, %v2836
      %v2905 = vmul.f32 %v2880, %v2837
      %v2906 = vmul.f32 %v2880, %v2838
      %v2907 = vmul.f32 %v2880, %v2839
      %v2908 = vmul.f32 %v2880, %v2840
      %v2909 = vmul.f32 %v2880, %v2841
      %v2910 = vmul.f32 %v2880, %v2842
      %v2911 = vmul.f32 %v2880, %v2843
      %v2912 = vmul.f32 %v2880, %v2844
      %v2913 = vadd.f32 %v2713, %v2881
      %v2914 = vadd.f32 %v2714, %v2882
      %v2915 = vadd.f32 %v2715, %v2883
      %v2916 = vadd.f32 %v2716, %v2884
      %v2917 = vadd.f32 %v2717, %v2885
      %v2918 = vadd.f32 %v2718, %v2886
      %v2919 = vadd.f32 %v2719, %v2887
      %v2920 = vadd.f32 %v2720, %v2888
      %v2921 = vadd.f32 %v2721, %v2889
      %v2922 = vadd.f32 %v2722, %v2890
      %v2923 = vadd.f32 %v2723, %v2891
      %v2924 = vadd.f32 %v2724, %v2892
      %v2925 = vadd.f32 %v2725, %v2893
      %v2926 = vadd.f32 %v2726, %v2894
      %v2927 = vadd.f32 %v2727, %v2895
      %v2928 = vadd.f32 %v2728, %v2896
      %v2929 = vadd.f32 %v2729, %v2897
      %v2930 = vadd.f32 %v2730, %v2898
      %v2931 = vadd.f32 %v2731, %v2899
      %v2932 = vadd.f32 %v2732, %v2900
      %v2933 = vadd.f32 %v2733, %v2901
      %v2934 = vadd.f32 %v2734, %v2902
      %v2935 = vadd.f32 %v2735, %v2903
      %v2936 = vadd.f32 %v2736, %v2904
      %v2937 = vadd.f32 %v2737, %v2905
      %v2938 = vadd.f32 %v2738, %v2906
      %v2939 = vadd.f32 %v2739, %v2907
      %v2940 = vadd.f32 %v2740, %v2908
      %v2941 = vadd.f32 %v2741, %v2909
      %v2942 = vadd.f32 %v2742, %v2910
      %v2943 = vadd.f32 %v2743, %v2911
      %v2944 = vadd.f32 %v2744, %v2912
      %v2945 = vlaneseq
      %v2946 = vshrl.u32 %v2945, 7
      %v2947 = vsub.s32 5, %v2946
      %v2948 = vrot.slane %v1811, %v2947
      %v2949 = vmul.f32 %v2948, %v2845
      %v2950 = vmul.f32 %v2948, %v2846
      %v2951 = vmul.f32 %v2948, %v2847
      %v2952 = vmul.f32 %v2948, %v2848
      %v2953 = vmul.f32 %v2948, %v2849
      %v2954 = vmul.f32 %v2948, %v2850
      %v2955 = vmul.f32 %v2948, %v2851
      %v2956 = vmul.f32 %v2948, %v2852
      %v2957 = vmul.f32 %v2948, %v2853
      %v2958 = vmul.f32 %v2948, %v2854
      %v2959 = vmul.f32 %v2948, %v2855
      %v2960 = vmul.f32 %v2948, %v2856
      %v2961 = vmul.f32 %v2948, %v2857
      %v2962 = vmul.f32 %v2948, %v2858
      %v2963 = vmul.f32 %v2948, %v2859
      %v2964 = vmul.f32 %v2948, %v2860
      %v2965 = vmul.f32 %v2948, %v2861
      %v2966 = vmul.f32 %v2948, %v2862
      %v2967 = vmul.f32 %v2948, %v2863
      %v2968 = vmul.f32 %v2948, %v2864
      %v2969 = vmul.f32 %v2948, %v2865
      %v2970 = vmul.f32 %v2948, %v2866
      %v2971 = vmul.f32 %v2948, %v2867
      %v2972 = vmul.f32 %v2948, %v2868
      %v2973 = vmul.f32 %v2948, %v2869
      %v2974 = vmul.f32 %v2948, %v2870
      %v2975 = vmul.f32 %v2948, %v2871
      %v2976 = vmul.f32 %v2948, %v2872
      %v2977 = vmul.f32 %v2948, %v2873
      %v2978 = vmul.f32 %v2948, %v2874
      %v2979 = vmul.f32 %v2948, %v2875
      %v2980 = vmul.f32 %v2948, %v2876
      %v2981 = vadd.f32 %v2781, %v2949
      %v2982 = vadd.f32 %v2782, %v2950
      %v2983 = vadd.f32 %v2783, %v2951
      %v2984 = vadd.f32 %v2784, %v2952
      %v2985 = vadd.f32 %v2785, %v2953
      %v2986 = vadd.f32 %v2786, %v2954
      %v2987 = vadd.f32 %v2787, %v2955
      %v2988 = vadd.f32 %v2788, %v2956
      %v2989 = vadd.f32 %v2789, %v2957
      %v2990 = vadd.f32 %v2790, %v2958
      %v2991 = vadd.f32 %v2791, %v2959
      %v2992 = vadd.f32 %v2792, %v2960
      %v2993 = vadd.f32 %v2793, %v2961
      %v2994 = vadd.f32 %v2794, %v2962
      %v2995 = vadd.f32 %v2795, %v2963
      %v2996 = vadd.f32 %v2796, %v2964
      %v2997 = vadd.f32 %v2797, %v2965
      %v2998 = vadd.f32 %v2798, %v2966
      %v2999 = vadd.f32 %v2799, %v2967
      %v3000 = vadd.f32 %v2800, %v2968
      %v3001 = vadd.f32 %v2801, %v2969
      %v3002 = vadd.f32 %v2802, %v2970
      %v3003 = vadd.f32 %v2803, %v2971
      %v3004 = vadd.f32 %v2804, %v2972
      %v3005 = vadd.f32 %v2805, %v2973
      %v3006 = vadd.f32 %v2806, %v2974
      %v3007 = vadd.f32 %v2807, %v2975
      %v3008 = vadd.f32 %v2808, %v2976
      %v3009 = vadd.f32 %v2809, %v2977
      %v3010 = vadd.f32 %v2810, %v2978
      %v3011 = vadd.f32 %v2811, %v2979
      %v3012 = vadd.f32 %v2812, %v2980
      %s3013 = scalar_lea.vmem [#allocation4], 64
      %v3014 = vld [vmem:[%s3013 + $0x7] sm:$0xff]
      %v3015 = vld [vmem:[%s3013 + $0xf] sm:$0xff]
      %v3016 = vld [vmem:[%s3013 + $0x27] sm:$0xff]
      %v3017 = vld [vmem:[%s3013 + $0x2f] sm:$0xff]
      %v3018 = vld [vmem:[%s3013 + $0x47] sm:$0xff]
      %v3019 = vld [vmem:[%s3013 + $0x4f] sm:$0xff]
      %v3020 = vld [vmem:[%s3013 + $0x67] sm:$0xff]
      %v3021 = vld [vmem:[%s3013 + $0x6f] sm:$0xff]
      %v3022 = vld [vmem:[%s3013 + $0x87] sm:$0xff]
      %v3023 = vld [vmem:[%s3013 + $0x8f] sm:$0xff]
      %v3024 = vld [vmem:[%s3013 + $0xa7] sm:$0xff]
      %v3025 = vld [vmem:[%s3013 + $0xaf] sm:$0xff]
      %v3026 = vld [vmem:[%s3013 + $0xc7] sm:$0xff]
      %v3027 = vld [vmem:[%s3013 + $0xcf] sm:$0xff]
      %v3028 = vld [vmem:[%s3013 + $0xe7] sm:$0xff]
      %v3029 = vld [vmem:[%s3013 + $0xef] sm:$0xff]
      %v3030 = vld [vmem:[%s3013 + $0x107] sm:$0xff]
      %v3031 = vld [vmem:[%s3013 + $0x10f] sm:$0xff]
      %v3032 = vld [vmem:[%s3013 + $0x127] sm:$0xff]
      %v3033 = vld [vmem:[%s3013 + $0x12f] sm:$0xff]
      %v3034 = vld [vmem:[%s3013 + $0x147] sm:$0xff]
      %v3035 = vld [vmem:[%s3013 + $0x14f] sm:$0xff]
      %v3036 = vld [vmem:[%s3013 + $0x167] sm:$0xff]
      %v3037 = vld [vmem:[%s3013 + $0x16f] sm:$0xff]
      %v3038 = vld [vmem:[%s3013 + $0x187] sm:$0xff]
      %v3039 = vld [vmem:[%s3013 + $0x18f] sm:$0xff]
      %v3040 = vld [vmem:[%s3013 + $0x1a7] sm:$0xff]
      %v3041 = vld [vmem:[%s3013 + $0x1af] sm:$0xff]
      %v3042 = vld [vmem:[%s3013 + $0x1c7] sm:$0xff]
      %v3043 = vld [vmem:[%s3013 + $0x1cf] sm:$0xff]
      %v3044 = vld [vmem:[%s3013 + $0x1e7] sm:$0xff]
      %v3045 = vld [vmem:[%s3013 + $0x1ef] sm:$0xff]
      %s3046 = scalar_lea.vmem [#allocation5], 64
      %v3047 = vld [vmem:[%s3046 + $0x7] sm:$0xff]
      %v3048 = vld [vmem:[%s3046 + $0xf] sm:$0xff]
      %v3049 = vld [vmem:[%s3046 + $0x27] sm:$0xff]
      %v3050 = vld [vmem:[%s3046 + $0x2f] sm:$0xff]
      %v3051 = vld [vmem:[%s3046 + $0x47] sm:$0xff]
      %v3052 = vld [vmem:[%s3046 + $0x4f] sm:$0xff]
      %v3053 = vld [vmem:[%s3046 + $0x67] sm:$0xff]
      %v3054 = vld [vmem:[%s3046 + $0x6f] sm:$0xff]
      %v3055 = vld [vmem:[%s3046 + $0x87] sm:$0xff]
      %v3056 = vld [vmem:[%s3046 + $0x8f] sm:$0xff]
      %v3057 = vld [vmem:[%s3046 + $0xa7] sm:$0xff]
      %v3058 = vld [vmem:[%s3046 + $0xaf] sm:$0xff]
      %v3059 = vld [vmem:[%s3046 + $0xc7] sm:$0xff]
      %v3060 = vld [vmem:[%s3046 + $0xcf] sm:$0xff]
      %v3061 = vld [vmem:[%s3046 + $0xe7] sm:$0xff]
      %v3062 = vld [vmem:[%s3046 + $0xef] sm:$0xff]
      %v3063 = vld [vmem:[%s3046 + $0x107] sm:$0xff]
      %v3064 = vld [vmem:[%s3046 + $0x10f] sm:$0xff]
      %v3065 = vld [vmem:[%s3046 + $0x127] sm:$0xff]
      %v3066 = vld [vmem:[%s3046 + $0x12f] sm:$0xff]
      %v3067 = vld [vmem:[%s3046 + $0x147] sm:$0xff]
      %v3068 = vld [vmem:[%s3046 + $0x14f] sm:$0xff]
      %v3069 = vld [vmem:[%s3046 + $0x167] sm:$0xff]
      %v3070 = vld [vmem:[%s3046 + $0x16f] sm:$0xff]
      %v3071 = vld [vmem:[%s3046 + $0x187] sm:$0xff]
      %v3072 = vld [vmem:[%s3046 + $0x18f] sm:$0xff]
      %v3073 = vld [vmem:[%s3046 + $0x1a7] sm:$0xff]
      %v3074 = vld [vmem:[%s3046 + $0x1af] sm:$0xff]
      %v3075 = vld [vmem:[%s3046 + $0x1c7] sm:$0xff]
      %v3076 = vld [vmem:[%s3046 + $0x1cf] sm:$0xff]
      %v3077 = vld [vmem:[%s3046 + $0x1e7] sm:$0xff]
      %v3078 = vld [vmem:[%s3046 + $0x1ef] sm:$0xff]
      %v3079 = vlaneseq
      %v3080 = vshrl.u32 %v3079, 7
      %v3081 = vsub.s32 6, %v3080
      %v3082 = vrot.slane %v1809, %v3081
      %v3083 = vmul.f32 %v3082, %v3014
      %v3084 = vmul.f32 %v3082, %v3015
      %v3085 = vmul.f32 %v3082, %v3016
      %v3086 = vmul.f32 %v3082, %v3017
      %v3087 = vmul.f32 %v3082, %v3018
      %v3088 = vmul.f32 %v3082, %v3019
      %v3089 = vmul.f32 %v3082, %v3020
      %v3090 = vmul.f32 %v3082, %v3021
      %v3091 = vmul.f32 %v3082, %v3022
      %v3092 = vmul.f32 %v3082, %v3023
      %v3093 = vmul.f32 %v3082, %v3024
      %v3094 = vmul.f32 %v3082, %v3025
      %v3095 = vmul.f32 %v3082, %v3026
      %v3096 = vmul.f32 %v3082, %v3027
      %v3097 = vmul.f32 %v3082, %v3028
      %v3098 = vmul.f32 %v3082, %v3029
      %v3099 = vmul.f32 %v3082, %v3030
      %v3100 = vmul.f32 %v3082, %v3031
      %v3101 = vmul.f32 %v3082, %v3032
      %v3102 = vmul.f32 %v3082, %v3033
      %v3103 = vmul.f32 %v3082, %v3034
      %v3104 = vmul.f32 %v3082, %v3035
      %v3105 = vmul.f32 %v3082, %v3036
      %v3106 = vmul.f32 %v3082, %v3037
      %v3107 = vmul.f32 %v3082, %v3038
      %v3108 = vmul.f32 %v3082, %v3039
      %v3109 = vmul.f32 %v3082, %v3040
      %v3110 = vmul.f32 %v3082, %v3041
      %v3111 = vmul.f32 %v3082, %v3042
      %v3112 = vmul.f32 %v3082, %v3043
      %v3113 = vmul.f32 %v3082, %v3044
      %v3114 = vmul.f32 %v3082, %v3045
      %v3115 = vadd.f32 %v2913, %v3083
      %v3116 = vadd.f32 %v2914, %v3084
      %v3117 = vadd.f32 %v2915, %v3085
      %v3118 = vadd.f32 %v2916, %v3086
      %v3119 = vadd.f32 %v2917, %v3087
      %v3120 = vadd.f32 %v2918, %v3088
      %v3121 = vadd.f32 %v2919, %v3089
      %v3122 = vadd.f32 %v2920, %v3090
      %v3123 = vadd.f32 %v2921, %v3091
      %v3124 = vadd.f32 %v2922, %v3092
      %v3125 = vadd.f32 %v2923, %v3093
      %v3126 = vadd.f32 %v2924, %v3094
      %v3127 = vadd.f32 %v2925, %v3095
      %v3128 = vadd.f32 %v2926, %v3096
      %v3129 = vadd.f32 %v2927, %v3097
      %v3130 = vadd.f32 %v2928, %v3098
      %v3131 = vadd.f32 %v2929, %v3099
      %v3132 = vadd.f32 %v2930, %v3100
      %v3133 = vadd.f32 %v2931, %v3101
      %v3134 = vadd.f32 %v2932, %v3102
      %v3135 = vadd.f32 %v2933, %v3103
      %v3136 = vadd.f32 %v2934, %v3104
      %v3137 = vadd.f32 %v2935, %v3105
      %v3138 = vadd.f32 %v2936, %v3106
      %v3139 = vadd.f32 %v2937, %v3107
      %v3140 = vadd.f32 %v2938, %v3108
      %v3141 = vadd.f32 %v2939, %v3109
      %v3142 = vadd.f32 %v2940, %v3110
      %v3143 = vadd.f32 %v2941, %v3111
      %v3144 = vadd.f32 %v2942, %v3112
      %v3145 = vadd.f32 %v2943, %v3113
      %v3146 = vadd.f32 %v2944, %v3114
      %v3147 = vlaneseq
      %v3148 = vshrl.u32 %v3147, 7
      %v3149 = vsub.s32 6, %v3148
      %v3150 = vrot.slane %v1811, %v3149
      %v3151 = vmul.f32 %v3150, %v3047
      %v3152 = vmul.f32 %v3150, %v3048
      %v3153 = vmul.f32 %v3150, %v3049
      %v3154 = vmul.f32 %v3150, %v3050
      %v3155 = vmul.f32 %v3150, %v3051
      %v3156 = vmul.f32 %v3150, %v3052
      %v3157 = vmul.f32 %v3150, %v3053
      %v3158 = vmul.f32 %v3150, %v3054
      %v3159 = vmul.f32 %v3150, %v3055
      %v3160 = vmul.f32 %v3150, %v3056
      %v3161 = vmul.f32 %v3150, %v3057
      %v3162 = vmul.f32 %v3150, %v3058
      %v3163 = vmul.f32 %v3150, %v3059
      %v3164 = vmul.f32 %v3150, %v3060
      %v3165 = vmul.f32 %v3150, %v3061
      %v3166 = vmul.f32 %v3150, %v3062
      %v3167 = vmul.f32 %v3150, %v3063
      %v3168 = vmul.f32 %v3150, %v3064
      %v3169 = vmul.f32 %v3150, %v3065
      %v3170 = vmul.f32 %v3150, %v3066
      %v3171 = vmul.f32 %v3150, %v3067
      %v3172 = vmul.f32 %v3150, %v3068
      %v3173 = vmul.f32 %v3150, %v3069
      %v3174 = vmul.f32 %v3150, %v3070
      %v3175 = vmul.f32 %v3150, %v3071
      %v3176 = vmul.f32 %v3150, %v3072
      %v3177 = vmul.f32 %v3150, %v3073
      %v3178 = vmul.f32 %v3150, %v3074
      %v3179 = vmul.f32 %v3150, %v3075
      %v3180 = vmul.f32 %v3150, %v3076
      %v3181 = vmul.f32 %v3150, %v3077
      %v3182 = vmul.f32 %v3150, %v3078
      %v3183 = vadd.f32 %v2981, %v3151
      %v3184 = vadd.f32 %v2982, %v3152
      %v3185 = vadd.f32 %v2983, %v3153
      %v3186 = vadd.f32 %v2984, %v3154
      %v3187 = vadd.f32 %v2985, %v3155
      %v3188 = vadd.f32 %v2986, %v3156
      %v3189 = vadd.f32 %v2987, %v3157
      %v3190 = vadd.f32 %v2988, %v3158
      %v3191 = vadd.f32 %v2989, %v3159
      %v3192 = vadd.f32 %v2990, %v3160
      %v3193 = vadd.f32 %v2991, %v3161
      %v3194 = vadd.f32 %v2992, %v3162
      %v3195 = vadd.f32 %v2993, %v3163
      %v3196 = vadd.f32 %v2994, %v3164
      %v3197 = vadd.f32 %v2995, %v3165
      %v3198 = vadd.f32 %v2996, %v3166
      %v3199 = vadd.f32 %v2997, %v3167
      %v3200 = vadd.f32 %v2998, %v3168
      %v3201 = vadd.f32 %v2999, %v3169
      %v3202 = vadd.f32 %v3000, %v3170
      %v3203 = vadd.f32 %v3001, %v3171
      %v3204 = vadd.f32 %v3002, %v3172
      %v3205 = vadd.f32 %v3003, %v3173
      %v3206 = vadd.f32 %v3004, %v3174
      %v3207 = vadd.f32 %v3005, %v3175
      %v3208 = vadd.f32 %v3006, %v3176
      %v3209 = vadd.f32 %v3007, %v3177
      %v3210 = vadd.f32 %v3008, %v3178
      %v3211 = vadd.f32 %v3009, %v3179
      %v3212 = vadd.f32 %v3010, %v3180
      %v3213 = vadd.f32 %v3011, %v3181
      %v3214 = vadd.f32 %v3012, %v3182
      %v3215 = vld [vmem:[%s3013 + $0x8] sm:$0xff]
      %v3216 = vld [vmem:[%s3013 + $0x10] sm:$0xff]
      %v3217 = vld [vmem:[%s3013 + $0x28] sm:$0xff]
      %v3218 = vld [vmem:[%s3013 + $0x30] sm:$0xff]
      %v3219 = vld [vmem:[%s3013 + $0x48] sm:$0xff]
      %v3220 = vld [vmem:[%s3013 + $0x50] sm:$0xff]
      %v3221 = vld [vmem:[%s3013 + $0x68] sm:$0xff]
      %v3222 = vld [vmem:[%s3013 + $0x70] sm:$0xff]
      %v3223 = vld [vmem:[%s3013 + $0x88] sm:$0xff]
      %v3224 = vld [vmem:[%s3013 + $0x90] sm:$0xff]
      %v3225 = vld [vmem:[%s3013 + $0xa8] sm:$0xff]
      %v3226 = vld [vmem:[%s3013 + $0xb0] sm:$0xff]
      %v3227 = vld [vmem:[%s3013 + $0xc8] sm:$0xff]
      %v3228 = vld [vmem:[%s3013 + $0xd0] sm:$0xff]
      %v3229 = vld [vmem:[%s3013 + $0xe8] sm:$0xff]
      %v3230 = vld [vmem:[%s3013 + $0xf0] sm:$0xff]
      %v3231 = vld [vmem:[%s3013 + $0x108] sm:$0xff]
      %v3232 = vld [vmem:[%s3013 + $0x110] sm:$0xff]
      %v3233 = vld [vmem:[%s3013 + $0x128] sm:$0xff]
      %v3234 = vld [vmem:[%s3013 + $0x130] sm:$0xff]
      %v3235 = vld [vmem:[%s3013 + $0x148] sm:$0xff]
      %v3236 = vld [vmem:[%s3013 + $0x150] sm:$0xff]
      %v3237 = vld [vmem:[%s3013 + $0x168] sm:$0xff]
      %v3238 = vld [vmem:[%s3013 + $0x170] sm:$0xff]
      %v3239 = vld [vmem:[%s3013 + $0x188] sm:$0xff]
      %v3240 = vld [vmem:[%s3013 + $0x190] sm:$0xff]
      %v3241 = vld [vmem:[%s3013 + $0x1a8] sm:$0xff]
      %v3242 = vld [vmem:[%s3013 + $0x1b0] sm:$0xff]
      %v3243 = vld [vmem:[%s3013 + $0x1c8] sm:$0xff]
      %v3244 = vld [vmem:[%s3013 + $0x1d0] sm:$0xff]
      %v3245 = vld [vmem:[%s3013 + $0x1e8] sm:$0xff]
      %v3246 = vld [vmem:[%s3013 + $0x1f0] sm:$0xff]
      %v3247 = vld [vmem:[%s3046 + $0x8] sm:$0xff]
      %v3248 = vld [vmem:[%s3046 + $0x10] sm:$0xff]
      %v3249 = vld [vmem:[%s3046 + $0x28] sm:$0xff]
      %v3250 = vld [vmem:[%s3046 + $0x30] sm:$0xff]
      %v3251 = vld [vmem:[%s3046 + $0x48] sm:$0xff]
      %v3252 = vld [vmem:[%s3046 + $0x50] sm:$0xff]
      %v3253 = vld [vmem:[%s3046 + $0x68] sm:$0xff]
      %v3254 = vld [vmem:[%s3046 + $0x70] sm:$0xff]
      %v3255 = vld [vmem:[%s3046 + $0x88] sm:$0xff]
      %v3256 = vld [vmem:[%s3046 + $0x90] sm:$0xff]
      %v3257 = vld [vmem:[%s3046 + $0xa8] sm:$0xff]
      %v3258 = vld [vmem:[%s3046 + $0xb0] sm:$0xff]
      %v3259 = vld [vmem:[%s3046 + $0xc8] sm:$0xff]
      %v3260 = vld [vmem:[%s3046 + $0xd0] sm:$0xff]
      %v3261 = vld [vmem:[%s3046 + $0xe8] sm:$0xff]
      %v3262 = vld [vmem:[%s3046 + $0xf0] sm:$0xff]
      %v3263 = vld [vmem:[%s3046 + $0x108] sm:$0xff]
      %v3264 = vld [vmem:[%s3046 + $0x110] sm:$0xff]
      %v3265 = vld [vmem:[%s3046 + $0x128] sm:$0xff]
      %v3266 = vld [vmem:[%s3046 + $0x130] sm:$0xff]
      %v3267 = vld [vmem:[%s3046 + $0x148] sm:$0xff]
      %v3268 = vld [vmem:[%s3046 + $0x150] sm:$0xff]
      %v3269 = vld [vmem:[%s3046 + $0x168] sm:$0xff]
      %v3270 = vld [vmem:[%s3046 + $0x170] sm:$0xff]
      %v3271 = vld [vmem:[%s3046 + $0x188] sm:$0xff]
      %v3272 = vld [vmem:[%s3046 + $0x190] sm:$0xff]
      %v3273 = vld [vmem:[%s3046 + $0x1a8] sm:$0xff]
      %v3274 = vld [vmem:[%s3046 + $0x1b0] sm:$0xff]
      %v3275 = vld [vmem:[%s3046 + $0x1c8] sm:$0xff]
      %v3276 = vld [vmem:[%s3046 + $0x1d0] sm:$0xff]
      %v3277 = vld [vmem:[%s3046 + $0x1e8] sm:$0xff]
      %v3278 = vld [vmem:[%s3046 + $0x1f0] sm:$0xff]
      %v3279 = vlaneseq
      %v3280 = vshrl.u32 %v3279, 7
      %v3281 = vsub.s32 7, %v3280
      %v3282 = vrot.slane %v1809, %v3281
      %v3283 = vmul.f32 %v3282, %v3215
      %v3284 = vmul.f32 %v3282, %v3216
      %v3285 = vmul.f32 %v3282, %v3217
      %v3286 = vmul.f32 %v3282, %v3218
      %v3287 = vmul.f32 %v3282, %v3219
      %v3288 = vmul.f32 %v3282, %v3220
      %v3289 = vmul.f32 %v3282, %v3221
      %v3290 = vmul.f32 %v3282, %v3222
      %v3291 = vmul.f32 %v3282, %v3223
      %v3292 = vmul.f32 %v3282, %v3224
      %v3293 = vmul.f32 %v3282, %v3225
      %v3294 = vmul.f32 %v3282, %v3226
      %v3295 = vmul.f32 %v3282, %v3227
      %v3296 = vmul.f32 %v3282, %v3228
      %v3297 = vmul.f32 %v3282, %v3229
      %v3298 = vmul.f32 %v3282, %v3230
      %v3299 = vmul.f32 %v3282, %v3231
      %v3300 = vmul.f32 %v3282, %v3232
      %v3301 = vmul.f32 %v3282, %v3233
      %v3302 = vmul.f32 %v3282, %v3234
      %v3303 = vmul.f32 %v3282, %v3235
      %v3304 = vmul.f32 %v3282, %v3236
      %v3305 = vmul.f32 %v3282, %v3237
      %v3306 = vmul.f32 %v3282, %v3238
      %v3307 = vmul.f32 %v3282, %v3239
      %v3308 = vmul.f32 %v3282, %v3240
      %v3309 = vmul.f32 %v3282, %v3241
      %v3310 = vmul.f32 %v3282, %v3242
      %v3311 = vmul.f32 %v3282, %v3243
      %v3312 = vmul.f32 %v3282, %v3244
      %v3313 = vmul.f32 %v3282, %v3245
      %v3314 = vmul.f32 %v3282, %v3246
      %v3315 = vadd.f32 %v3115, %v3283
      %v3316 = vadd.f32 %v3116, %v3284
      %v3317 = vadd.f32 %v3117, %v3285
      %v3318 = vadd.f32 %v3118, %v3286
      %v3319 = vadd.f32 %v3119, %v3287
      %v3320 = vadd.f32 %v3120, %v3288
      %v3321 = vadd.f32 %v3121, %v3289
      %v3322 = vadd.f32 %v3122, %v3290
      %v3323 = vadd.f32 %v3123, %v3291
      %v3324 = vadd.f32 %v3124, %v3292
      %v3325 = vadd.f32 %v3125, %v3293
      %v3326 = vadd.f32 %v3126, %v3294
      %v3327 = vadd.f32 %v3127, %v3295
      %v3328 = vadd.f32 %v3128, %v3296
      %v3329 = vadd.f32 %v3129, %v3297
      %v3330 = vadd.f32 %v3130, %v3298
      %v3331 = vadd.f32 %v3131, %v3299
      %v3332 = vadd.f32 %v3132, %v3300
      %v3333 = vadd.f32 %v3133, %v3301
      %v3334 = vadd.f32 %v3134, %v3302
      %v3335 = vadd.f32 %v3135, %v3303
      %v3336 = vadd.f32 %v3136, %v3304
      %v3337 = vadd.f32 %v3137, %v3305
      %v3338 = vadd.f32 %v3138, %v3306
      %v3339 = vadd.f32 %v3139, %v3307
      %v3340 = vadd.f32 %v3140, %v3308
      %v3341 = vadd.f32 %v3141, %v3309
      %v3342 = vadd.f32 %v3142, %v3310
      %v3343 = vadd.f32 %v3143, %v3311
      %v3344 = vadd.f32 %v3144, %v3312
      %v3345 = vadd.f32 %v3145, %v3313
      %v3346 = vadd.f32 %v3146, %v3314
      %v3347 = vlaneseq
      %v3348 = vshrl.u32 %v3347, 7
      %v3349 = vsub.s32 7, %v3348
      %v3350 = vrot.slane %v1811, %v3349
      %v3351 = vmul.f32 %v3350, %v3247
      %v3352 = vmul.f32 %v3350, %v3248
      %v3353 = vmul.f32 %v3350, %v3249
      %v3354 = vmul.f32 %v3350, %v3250
      %v3355 = vmul.f32 %v3350, %v3251
      %v3356 = vmul.f32 %v3350, %v3252
      %v3357 = vmul.f32 %v3350, %v3253
      %v3358 = vmul.f32 %v3350, %v3254
      %v3359 = vmul.f32 %v3350, %v3255
      %v3360 = vmul.f32 %v3350, %v3256
      %v3361 = vmul.f32 %v3350, %v3257
      %v3362 = vmul.f32 %v3350, %v3258
      %v3363 = vmul.f32 %v3350, %v3259
      %v3364 = vmul.f32 %v3350, %v3260
      %v3365 = vmul.f32 %v3350, %v3261
      %v3366 = vmul.f32 %v3350, %v3262
      %v3367 = vmul.f32 %v3350, %v3263
      %v3368 = vmul.f32 %v3350, %v3264
      %v3369 = vmul.f32 %v3350, %v3265
      %v3370 = vmul.f32 %v3350, %v3266
      %v3371 = vmul.f32 %v3350, %v3267
      %v3372 = vmul.f32 %v3350, %v3268
      %v3373 = vmul.f32 %v3350, %v3269
      %v3374 = vmul.f32 %v3350, %v3270
      %v3375 = vmul.f32 %v3350, %v3271
      %v3376 = vmul.f32 %v3350, %v3272
      %v3377 = vmul.f32 %v3350, %v3273
      %v3378 = vmul.f32 %v3350, %v3274
      %v3379 = vmul.f32 %v3350, %v3275
      %v3380 = vmul.f32 %v3350, %v3276
      %v3381 = vmul.f32 %v3350, %v3277
      %v3382 = vmul.f32 %v3350, %v3278
      %v3383 = vadd.f32 %v3183, %v3351
      %v3384 = vadd.f32 %v3184, %v3352
      %v3385 = vadd.f32 %v3185, %v3353
      %v3386 = vadd.f32 %v3186, %v3354
      %v3387 = vadd.f32 %v3187, %v3355
      %v3388 = vadd.f32 %v3188, %v3356
      %v3389 = vadd.f32 %v3189, %v3357
      %v3390 = vadd.f32 %v3190, %v3358
      %v3391 = vadd.f32 %v3191, %v3359
      %v3392 = vadd.f32 %v3192, %v3360
      %v3393 = vadd.f32 %v3193, %v3361
      %v3394 = vadd.f32 %v3194, %v3362
      %v3395 = vadd.f32 %v3195, %v3363
      %v3396 = vadd.f32 %v3196, %v3364
      %v3397 = vadd.f32 %v3197, %v3365
      %v3398 = vadd.f32 %v3198, %v3366
      %v3399 = vadd.f32 %v3199, %v3367
      %v3400 = vadd.f32 %v3200, %v3368
      %v3401 = vadd.f32 %v3201, %v3369
      %v3402 = vadd.f32 %v3202, %v3370
      %v3403 = vadd.f32 %v3203, %v3371
      %v3404 = vadd.f32 %v3204, %v3372
      %v3405 = vadd.f32 %v3205, %v3373
      %v3406 = vadd.f32 %v3206, %v3374
      %v3407 = vadd.f32 %v3207, %v3375
      %v3408 = vadd.f32 %v3208, %v3376
      %v3409 = vadd.f32 %v3209, %v3377
      %v3410 = vadd.f32 %v3210, %v3378
      %v3411 = vadd.f32 %v3211, %v3379
      %v3412 = vadd.f32 %v3212, %v3380
      %v3413 = vadd.f32 %v3213, %v3381
      %v3414 = vadd.f32 %v3214, %v3382
      %v3415 = vld [vmem:[%s3013 + $0x9] sm:$0xff]
      %v3416 = vld [vmem:[%s3013 + $0x11] sm:$0xff]
      %v3417 = vld [vmem:[%s3013 + $0x29] sm:$0xff]
      %v3418 = vld [vmem:[%s3013 + $0x31] sm:$0xff]
      %v3419 = vld [vmem:[%s3013 + $0x49] sm:$0xff]
      %v3420 = vld [vmem:[%s3013 + $0x51] sm:$0xff]
      %v3421 = vld [vmem:[%s3013 + $0x69] sm:$0xff]
      %v3422 = vld [vmem:[%s3013 + $0x71] sm:$0xff]
      %v3423 = vld [vmem:[%s3013 + $0x89] sm:$0xff]
      %v3424 = vld [vmem:[%s3013 + $0x91] sm:$0xff]
      %v3425 = vld [vmem:[%s3013 + $0xa9] sm:$0xff]
      %v3426 = vld [vmem:[%s3013 + $0xb1] sm:$0xff]
      %v3427 = vld [vmem:[%s3013 + $0xc9] sm:$0xff]
      %v3428 = vld [vmem:[%s3013 + $0xd1] sm:$0xff]
      %v3429 = vld [vmem:[%s3013 + $0xe9] sm:$0xff]
      %v3430 = vld [vmem:[%s3013 + $0xf1] sm:$0xff]
      %v3431 = vld [vmem:[%s3013 + $0x109] sm:$0xff]
      %v3432 = vld [vmem:[%s3013 + $0x111] sm:$0xff]
      %v3433 = vld [vmem:[%s3013 + $0x129] sm:$0xff]
      %v3434 = vld [vmem:[%s3013 + $0x131] sm:$0xff]
      %v3435 = vld [vmem:[%s3013 + $0x149] sm:$0xff]
      %v3436 = vld [vmem:[%s3013 + $0x151] sm:$0xff]
      %v3437 = vld [vmem:[%s3013 + $0x169] sm:$0xff]
      %v3438 = vld [vmem:[%s3013 + $0x171] sm:$0xff]
      %v3439 = vld [vmem:[%s3013 + $0x189] sm:$0xff]
      %v3440 = vld [vmem:[%s3013 + $0x191] sm:$0xff]
      %v3441 = vld [vmem:[%s3013 + $0x1a9] sm:$0xff]
      %v3442 = vld [vmem:[%s3013 + $0x1b1] sm:$0xff]
      %v3443 = vld [vmem:[%s3013 + $0x1c9] sm:$0xff]
      %v3444 = vld [vmem:[%s3013 + $0x1d1] sm:$0xff]
      %v3445 = vld [vmem:[%s3013 + $0x1e9] sm:$0xff]
      %v3446 = vld [vmem:[%s3013 + $0x1f1] sm:$0xff]
      %v3447 = vld [vmem:[%s3046 + $0x9] sm:$0xff]
      %v3448 = vld [vmem:[%s3046 + $0x11] sm:$0xff]
      %v3449 = vld [vmem:[%s3046 + $0x29] sm:$0xff]
      %v3450 = vld [vmem:[%s3046 + $0x31] sm:$0xff]
      %v3451 = vld [vmem:[%s3046 + $0x49] sm:$0xff]
      %v3452 = vld [vmem:[%s3046 + $0x51] sm:$0xff]
      %v3453 = vld [vmem:[%s3046 + $0x69] sm:$0xff]
      %v3454 = vld [vmem:[%s3046 + $0x71] sm:$0xff]
      %v3455 = vld [vmem:[%s3046 + $0x89] sm:$0xff]
      %v3456 = vld [vmem:[%s3046 + $0x91] sm:$0xff]
      %v3457 = vld [vmem:[%s3046 + $0xa9] sm:$0xff]
      %v3458 = vld [vmem:[%s3046 + $0xb1] sm:$0xff]
      %v3459 = vld [vmem:[%s3046 + $0xc9] sm:$0xff]
      %v3460 = vld [vmem:[%s3046 + $0xd1] sm:$0xff]
      %v3461 = vld [vmem:[%s3046 + $0xe9] sm:$0xff]
      %v3462 = vld [vmem:[%s3046 + $0xf1] sm:$0xff]
      %v3463 = vld [vmem:[%s3046 + $0x109] sm:$0xff]
      %v3464 = vld [vmem:[%s3046 + $0x111] sm:$0xff]
      %v3465 = vld [vmem:[%s3046 + $0x129] sm:$0xff]
      %v3466 = vld [vmem:[%s3046 + $0x131] sm:$0xff]
      %v3467 = vld [vmem:[%s3046 + $0x149] sm:$0xff]
      %v3468 = vld [vmem:[%s3046 + $0x151] sm:$0xff]
      %v3469 = vld [vmem:[%s3046 + $0x169] sm:$0xff]
      %v3470 = vld [vmem:[%s3046 + $0x171] sm:$0xff]
      %v3471 = vld [vmem:[%s3046 + $0x189] sm:$0xff]
      %v3472 = vld [vmem:[%s3046 + $0x191] sm:$0xff]
      %v3473 = vld [vmem:[%s3046 + $0x1a9] sm:$0xff]
      %v3474 = vld [vmem:[%s3046 + $0x1b1] sm:$0xff]
      %v3475 = vld [vmem:[%s3046 + $0x1c9] sm:$0xff]
      %v3476 = vld [vmem:[%s3046 + $0x1d1] sm:$0xff]
      %v3477 = vld [vmem:[%s3046 + $0x1e9] sm:$0xff]
      %v3478 = vld [vmem:[%s3046 + $0x1f1] sm:$0xff]
      %v3479 = vlaneseq
      %v3480 = vshrl.u32 %v3479, 7
      %v3481 = vsub.s32 0, %v3480
      %v3482 = vrot.slane %v1810, %v3481
      %v3483 = vmul.f32 %v3482, %v3415
      %v3484 = vmul.f32 %v3482, %v3416
      %v3485 = vmul.f32 %v3482, %v3417
      %v3486 = vmul.f32 %v3482, %v3418
      %v3487 = vmul.f32 %v3482, %v3419
      %v3488 = vmul.f32 %v3482, %v3420
      %v3489 = vmul.f32 %v3482, %v3421
      %v3490 = vmul.f32 %v3482, %v3422
      %v3491 = vmul.f32 %v3482, %v3423
      %v3492 = vmul.f32 %v3482, %v3424
      %v3493 = vmul.f32 %v3482, %v3425
      %v3494 = vmul.f32 %v3482, %v3426
      %v3495 = vmul.f32 %v3482, %v3427
      %v3496 = vmul.f32 %v3482, %v3428
      %v3497 = vmul.f32 %v3482, %v3429
      %v3498 = vmul.f32 %v3482, %v3430
      %v3499 = vmul.f32 %v3482, %v3431
      %v3500 = vmul.f32 %v3482, %v3432
      %v3501 = vmul.f32 %v3482, %v3433
      %v3502 = vmul.f32 %v3482, %v3434
      %v3503 = vmul.f32 %v3482, %v3435
      %v3504 = vmul.f32 %v3482, %v3436
      %v3505 = vmul.f32 %v3482, %v3437
      %v3506 = vmul.f32 %v3482, %v3438
      %v3507 = vmul.f32 %v3482, %v3439
      %v3508 = vmul.f32 %v3482, %v3440
      %v3509 = vmul.f32 %v3482, %v3441
      %v3510 = vmul.f32 %v3482, %v3442
      %v3511 = vmul.f32 %v3482, %v3443
      %v3512 = vmul.f32 %v3482, %v3444
      %v3513 = vmul.f32 %v3482, %v3445
      %v3514 = vmul.f32 %v3482, %v3446
      %v3515 = vadd.f32 %v3315, %v3483
      %v3516 = vadd.f32 %v3316, %v3484
      %v3517 = vadd.f32 %v3317, %v3485
      %v3518 = vadd.f32 %v3318, %v3486
      %v3519 = vadd.f32 %v3319, %v3487
      %v3520 = vadd.f32 %v3320, %v3488
      %v3521 = vadd.f32 %v3321, %v3489
      %v3522 = vadd.f32 %v3322, %v3490
      %v3523 = vadd.f32 %v3323, %v3491
      %v3524 = vadd.f32 %v3324, %v3492
      %v3525 = vadd.f32 %v3325, %v3493
      %v3526 = vadd.f32 %v3326, %v3494
      %v3527 = vadd.f32 %v3327, %v3495
      %v3528 = vadd.f32 %v3328, %v3496
      %v3529 = vadd.f32 %v3329, %v3497
      %v3530 = vadd.f32 %v3330, %v3498
      %v3531 = vadd.f32 %v3331, %v3499
      %v3532 = vadd.f32 %v3332, %v3500
      %v3533 = vadd.f32 %v3333, %v3501
      %v3534 = vadd.f32 %v3334, %v3502
      %v3535 = vadd.f32 %v3335, %v3503
      %v3536 = vadd.f32 %v3336, %v3504
      %v3537 = vadd.f32 %v3337, %v3505
      %v3538 = vadd.f32 %v3338, %v3506
      %v3539 = vadd.f32 %v3339, %v3507
      %v3540 = vadd.f32 %v3340, %v3508
      %v3541 = vadd.f32 %v3341, %v3509
      %v3542 = vadd.f32 %v3342, %v3510
      %v3543 = vadd.f32 %v3343, %v3511
      %v3544 = vadd.f32 %v3344, %v3512
      %v3545 = vadd.f32 %v3345, %v3513
      %v3546 = vadd.f32 %v3346, %v3514
      %v3547 = vlaneseq
      %v3548 = vshrl.u32 %v3547, 7
      %v3549 = vsub.s32 0, %v3548
      %v3550 = vrot.slane %v1812, %v3549
      %v3551 = vmul.f32 %v3550, %v3447
      %v3552 = vmul.f32 %v3550, %v3448
      %v3553 = vmul.f32 %v3550, %v3449
      %v3554 = vmul.f32 %v3550, %v3450
      %v3555 = vmul.f32 %v3550, %v3451
      %v3556 = vmul.f32 %v3550, %v3452
      %v3557 = vmul.f32 %v3550, %v3453
      %v3558 = vmul.f32 %v3550, %v3454
      %v3559 = vmul.f32 %v3550, %v3455
      %v3560 = vmul.f32 %v3550, %v3456
      %v3561 = vmul.f32 %v3550, %v3457
      %v3562 = vmul.f32 %v3550, %v3458
      %v3563 = vmul.f32 %v3550, %v3459
      %v3564 = vmul.f32 %v3550, %v3460
      %v3565 = vmul.f32 %v3550, %v3461
      %v3566 = vmul.f32 %v3550, %v3462
      %v3567 = vmul.f32 %v3550, %v3463
      %v3568 = vmul.f32 %v3550, %v3464
      %v3569 = vmul.f32 %v3550, %v3465
      %v3570 = vmul.f32 %v3550, %v3466
      %v3571 = vmul.f32 %v3550, %v3467
      %v3572 = vmul.f32 %v3550, %v3468
      %v3573 = vmul.f32 %v3550, %v3469
      %v3574 = vmul.f32 %v3550, %v3470
      %v3575 = vmul.f32 %v3550, %v3471
      %v3576 = vmul.f32 %v3550, %v3472
      %v3577 = vmul.f32 %v3550, %v3473
      %v3578 = vmul.f32 %v3550, %v3474
      %v3579 = vmul.f32 %v3550, %v3475
      %v3580 = vmul.f32 %v3550, %v3476
      %v3581 = vmul.f32 %v3550, %v3477
      %v3582 = vmul.f32 %v3550, %v3478
      %v3583 = vadd.f32 %v3383, %v3551
      %v3584 = vadd.f32 %v3384, %v3552
      %v3585 = vadd.f32 %v3385, %v3553
      %v3586 = vadd.f32 %v3386, %v3554
      %v3587 = vadd.f32 %v3387, %v3555
      %v3588 = vadd.f32 %v3388, %v3556
      %v3589 = vadd.f32 %v3389, %v3557
      %v3590 = vadd.f32 %v3390, %v3558
      %v3591 = vadd.f32 %v3391, %v3559
      %v3592 = vadd.f32 %v3392, %v3560
      %v3593 = vadd.f32 %v3393, %v3561
      %v3594 = vadd.f32 %v3394, %v3562
      %v3595 = vadd.f32 %v3395, %v3563
      %v3596 = vadd.f32 %v3396, %v3564
      %v3597 = vadd.f32 %v3397, %v3565
      %v3598 = vadd.f32 %v3398, %v3566
      %v3599 = vadd.f32 %v3399, %v3567
      %v3600 = vadd.f32 %v3400, %v3568
      %v3601 = vadd.f32 %v3401, %v3569
      %v3602 = vadd.f32 %v3402, %v3570
      %v3603 = vadd.f32 %v3403, %v3571
      %v3604 = vadd.f32 %v3404, %v3572
      %v3605 = vadd.f32 %v3405, %v3573
      %v3606 = vadd.f32 %v3406, %v3574
      %v3607 = vadd.f32 %v3407, %v3575
      %v3608 = vadd.f32 %v3408, %v3576
      %v3609 = vadd.f32 %v3409, %v3577
      %v3610 = vadd.f32 %v3410, %v3578
      %v3611 = vadd.f32 %v3411, %v3579
      %v3612 = vadd.f32 %v3412, %v3580
      %v3613 = vadd.f32 %v3413, %v3581
      %v3614 = vadd.f32 %v3414, %v3582
      %v3615 = vrcp.pop %v3583
      %v3616 = vmul.f32 1.0, %v3615
      %v3617 = vrcp.pop %v3584
      %v3618 = vmul.f32 1.0, %v3617
      %v3619 = vrcp.pop %v3585
      %v3620 = vmul.f32 1.0, %v3619
      %v3621 = vrcp.pop %v3586
      %v3622 = vmul.f32 1.0, %v3621
      %v3623 = vrcp.pop %v3587
      %v3624 = vmul.f32 1.0, %v3623
      %v3625 = vrcp.pop %v3588
      %v3626 = vmul.f32 1.0, %v3625
      %v3627 = vrcp.pop %v3589
      %v3628 = vmul.f32 1.0, %v3627
      %v3629 = vrcp.pop %v3590
      %v3630 = vmul.f32 1.0, %v3629
      %v3631 = vrcp.pop %v3591
      %v3632 = vmul.f32 1.0, %v3631
      %v3633 = vrcp.pop %v3592
      %v3634 = vmul.f32 1.0, %v3633
      %v3635 = vrcp.pop %v3593
      %v3636 = vmul.f32 1.0, %v3635
      %v3637 = vrcp.pop %v3594
      %v3638 = vmul.f32 1.0, %v3637
      %v3639 = vrcp.pop %v3595
      %v3640 = vmul.f32 1.0, %v3639
      %v3641 = vrcp.pop %v3596
      %v3642 = vmul.f32 1.0, %v3641
      %v3643 = vrcp.pop %v3597
      %v3644 = vmul.f32 1.0, %v3643
      %v3645 = vrcp.pop %v3598
      %v3646 = vmul.f32 1.0, %v3645
      %v3647 = vrcp.pop %v3599
      %v3648 = vmul.f32 1.0, %v3647
      %v3649 = vrcp.pop %v3600
      %v3650 = vmul.f32 1.0, %v3649
      %v3651 = vrcp.pop %v3601
      %v3652 = vmul.f32 1.0, %v3651
      %v3653 = vrcp.pop %v3602
      %v3654 = vmul.f32 1.0, %v3653
      %v3655 = vrcp.pop %v3603
      %v3656 = vmul.f32 1.0, %v3655
      %v3657 = vrcp.pop %v3604
      %v3658 = vmul.f32 1.0, %v3657
      %v3659 = vrcp.pop %v3605
      %v3660 = vmul.f32 1.0, %v3659
      %v3661 = vrcp.pop %v3606
      %v3662 = vmul.f32 1.0, %v3661
      %v3663 = vrcp.pop %v3607
      %v3664 = vmul.f32 1.0, %v3663
      %v3665 = vrcp.pop %v3608
      %v3666 = vmul.f32 1.0, %v3665
      %v3667 = vrcp.pop %v3609
      %v3668 = vmul.f32 1.0, %v3667
      %v3669 = vrcp.pop %v3610
      %v3670 = vmul.f32 1.0, %v3669
      %v3671 = vrcp.pop %v3611
      %v3672 = vmul.f32 1.0, %v3671
      %v3673 = vrcp.pop %v3612
      %v3674 = vmul.f32 1.0, %v3673
      %v3675 = vrcp.pop %v3613
      %v3676 = vmul.f32 1.0, %v3675
      %v3677 = vrcp.pop %v3614
      %v3678 = vmul.f32 1.0, %v3677
      %v3679 = vld [vmem:[%s3] sm:$0xf]
      %v3681 = vsel %vm1187, %v3616, 0
      %v3684 = vsel %vm1187, %v3618, 0
      %v3687 = vsel %vm1187, %v3620, 0
      %v3690 = vsel %vm1187, %v3622, 0
      %v3693 = vsel %vm1187, %v3624, 0
      %v3696 = vsel %vm1187, %v3626, 0
      %v3699 = vsel %vm1187, %v3628, 0
      %v3702 = vsel %vm1187, %v3630, 0
      %v3705 = vsel %vm1187, %v3632, 0
      %v3708 = vsel %vm1187, %v3634, 0
      %v3711 = vsel %vm1187, %v3636, 0
      %v3714 = vsel %vm1187, %v3638, 0
      %v3717 = vsel %vm1187, %v3640, 0
      %v3720 = vsel %vm1187, %v3642, 0
      %v3723 = vsel %vm1187, %v3644, 0
      %v3726 = vsel %vm1187, %v3646, 0
      %v3729 = vsel %vm1187, %v3648, 0
      %v3732 = vsel %vm1187, %v3650, 0
      %v3735 = vsel %vm1187, %v3652, 0
      %v3738 = vsel %vm1187, %v3654, 0
      %v3741 = vsel %vm1187, %v3656, 0
      %v3744 = vsel %vm1187, %v3658, 0
      %v3747 = vsel %vm1187, %v3660, 0
      %v3750 = vsel %vm1187, %v3662, 0
      %v3753 = vsel %vm1187, %v3664, 0
      %v3756 = vsel %vm1187, %v3666, 0
      %v3759 = vsel %vm1187, %v3668, 0
      %v3762 = vsel %vm1187, %v3670, 0
      %v3765 = vsel %vm1187, %v3672, 0
      %v3768 = vsel %vm1187, %v3674, 0
      %v3771 = vsel %vm1187, %v3676, 0
      %v3774 = vsel %vm1187, %v3678, 0
      %v3777 = vsel %vm1450, %v3679, 0
      %3779 = vmatprep.subr.mxu0 0.0
      %3780 = vmatpush1.msra.mxu0 0.0
      %3781 = vmatprep.subr.mxu0 0.0
      %3782 = vmatpush1.msra.mxu0 0.0
      %3783 = vmatprep.subr.mxu0 0.0
      %3784 = vmatpush1.msra.mxu0 0.0
      %3785 = vmatprep.subr.mxu0 0.0
      %3786 = vmatpush1.msra.mxu0 0.0
      %3787 = vmatprep.subr.mxu0 0.0
      %3788 = vmatpush1.msra.mxu0 0.0
      %3789 = vmatprep.subr.mxu0 0.0
      %3790 = vmatpush1.msra.mxu0 0.0
      %3791 = vmatprep.subr.mxu0 0.0
      %3792 = vmatpush1.msra.mxu0 0.0
      %3793 = vmatprep.subr.mxu0 0.0
      %3794 = vmatpush1.msra.mxu0 0.0
      %3795 = vmatprep.subr.mxu0 0.0
      %3796 = vmatpush1.msra.mxu0 0.0
      %3797 = vmatprep.subr.mxu0 0.0
      %3798 = vmatpush1.msra.mxu0 0.0
      %3799 = vmatprep.subr.mxu0 0.0
      %3800 = vmatpush1.msra.mxu0 0.0
      %3801 = vmatprep.subr.mxu0 0.0
      %3802 = vmatpush1.msra.mxu0 0.0
      %3803 = vmatprep.subr.mxu0 0.0
      %3804 = vmatpush1.msra.mxu0 0.0
      %3805 = vmatprep.subr.mxu0 0.0
      %3806 = vmatpush1.msra.mxu0 0.0
      %3807 = vmatprep.subr.mxu0 0.0
      %3808 = vmatpush1.msra.mxu0 0.0
      %3809 = vmatprep.subr.mxu0 0.0
      %3810 = vmatpush1.msra.mxu0 %v3777
      %3811 = vmatprep.subr.mxu0 0.0
      %3812 = vmatpush2.msra.mxu0 0.0
      %3813 = vmatprep.subr.mxu0 0.0
      %3814 = vmatpush2.msra.mxu0 0.0
      %3815 = vmatprep.subr.mxu0 0.0
      %3816 = vmatpush2.msra.mxu0 0.0
      %3817 = vmatprep.subr.mxu0 0.0
      %3818 = vmatpush2.msra.mxu0 0.0
      %3819 = vmatprep.subr.mxu0 0.0
      %3820 = vmatpush2.msra.mxu0 0.0
      %3821 = vmatprep.subr.mxu0 0.0
      %3822 = vmatpush2.msra.mxu0 0.0
      %3823 = vmatprep.subr.mxu0 0.0
      %3824 = vmatpush2.msra.mxu0 0.0
      %3825 = vmatprep.subr.mxu0 0.0
      %3826 = vmatpush2.msra.mxu0 0.0
      %3827 = vmatprep.subr.mxu0 0.0
      %3828 = vmatpush2.msra.mxu0 0.0
      %3829 = vmatprep.subr.mxu0 0.0
      %3830 = vmatpush2.msra.mxu0 0.0
      %3831 = vmatprep.subr.mxu0 0.0
      %3832 = vmatpush2.msra.mxu0 0.0
      %3833 = vmatprep.subr.mxu0 0.0
      %3834 = vmatpush2.msra.mxu0 0.0
      %3835 = vmatprep.subr.mxu0 0.0
      %3836 = vmatpush2.msra.mxu0 0.0
      %3837 = vmatprep.subr.mxu0 0.0
      %3838 = vmatpush2.msra.mxu0 0.0
      %3839 = vmatprep.subr.mxu0 0.0
      %3840 = vmatpush2.msra.mxu0 0.0
      %3841 = vmatprep.subr.mxu0 0.0
      %3842 = vmatpush2.msra.mxu0 0.0
      %3843 = vmatprep.mubr.f32.mxu0 0.0
      %3844 = vmatmul.mubr.f32.gmra.mxu0 %v3681
      %v3845 = vpop.f32.mrf.mxu0
      %v3846 = vadd.f32 0.0, %v3845
      %v3847 = vpop.f32.mrf.mxu0
      %3848 = vmatprep.mubr.f32.mxu0 0.0
      %3849 = vmatmul.mubr.f32.gmra.mxu0 %v3684
      %v3850 = vpop.f32.mrf.mxu0
      %v3851 = vadd.f32 0.0, %v3850
      %v3852 = vpop.f32.mrf.mxu0
      %3853 = vmatprep.mubr.f32.mxu0 0.0
      %3854 = vmatmul.mubr.f32.gmra.mxu0 %v3687
      %v3855 = vpop.f32.mrf.mxu0
      %v3856 = vadd.f32 0.0, %v3855
      %v3857 = vpop.f32.mrf.mxu0
      %3858 = vmatprep.mubr.f32.mxu0 0.0
      %3859 = vmatmul.mubr.f32.gmra.mxu0 %v3690
      %v3860 = vpop.f32.mrf.mxu0
      %v3861 = vadd.f32 0.0, %v3860
      %v3862 = vpop.f32.mrf.mxu0
      %3863 = vmatprep.mubr.f32.mxu0 0.0
      %3864 = vmatmul.mubr.f32.gmra.mxu0 %v3693
      %v3865 = vpop.f32.mrf.mxu0
      %v3866 = vadd.f32 0.0, %v3865
      %v3867 = vpop.f32.mrf.mxu0
      %3868 = vmatprep.mubr.f32.mxu0 0.0
      %3869 = vmatmul.mubr.f32.gmra.mxu0 %v3696
      %v3870 = vpop.f32.mrf.mxu0
      %v3871 = vadd.f32 0.0, %v3870
      %v3872 = vpop.f32.mrf.mxu0
      %3873 = vmatprep.mubr.f32.mxu0 0.0
      %3874 = vmatmul.mubr.f32.gmra.mxu0 %v3699
      %v3875 = vpop.f32.mrf.mxu0
      %v3876 = vadd.f32 0.0, %v3875
      %v3877 = vpop.f32.mrf.mxu0
      %3878 = vmatprep.mubr.f32.mxu0 0.0
      %3879 = vmatmul.mubr.f32.gmra.mxu0 %v3702
      %v3880 = vpop.f32.mrf.mxu0
      %v3881 = vadd.f32 0.0, %v3880
      %v3882 = vpop.f32.mrf.mxu0
      %3883 = vmatprep.mubr.f32.mxu0 0.0
      %3884 = vmatmul.mubr.f32.gmra.mxu0 %v3705
      %v3885 = vpop.f32.mrf.mxu0
      %v3886 = vadd.f32 0.0, %v3885
      %v3887 = vpop.f32.mrf.mxu0
      %3888 = vmatprep.mubr.f32.mxu0 0.0
      %3889 = vmatmul.mubr.f32.gmra.mxu0 %v3708
      %v3890 = vpop.f32.mrf.mxu0
      %v3891 = vadd.f32 0.0, %v3890
      %v3892 = vpop.f32.mrf.mxu0
      %3893 = vmatprep.mubr.f32.mxu0 0.0
      %3894 = vmatmul.mubr.f32.gmra.mxu0 %v3711
      %v3895 = vpop.f32.mrf.mxu0
      %v3896 = vadd.f32 0.0, %v3895
      %v3897 = vpop.f32.mrf.mxu0
      %3898 = vmatprep.mubr.f32.mxu0 0.0
      %3899 = vmatmul.mubr.f32.gmra.mxu0 %v3714
      %v3900 = vpop.f32.mrf.mxu0
      %v3901 = vadd.f32 0.0, %v3900
      %v3902 = vpop.f32.mrf.mxu0
      %3903 = vmatprep.mubr.f32.mxu0 0.0
      %3904 = vmatmul.mubr.f32.gmra.mxu0 %v3717
      %v3905 = vpop.f32.mrf.mxu0
      %v3906 = vadd.f32 0.0, %v3905
      %v3907 = vpop.f32.mrf.mxu0
      %3908 = vmatprep.mubr.f32.mxu0 0.0
      %3909 = vmatmul.mubr.f32.gmra.mxu0 %v3720
      %v3910 = vpop.f32.mrf.mxu0
      %v3911 = vadd.f32 0.0, %v3910
      %v3912 = vpop.f32.mrf.mxu0
      %3913 = vmatprep.mubr.f32.mxu0 0.0
      %3914 = vmatmul.mubr.f32.gmra.mxu0 %v3723
      %v3915 = vpop.f32.mrf.mxu0
      %v3916 = vadd.f32 0.0, %v3915
      %v3917 = vpop.f32.mrf.mxu0
      %3918 = vmatprep.mubr.f32.mxu0 0.0
      %3919 = vmatmul.mubr.f32.gmra.mxu0 %v3726
      %v3920 = vpop.f32.mrf.mxu0
      %v3921 = vadd.f32 0.0, %v3920
      %v3922 = vpop.f32.mrf.mxu0
      %3923 = vmatprep.mubr.f32.mxu0 0.0
      %3924 = vmatmul.mubr.f32.gmra.mxu0 %v3729
      %v3925 = vpop.f32.mrf.mxu0
      %v3926 = vadd.f32 0.0, %v3925
      %v3927 = vpop.f32.mrf.mxu0
      %3928 = vmatprep.mubr.f32.mxu0 0.0
      %3929 = vmatmul.mubr.f32.gmra.mxu0 %v3732
      %v3930 = vpop.f32.mrf.mxu0
      %v3931 = vadd.f32 0.0, %v3930
      %v3932 = vpop.f32.mrf.mxu0
      %3933 = vmatprep.mubr.f32.mxu0 0.0
      %3934 = vmatmul.mubr.f32.gmra.mxu0 %v3735
      %v3935 = vpop.f32.mrf.mxu0
      %v3936 = vadd.f32 0.0, %v3935
      %v3937 = vpop.f32.mrf.mxu0
      %3938 = vmatprep.mubr.f32.mxu0 0.0
      %3939 = vmatmul.mubr.f32.gmra.mxu0 %v3738
      %v3940 = vpop.f32.mrf.mxu0
      %v3941 = vadd.f32 0.0, %v3940
      %v3942 = vpop.f32.mrf.mxu0
      %3943 = vmatprep.mubr.f32.mxu0 0.0
      %3944 = vmatmul.mubr.f32.gmra.mxu0 %v3741
      %v3945 = vpop.f32.mrf.mxu0
      %v3946 = vadd.f32 0.0, %v3945
      %v3947 = vpop.f32.mrf.mxu0
      %3948 = vmatprep.mubr.f32.mxu0 0.0
      %3949 = vmatmul.mubr.f32.gmra.mxu0 %v3744
      %v3950 = vpop.f32.mrf.mxu0
      %v3951 = vadd.f32 0.0, %v3950
      %v3952 = vpop.f32.mrf.mxu0
      %3953 = vmatprep.mubr.f32.mxu0 0.0
      %3954 = vmatmul.mubr.f32.gmra.mxu0 %v3747
      %v3955 = vpop.f32.mrf.mxu0
      %v3956 = vadd.f32 0.0, %v3955
      %v3957 = vpop.f32.mrf.mxu0
      %3958 = vmatprep.mubr.f32.mxu0 0.0
      %3959 = vmatmul.mubr.f32.gmra.mxu0 %v3750
      %v3960 = vpop.f32.mrf.mxu0
      %v3961 = vadd.f32 0.0, %v3960
      %v3962 = vpop.f32.mrf.mxu0
      %3963 = vmatprep.mubr.f32.mxu0 0.0
      %3964 = vmatmul.mubr.f32.gmra.mxu0 %v3753
      %v3965 = vpop.f32.mrf.mxu0
      %v3966 = vadd.f32 0.0, %v3965
      %v3967 = vpop.f32.mrf.mxu0
      %3968 = vmatprep.mubr.f32.mxu0 0.0
      %3969 = vmatmul.mubr.f32.gmra.mxu0 %v3756
      %v3970 = vpop.f32.mrf.mxu0
      %v3971 = vadd.f32 0.0, %v3970
      %v3972 = vpop.f32.mrf.mxu0
      %3973 = vmatprep.mubr.f32.mxu0 0.0
      %3974 = vmatmul.mubr.f32.gmra.mxu0 %v3759
      %v3975 = vpop.f32.mrf.mxu0
      %v3976 = vadd.f32 0.0, %v3975
      %v3977 = vpop.f32.mrf.mxu0
      %3978 = vmatprep.mubr.f32.mxu0 0.0
      %3979 = vmatmul.mubr.f32.gmra.mxu0 %v3762
      %v3980 = vpop.f32.mrf.mxu0
      %v3981 = vadd.f32 0.0, %v3980
      %v3982 = vpop.f32.mrf.mxu0
      %3983 = vmatprep.mubr.f32.mxu0 0.0
      %3984 = vmatmul.mubr.f32.gmra.mxu0 %v3765
      %v3985 = vpop.f32.mrf.mxu0
      %v3986 = vadd.f32 0.0, %v3985
      %v3987 = vpop.f32.mrf.mxu0
      %3988 = vmatprep.mubr.f32.mxu0 0.0
      %3989 = vmatmul.mubr.f32.gmra.mxu0 %v3768
      %v3990 = vpop.f32.mrf.mxu0
      %v3991 = vadd.f32 0.0, %v3990
      %v3992 = vpop.f32.mrf.mxu0
      %3993 = vmatprep.mubr.f32.mxu0 0.0
      %3994 = vmatmul.mubr.f32.gmra.mxu0 %v3771
      %v3995 = vpop.f32.mrf.mxu0
      %v3996 = vadd.f32 0.0, %v3995
      %v3997 = vpop.f32.mrf.mxu0
      %3998 = vmatprep.mubr.f32.mxu0 0.0
      %3999 = vmatmul.mubr.f32.gmra.mxu0 %v3774
      %v4000 = vpop.f32.mrf.mxu0
      %v4001 = vadd.f32 0.0, %v4000
      %v4002 = vpop.f32.mrf.mxu0
      %4003 = vdwg.mxu0
      %v4004 = vld [vmem:[#allocation3] sm:$0xff]
      %v4005 = vld [vmem:[#allocation3 + $0x8] sm:$0xff]
      %v4006 = vld [vmem:[#allocation3 + $0x10] sm:$0xff]
      %v4007 = vld [vmem:[#allocation3 + $0x18] sm:$0xff]
      %v4008 = vld [vmem:[#allocation3 + $0x20] sm:$0xff]
      %v4009 = vld [vmem:[#allocation3 + $0x28] sm:$0xff]
      %v4010 = vld [vmem:[#allocation3 + $0x30] sm:$0xff]
      %v4011 = vld [vmem:[#allocation3 + $0x38] sm:$0xff]
      %v4012 = vld [vmem:[#allocation3 + $0x40] sm:$0xff]
      %v4013 = vld [vmem:[#allocation3 + $0x48] sm:$0xff]
      %v4014 = vld [vmem:[#allocation3 + $0x50] sm:$0xff]
      %v4015 = vld [vmem:[#allocation3 + $0x58] sm:$0xff]
      %v4016 = vld [vmem:[#allocation3 + $0x60] sm:$0xff]
      %v4017 = vld [vmem:[#allocation3 + $0x68] sm:$0xff]
      %v4018 = vld [vmem:[#allocation3 + $0x70] sm:$0xff]
      %v4019 = vld [vmem:[#allocation3 + $0x78] sm:$0xff]
      %v4020 = vld [vmem:[#allocation3 + $0x80] sm:$0xff]
      %v4021 = vld [vmem:[#allocation3 + $0x88] sm:$0xff]
      %v4022 = vld [vmem:[#allocation3 + $0x90] sm:$0xff]
      %v4023 = vld [vmem:[#allocation3 + $0x98] sm:$0xff]
      %v4024 = vld [vmem:[#allocation3 + $0xa0] sm:$0xff]
      %v4025 = vld [vmem:[#allocation3 + $0xa8] sm:$0xff]
      %v4026 = vld [vmem:[#allocation3 + $0xb0] sm:$0xff]
      %v4027 = vld [vmem:[#allocation3 + $0xb8] sm:$0xff]
      %v4028 = vld [vmem:[#allocation3 + $0xc0] sm:$0xff]
      %v4029 = vld [vmem:[#allocation3 + $0xc8] sm:$0xff]
      %v4030 = vld [vmem:[#allocation3 + $0xd0] sm:$0xff]
      %v4031 = vld [vmem:[#allocation3 + $0xd8] sm:$0xff]
      %v4032 = vld [vmem:[#allocation3 + $0xe0] sm:$0xff]
      %v4033 = vld [vmem:[#allocation3 + $0xe8] sm:$0xff]
      %v4034 = vld [vmem:[#allocation3 + $0xf0] sm:$0xff]
      %v4035 = vld [vmem:[#allocation3 + $0xf8] sm:$0xff]
      %v4036 = vmul.f32 %v3515, %v3846
      %v4037 = vmul.f32 %v3516, %v3851
      %v4038 = vmul.f32 %v3517, %v3856
      %v4039 = vmul.f32 %v3518, %v3861
      %v4040 = vmul.f32 %v3519, %v3866
      %v4041 = vmul.f32 %v3520, %v3871
      %v4042 = vmul.f32 %v3521, %v3876
      %v4043 = vmul.f32 %v3522, %v3881
      %v4044 = vmul.f32 %v3523, %v3886
      %v4045 = vmul.f32 %v3524, %v3891
      %v4046 = vmul.f32 %v3525, %v3896
      %v4047 = vmul.f32 %v3526, %v3901
      %v4048 = vmul.f32 %v3527, %v3906
      %v4049 = vmul.f32 %v3528, %v3911
      %v4050 = vmul.f32 %v3529, %v3916
      %v4051 = vmul.f32 %v3530, %v3921
      %v4052 = vmul.f32 %v3531, %v3926
      %v4053 = vmul.f32 %v3532, %v3931
      %v4054 = vmul.f32 %v3533, %v3936
      %v4055 = vmul.f32 %v3534, %v3941
      %v4056 = vmul.f32 %v3535, %v3946
      %v4057 = vmul.f32 %v3536, %v3951
      %v4058 = vmul.f32 %v3537, %v3956
      %v4059 = vmul.f32 %v3538, %v3961
      %v4060 = vmul.f32 %v3539, %v3966
      %v4061 = vmul.f32 %v3540, %v3971
      %v4062 = vmul.f32 %v3541, %v3976
      %v4063 = vmul.f32 %v3542, %v3981
      %v4064 = vmul.f32 %v3543, %v3986
      %v4065 = vmul.f32 %v3544, %v3991
      %v4066 = vmul.f32 %v3545, %v3996
      %v4067 = vmul.f32 %v3546, %v4001
      %v4068 = vadd.f32 %v4004, %v4036
      %v4069 = vadd.f32 %v4005, %v4037
      %v4070 = vadd.f32 %v4006, %v4038
      %v4071 = vadd.f32 %v4007, %v4039
      %v4072 = vadd.f32 %v4008, %v4040
      %v4073 = vadd.f32 %v4009, %v4041
      %v4074 = vadd.f32 %v4010, %v4042
      %v4075 = vadd.f32 %v4011, %v4043
      %v4076 = vadd.f32 %v4012, %v4044
      %v4077 = vadd.f32 %v4013, %v4045
      %v4078 = vadd.f32 %v4014, %v4046
      %v4079 = vadd.f32 %v4015, %v4047
      %v4080 = vadd.f32 %v4016, %v4048
      %v4081 = vadd.f32 %v4017, %v4049
      %v4082 = vadd.f32 %v4018, %v4050
      %v4083 = vadd.f32 %v4019, %v4051
      %v4084 = vadd.f32 %v4020, %v4052
      %v4085 = vadd.f32 %v4021, %v4053
      %v4086 = vadd.f32 %v4022, %v4054
      %v4087 = vadd.f32 %v4023, %v4055
      %v4088 = vadd.f32 %v4024, %v4056
      %v4089 = vadd.f32 %v4025, %v4057
      %v4090 = vadd.f32 %v4026, %v4058
      %v4091 = vadd.f32 %v4027, %v4059
      %v4092 = vadd.f32 %v4028, %v4060
      %v4093 = vadd.f32 %v4029, %v4061
      %v4094 = vadd.f32 %v4030, %v4062
      %v4095 = vadd.f32 %v4031, %v4063
      %v4096 = vadd.f32 %v4032, %v4064
      %v4097 = vadd.f32 %v4033, %v4065
      %v4098 = vadd.f32 %v4034, %v4066
      %v4099 = vadd.f32 %v4035, %v4067
      %4100 = vst.msk [vmem:[#allocation3] sm:$0xff] %vm977, %v4068
      %4101 = vst.msk [vmem:[#allocation3 + $0x8] sm:$0xff] %vm977, %v4069
      %4102 = vst.msk [vmem:[#allocation3 + $0x10] sm:$0xff] %vm977, %v4070
      %4103 = vst.msk [vmem:[#allocation3 + $0x18] sm:$0xff] %vm977, %v4071
      %4104 = vst.msk [vmem:[#allocation3 + $0x20] sm:$0xff] %vm977, %v4072
      %4105 = vst.msk [vmem:[#allocation3 + $0x28] sm:$0xff] %vm977, %v4073
      %4106 = vst.msk [vmem:[#allocation3 + $0x30] sm:$0xff] %vm977, %v4074
      %4107 = vst.msk [vmem:[#allocation3 + $0x38] sm:$0xff] %vm977, %v4075
      %4108 = vst.msk [vmem:[#allocation3 + $0x40] sm:$0xff] %vm977, %v4076
      %4109 = vst.msk [vmem:[#allocation3 + $0x48] sm:$0xff] %vm977, %v4077
      %4110 = vst.msk [vmem:[#allocation3 + $0x50] sm:$0xff] %vm977, %v4078
      %4111 = vst.msk [vmem:[#allocation3 + $0x58] sm:$0xff] %vm977, %v4079
      %4112 = vst.msk [vmem:[#allocation3 + $0x60] sm:$0xff] %vm977, %v4080
      %4113 = vst.msk [vmem:[#allocation3 + $0x68] sm:$0xff] %vm977, %v4081
      %4114 = vst.msk [vmem:[#allocation3 + $0x70] sm:$0xff] %vm977, %v4082
      %4115 = vst.msk [vmem:[#allocation3 + $0x78] sm:$0xff] %vm977, %v4083
      %4116 = vst.msk [vmem:[#allocation3 + $0x80] sm:$0xff] %vm977, %v4084
      %4117 = vst.msk [vmem:[#allocation3 + $0x88] sm:$0xff] %vm977, %v4085
      %4118 = vst.msk [vmem:[#allocation3 + $0x90] sm:$0xff] %vm977, %v4086
      %4119 = vst.msk [vmem:[#allocation3 + $0x98] sm:$0xff] %vm977, %v4087
      %4120 = vst.msk [vmem:[#allocation3 + $0xa0] sm:$0xff] %vm977, %v4088
      %4121 = vst.msk [vmem:[#allocation3 + $0xa8] sm:$0xff] %vm977, %v4089
      %4122 = vst.msk [vmem:[#allocation3 + $0xb0] sm:$0xff] %vm977, %v4090
      %4123 = vst.msk [vmem:[#allocation3 + $0xb8] sm:$0xff] %vm977, %v4091
      %4124 = vst.msk [vmem:[#allocation3 + $0xc0] sm:$0xff] %vm977, %v4092
      %4125 = vst.msk [vmem:[#allocation3 + $0xc8] sm:$0xff] %vm977, %v4093
      %4126 = vst.msk [vmem:[#allocation3 + $0xd0] sm:$0xff] %vm977, %v4094
      %4127 = vst.msk [vmem:[#allocation3 + $0xd8] sm:$0xff] %vm977, %v4095
      %4128 = vst.msk [vmem:[#allocation3 + $0xe0] sm:$0xff] %vm977, %v4096
      %4129 = vst.msk [vmem:[#allocation3 + $0xe8] sm:$0xff] %vm977, %v4097
      %4130 = vst.msk [vmem:[#allocation3 + $0xf0] sm:$0xff] %vm977, %v4098
      %4131 = vst.msk [vmem:[#allocation3 + $0xf8] sm:$0xff] %vm977, %v4099
      %p4132 = scmp.eq.s32.totalorder %s23, 3
      // Predicated region
      $region53: #{tpu_custom_call.1} parent=47 // pred_check
        %p4133 = pneg %p4132
      $region54: #{tpu_custom_call.1} parent=47 // pred_check_branch
        %4135 = sbr.rel (%p4133) target = $region56
      $region55: #{tpu_custom_call.1} parent=47 // pred_region
        %v4136 = vld [vmem:[#allocation3] sm:$0xff]
        %v4137 = vld [vmem:[#allocation3 + $0x8] sm:$0xff]
        %v4138 = vld [vmem:[#allocation3 + $0x10] sm:$0xff]
        %v4139 = vld [vmem:[#allocation3 + $0x18] sm:$0xff]
        %v4140 = vld [vmem:[#allocation3 + $0x20] sm:$0xff]
        %v4141 = vld [vmem:[#allocation3 + $0x28] sm:$0xff]
        %v4142 = vld [vmem:[#allocation3 + $0x30] sm:$0xff]
        %v4143 = vld [vmem:[#allocation3 + $0x38] sm:$0xff]
        %v4144 = vld [vmem:[#allocation3 + $0x40] sm:$0xff]
        %v4145 = vld [vmem:[#allocation3 + $0x48] sm:$0xff]
        %v4146 = vld [vmem:[#allocation3 + $0x50] sm:$0xff]
        %v4147 = vld [vmem:[#allocation3 + $0x58] sm:$0xff]
        %v4148 = vld [vmem:[#allocation3 + $0x60] sm:$0xff]
        %v4149 = vld [vmem:[#allocation3 + $0x68] sm:$0xff]
        %v4150 = vld [vmem:[#allocation3 + $0x70] sm:$0xff]
        %v4151 = vld [vmem:[#allocation3 + $0x78] sm:$0xff]
        %v4152 = vld [vmem:[#allocation3 + $0x80] sm:$0xff]
        %v4153 = vld [vmem:[#allocation3 + $0x88] sm:$0xff]
        %v4154 = vld [vmem:[#allocation3 + $0x90] sm:$0xff]
        %v4155 = vld [vmem:[#allocation3 + $0x98] sm:$0xff]
        %v4156 = vld [vmem:[#allocation3 + $0xa0] sm:$0xff]
        %v4157 = vld [vmem:[#allocation3 + $0xa8] sm:$0xff]
        %v4158 = vld [vmem:[#allocation3 + $0xb0] sm:$0xff]
        %v4159 = vld [vmem:[#allocation3 + $0xb8] sm:$0xff]
        %v4160 = vld [vmem:[#allocation3 + $0xc0] sm:$0xff]
        %v4161 = vld [vmem:[#allocation3 + $0xc8] sm:$0xff]
        %v4162 = vld [vmem:[#allocation3 + $0xd0] sm:$0xff]
        %v4163 = vld [vmem:[#allocation3 + $0xd8] sm:$0xff]
        %v4164 = vld [vmem:[#allocation3 + $0xe0] sm:$0xff]
        %v4165 = vld [vmem:[#allocation3 + $0xe8] sm:$0xff]
        %v4166 = vld [vmem:[#allocation3 + $0xf0] sm:$0xff]
        %v4167 = vld [vmem:[#allocation3 + $0xf8] sm:$0xff]
        %v4168 = vpack.c.bf16 %v4137, %v4136
        %v4169 = vpack.c.bf16 %v4139, %v4138
        %v4170 = vpack.c.bf16 %v4141, %v4140
        %v4171 = vpack.c.bf16 %v4143, %v4142
        %v4172 = vpack.c.bf16 %v4145, %v4144
        %v4173 = vpack.c.bf16 %v4147, %v4146
        %v4174 = vpack.c.bf16 %v4149, %v4148
        %v4175 = vpack.c.bf16 %v4151, %v4150
        %v4176 = vpack.c.bf16 %v4153, %v4152
        %v4177 = vpack.c.bf16 %v4155, %v4154
        %v4178 = vpack.c.bf16 %v4157, %v4156
        %v4179 = vpack.c.bf16 %v4159, %v4158
        %v4180 = vpack.c.bf16 %v4161, %v4160
        %v4181 = vpack.c.bf16 %v4163, %v4162
        %v4182 = vpack.c.bf16 %v4165, %v4164
        %v4183 = vpack.c.bf16 %v4167, %v4166
        %v4184 = vld [vmem:[%s6] sm:$0xf]
        %v4185 = vld [vmem:[%s6 + $0x4] sm:$0xf]
        %v4186 = vld [vmem:[%s6 + $0x8] sm:$0xf]
        %v4187 = vld [vmem:[%s6 + $0xc] sm:$0xf]
        %v4192 = vunpack.c.l.b16 %v4184
        %v4193 = vunpack.c.l.b16 %v4185
        %v4194 = vunpack.c.l.b16 %v4186
        %v4195 = vunpack.c.l.b16 %v4187
        %v4196 = vpack.c.b16 %v4193, %v4192
        %v4197 = vpack.c.b16 %v4195, %v4194
        %v4201 = vsel %vm977, %v4168, 0
        %v4204 = vsel %vm977, %v4169, 0
        %v4207 = vsel %vm977, %v4170, 0
        %v4210 = vsel %vm977, %v4171, 0
        %v4213 = vsel %vm977, %v4172, 0
        %v4216 = vsel %vm977, %v4173, 0
        %v4219 = vsel %vm977, %v4174, 0
        %v4222 = vsel %vm977, %v4175, 0
        %v4225 = vsel %vm977, %v4176, 0
        %v4228 = vsel %vm977, %v4177, 0
        %v4231 = vsel %vm977, %v4178, 0
        %v4234 = vsel %vm977, %v4179, 0
        %v4237 = vsel %vm977, %v4180, 0
        %v4240 = vsel %vm977, %v4181, 0
        %v4243 = vsel %vm977, %v4182, 0
        %v4246 = vsel %vm977, %v4183, 0
        %4248 = vmatprep.subr.bf16.mxu0 0
        %4249 = vmatpush1.bf16.msra.mxu0 0
        %4250 = vmatprep.subr.bf16.mxu0 0
        %4251 = vmatpush1.bf16.msra.mxu0 0
        %4252 = vmatprep.subr.bf16.mxu0 0
        %4253 = vmatpush1.bf16.msra.mxu0 0
        %4254 = vmatprep.subr.bf16.mxu0 0
        %4255 = vmatpush1.bf16.msra.mxu0 0
        %4256 = vmatprep.subr.bf16.mxu0 0
        %4257 = vmatpush1.bf16.msra.mxu0 0
        %4258 = vmatprep.subr.bf16.mxu0 0
        %4259 = vmatpush1.bf16.msra.mxu0 0
        %4260 = vmatprep.subr.bf16.mxu0 0
        %4261 = vmatpush1.bf16.msra.mxu0 %v4197
        %4262 = vmatprep.subr.bf16.mxu0 0
        %4263 = vmatpush1.bf16.msra.mxu0 %v4196
        %4264 = vmatprep.subr.bf16.mxu0 0
        %4265 = vmatpush2.bf16.msra.mxu0 0
        %4266 = vmatprep.subr.bf16.mxu0 0
        %4267 = vmatpush2.bf16.msra.mxu0 0
        %4268 = vmatprep.subr.bf16.mxu0 0
        %4269 = vmatpush2.bf16.msra.mxu0 0
        %4270 = vmatprep.subr.bf16.mxu0 0
        %4271 = vmatpush2.bf16.msra.mxu0 0
        %4272 = vmatprep.subr.bf16.mxu0 0
        %4273 = vmatpush2.bf16.msra.mxu0 0
        %4274 = vmatprep.subr.bf16.mxu0 0
        %4275 = vmatpush2.bf16.msra.mxu0 0
        %4276 = vmatprep.subr.bf16.mxu0 0
        %4277 = vmatpush2.bf16.msra.mxu0 0
        %4278 = vmatprep.subr.bf16.mxu0 0
        %4279 = vmatpush2.bf16.msra.mxu0 0
        %4280 = vmatprep.mubr.bf16.mxu0 0
        %4281 = vmatmul.mubr.bf16.gmra.mxu0 %v4201
        %v4282 = vpop.f32.mrf.mxu0
        %v4283 = vadd.f32 0.0, %v4282
        %v4284 = vpop.f32.mrf.mxu0
        %v4285 = vpop.f32.mrf.mxu0
        %v4286 = vadd.f32 0.0, %v4285
        %v4287 = vpop.f32.mrf.mxu0
        %4288 = vmatprep.mubr.bf16.mxu0 0
        %4289 = vmatmul.mubr.bf16.gmra.mxu0 %v4204
        %v4290 = vpop.f32.mrf.mxu0
        %v4291 = vadd.f32 0.0, %v4290
        %v4292 = vpop.f32.mrf.mxu0
        %v4293 = vpop.f32.mrf.mxu0
        %v4294 = vadd.f32 0.0, %v4293
        %v4295 = vpop.f32.mrf.mxu0
        %4296 = vmatprep.mubr.bf16.mxu0 0
        %4297 = vmatmul.mubr.bf16.gmra.mxu0 %v4207
        %v4298 = vpop.f32.mrf.mxu0
        %v4299 = vadd.f32 0.0, %v4298
        %v4300 = vpop.f32.mrf.mxu0
        %v4301 = vpop.f32.mrf.mxu0
        %v4302 = vadd.f32 0.0, %v4301
        %v4303 = vpop.f32.mrf.mxu0
        %4304 = vmatprep.mubr.bf16.mxu0 0
        %4305 = vmatmul.mubr.bf16.gmra.mxu0 %v4210
        %v4306 = vpop.f32.mrf.mxu0
        %v4307 = vadd.f32 0.0, %v4306
        %v4308 = vpop.f32.mrf.mxu0
        %v4309 = vpop.f32.mrf.mxu0
        %v4310 = vadd.f32 0.0, %v4309
        %v4311 = vpop.f32.mrf.mxu0
        %4312 = vmatprep.mubr.bf16.mxu0 0
        %4313 = vmatmul.mubr.bf16.gmra.mxu0 %v4213
        %v4314 = vpop.f32.mrf.mxu0
        %v4315 = vadd.f32 0.0, %v4314
        %v4316 = vpop.f32.mrf.mxu0
        %v4317 = vpop.f32.mrf.mxu0
        %v4318 = vadd.f32 0.0, %v4317
        %v4319 = vpop.f32.mrf.mxu0
        %4320 = vmatprep.mubr.bf16.mxu0 0
        %4321 = vmatmul.mubr.bf16.gmra.mxu0 %v4216
        %v4322 = vpop.f32.mrf.mxu0
        %v4323 = vadd.f32 0.0, %v4322
        %v4324 = vpop.f32.mrf.mxu0
        %v4325 = vpop.f32.mrf.mxu0
        %v4326 = vadd.f32 0.0, %v4325
        %v4327 = vpop.f32.mrf.mxu0
        %4328 = vmatprep.mubr.bf16.mxu0 0
        %4329 = vmatmul.mubr.bf16.gmra.mxu0 %v4219
        %v4330 = vpop.f32.mrf.mxu0
        %v4331 = vadd.f32 0.0, %v4330
        %v4332 = vpop.f32.mrf.mxu0
        %v4333 = vpop.f32.mrf.mxu0
        %v4334 = vadd.f32 0.0, %v4333
        %v4335 = vpop.f32.mrf.mxu0
        %4336 = vmatprep.mubr.bf16.mxu0 0
        %4337 = vmatmul.mubr.bf16.gmra.mxu0 %v4222
        %v4338 = vpop.f32.mrf.mxu0
        %v4339 = vadd.f32 0.0, %v4338
        %v4340 = vpop.f32.mrf.mxu0
        %v4341 = vpop.f32.mrf.mxu0
        %v4342 = vadd.f32 0.0, %v4341
        %v4343 = vpop.f32.mrf.mxu0
        %4344 = vmatprep.mubr.bf16.mxu0 0
        %4345 = vmatmul.mubr.bf16.gmra.mxu0 %v4225
        %v4346 = vpop.f32.mrf.mxu0
        %v4347 = vadd.f32 0.0, %v4346
        %v4348 = vpop.f32.mrf.mxu0
        %v4349 = vpop.f32.mrf.mxu0
        %v4350 = vadd.f32 0.0, %v4349
        %v4351 = vpop.f32.mrf.mxu0
        %4352 = vmatprep.mubr.bf16.mxu0 0
        %4353 = vmatmul.mubr.bf16.gmra.mxu0 %v4228
        %v4354 = vpop.f32.mrf.mxu0
        %v4355 = vadd.f32 0.0, %v4354
        %v4356 = vpop.f32.mrf.mxu0
        %v4357 = vpop.f32.mrf.mxu0
        %v4358 = vadd.f32 0.0, %v4357
        %v4359 = vpop.f32.mrf.mxu0
        %4360 = vmatprep.mubr.bf16.mxu0 0
        %4361 = vmatmul.mubr.bf16.gmra.mxu0 %v4231
        %v4362 = vpop.f32.mrf.mxu0
        %v4363 = vadd.f32 0.0, %v4362
        %v4364 = vpop.f32.mrf.mxu0
        %v4365 = vpop.f32.mrf.mxu0
        %v4366 = vadd.f32 0.0, %v4365
        %v4367 = vpop.f32.mrf.mxu0
        %4368 = vmatprep.mubr.bf16.mxu0 0
        %4369 = vmatmul.mubr.bf16.gmra.mxu0 %v4234
        %v4370 = vpop.f32.mrf.mxu0
        %v4371 = vadd.f32 0.0, %v4370
        %v4372 = vpop.f32.mrf.mxu0
        %v4373 = vpop.f32.mrf.mxu0
        %v4374 = vadd.f32 0.0, %v4373
        %v4375 = vpop.f32.mrf.mxu0
        %4376 = vmatprep.mubr.bf16.mxu0 0
        %4377 = vmatmul.mubr.bf16.gmra.mxu0 %v4237
        %v4378 = vpop.f32.mrf.mxu0
        %v4379 = vadd.f32 0.0, %v4378
        %v4380 = vpop.f32.mrf.mxu0
        %v4381 = vpop.f32.mrf.mxu0
        %v4382 = vadd.f32 0.0, %v4381
        %v4383 = vpop.f32.mrf.mxu0
        %4384 = vmatprep.mubr.bf16.mxu0 0
        %4385 = vmatmul.mubr.bf16.gmra.mxu0 %v4240
        %v4386 = vpop.f32.mrf.mxu0
        %v4387 = vadd.f32 0.0, %v4386
        %v4388 = vpop.f32.mrf.mxu0
        %v4389 = vpop.f32.mrf.mxu0
        %v4390 = vadd.f32 0.0, %v4389
        %v4391 = vpop.f32.mrf.mxu0
        %4392 = vmatprep.mubr.bf16.mxu0 0
        %4393 = vmatmul.mubr.bf16.gmra.mxu0 %v4243
        %v4394 = vpop.f32.mrf.mxu0
        %v4395 = vadd.f32 0.0, %v4394
        %v4396 = vpop.f32.mrf.mxu0
        %v4397 = vpop.f32.mrf.mxu0
        %v4398 = vadd.f32 0.0, %v4397
        %v4399 = vpop.f32.mrf.mxu0
        %4400 = vmatprep.mubr.bf16.mxu0 0
        %4401 = vmatmul.mubr.bf16.gmra.mxu0 %v4246
        %v4402 = vpop.f32.mrf.mxu0
        %v4403 = vadd.f32 0.0, %v4402
        %v4404 = vpop.f32.mrf.mxu0
        %v4405 = vpop.f32.mrf.mxu0
        %v4406 = vadd.f32 0.0, %v4405
        %v4407 = vpop.f32.mrf.mxu0
        %4408 = vdwg.mxu0
        %4409 = vst.msk [vmem:[%s350] sm:$0xff] %vm977, %v4283
        %4410 = vst.msk [vmem:[%s350 + $0x8] sm:$0xff] %vm977, %v4286
        %4411 = vst.msk [vmem:[%s350 + $0x10] sm:$0xff] %vm977, %v4291
        %4412 = vst.msk [vmem:[%s350 + $0x18] sm:$0xff] %vm977, %v4294
        %4413 = vst.msk [vmem:[%s350 + $0x20] sm:$0xff] %vm977, %v4299
        %4414 = vst.msk [vmem:[%s350 + $0x28] sm:$0xff] %vm977, %v4302
        %4415 = vst.msk [vmem:[%s350 + $0x30] sm:$0xff] %vm977, %v4307
        %4416 = vst.msk [vmem:[%s350 + $0x38] sm:$0xff] %vm977, %v4310
        %4417 = vst.msk [vmem:[%s350 + $0x40] sm:$0xff] %vm977, %v4315
        %4418 = vst.msk [vmem:[%s350 + $0x48] sm:$0xff] %vm977, %v4318
        %4419 = vst.msk [vmem:[%s350 + $0x50] sm:$0xff] %vm977, %v4323
        %4420 = vst.msk [vmem:[%s350 + $0x58] sm:$0xff] %vm977, %v4326
        %4421 = vst.msk [vmem:[%s350 + $0x60] sm:$0xff] %vm977, %v4331
        %4422 = vst.msk [vmem:[%s350 + $0x68] sm:$0xff] %vm977, %v4334
        %4423 = vst.msk [vmem:[%s350 + $0x70] sm:$0xff] %vm977, %v4339
        %4424 = vst.msk [vmem:[%s350 + $0x78] sm:$0xff] %vm977, %v4342
        %4425 = vst.msk [vmem:[%s350 + $0x80] sm:$0xff] %vm977, %v4347
        %4426 = vst.msk [vmem:[%s350 + $0x88] sm:$0xff] %vm977, %v4350
        %4427 = vst.msk [vmem:[%s350 + $0x90] sm:$0xff] %vm977, %v4355
        %4428 = vst.msk [vmem:[%s350 + $0x98] sm:$0xff] %vm977, %v4358
        %4429 = vst.msk [vmem:[%s350 + $0xa0] sm:$0xff] %vm977, %v4363
        %4430 = vst.msk [vmem:[%s350 + $0xa8] sm:$0xff] %vm977, %v4366
        %4431 = vst.msk [vmem:[%s350 + $0xb0] sm:$0xff] %vm977, %v4371
        %4432 = vst.msk [vmem:[%s350 + $0xb8] sm:$0xff] %vm977, %v4374
        %4433 = vst.msk [vmem:[%s350 + $0xc0] sm:$0xff] %vm977, %v4379
        %4434 = vst.msk [vmem:[%s350 + $0xc8] sm:$0xff] %vm977, %v4382
        %4435 = vst.msk [vmem:[%s350 + $0xd0] sm:$0xff] %vm977, %v4387
        %4436 = vst.msk [vmem:[%s350 + $0xd8] sm:$0xff] %vm977, %v4390
        %4437 = vst.msk [vmem:[%s350 + $0xe0] sm:$0xff] %vm977, %v4395
        %4438 = vst.msk [vmem:[%s350 + $0xe8] sm:$0xff] %vm977, %v4398
        %4439 = vst.msk [vmem:[%s350 + $0xf0] sm:$0xff] %vm977, %v4403
        %4440 = vst.msk [vmem:[%s350 + $0xf8] sm:$0xff] %vm977, %v4406
      $region56: #{tpu_custom_call.1} parent=47 // pred_fallthru
        _
      %p4441 = scmp.lt.s32.totalorder %s22, 1
      %s4442 = scalar_select %p4441, %s22, 1
      %s4443 = smul.addr %s4442, 32
      %s4444 = smul.addr %s4443, 8
      %s4445 = scalar_lea.vmem %s7, %s4444
      // Predicated region
      $region57: #{tpu_custom_call.1} parent=47 // pred_check
        %p4446 = pneg %p215
      $region58: #{tpu_custom_call.1} parent=47 // pred_check_branch
        %4448 = sbr.rel (%p4446) target = $region60
      $region59: #{tpu_custom_call.1} parent=47 // pred_region
        _
      $region60: #{tpu_custom_call.1} parent=47 // pred_fallthru
        _
    $region48: #{tpu_custom_call.1} parent=5 // pred_fallthru
      _
    %p4449 = scmp.le.s32.totalorder 2, %s13
    // Predicated region
    $region61: #{tpu_custom_call.1} parent=5 // pred_check
      %p4450 = pneg %p4449
    $region62: #{tpu_custom_call.1} parent=5 // pred_check_branch
      %4452 = sbr.rel (%p4450) target = $region64
    $region63: #{tpu_custom_call.1} parent=5 // pred_region
      %s4453 = ssub.s32 %s13, 2
      // Predicated region
      $region65: #{tpu_custom_call.1} parent=63 // pred_check
        %p4454 = pneg %p221
      $region66: #{tpu_custom_call.1} parent=63 // pred_check_branch
        %4456 = sbr.rel (%p4454) target = $region68
      $region67: #{tpu_custom_call.1} parent=63 // pred_region
        %p4457 = scmp.lt.s32.totalorder %s24, 1
        %s4458 = scalar_select %p4457, %s24, 1
        %s4459 = smul.addr %s4458, 32
        %s4460 = smul.addr %s4459, 8
        %s4461 = scalar_lea.vmem %s7, %s4460
      $region68: #{tpu_custom_call.1} parent=63 // pred_fallthru
        _
    $region64: #{tpu_custom_call.1} parent=5 // pred_fallthru
      _
  $region6: #{tpu_custom_call.1} parent=0 // loop_footer
    %s17 = sadd.s32 1, %s13
  $region7: #{tpu_custom_call.1} parent=0 // loop_footer_branch
    %12 = sbr.rel target = $region3
  $region8: #{tpu_custom_call.1} parent=0 // loop_exit
    _

</llo_original>
